<compile_context>
chip_gen: v7x
topology: tpu7x:2x2x1
jax: 0.10.0
libtpu: 0.0.40
codegen_flags: <defaults>
</compile_context>

<pallas_src>
import functools

import numpy as np
import jax
import jax.numpy as jnp
from jax import lax
from jax.experimental import pallas as pl
from jax.experimental.pallas import tpu as pltpu


# -----------------------------------------------------------------------------
# plain-JAX glue (parameter init, power method, skew-filter computation)
# -----------------------------------------------------------------------------
def _l2_normalize(t, eps=1e-12):
    n = jnp.linalg.norm(t.reshape(-1))
    return t / jnp.maximum(n, eps)


def _transpose_filter(w):
    # torch: transpose(0, 1) then flip the two spatial dims
    return jnp.flip(jnp.transpose(w, (1, 0, 2, 3)), axis=(2, 3))


def init_soc_params(key, in_channels, out_channels, kernel_size,
                    stride=1, bias=True):
    """Deterministic re-implementation of SOC.__init__ parameter/buffer init."""
    in_c = in_channels * stride * stride
    max_c = max(out_channels, in_c)
    k = kernel_size
    keys = jax.random.split(key, 10)
    stdv = 1.0 / np.sqrt(max_c)
    params = {
        "weight": stdv * jax.random.normal(keys[0], (max_c, max_c, k, k),
                                           jnp.float32),
        "u1": _l2_normalize(jax.random.normal(keys[1], (1, max_c, 1, k))),
        "v1": _l2_normalize(jax.random.normal(keys[2], (max_c, 1, k, 1))),
        "u2": _l2_normalize(jax.random.normal(keys[3], (1, max_c, k, 1))),
        "v2": _l2_normalize(jax.random.normal(keys[4], (max_c, 1, 1, k))),
        "u3": _l2_normalize(jax.random.normal(keys[5], (1, max_c, k, k))),
        "v3": _l2_normalize(jax.random.normal(keys[6], (max_c, 1, 1, 1))),
        "u4": _l2_normalize(jax.random.normal(keys[7], (max_c, 1, k, k))),
        "v4": _l2_normalize(jax.random.normal(keys[8], (1, max_c, 1, 1))),
    }
    if bias:
        params["bias"] = jax.random.uniform(
            keys[9], (out_channels,), jnp.float32, minval=-stdv, maxval=stdv)
    return params


def run_power_method(params, num_iters=50):
    """SOC.update_sigma(): power iterations on the four unfoldings (no_grad glue)."""
    w = params["weight"]
    skew = 0.5 * (w - _transpose_filter(w))
    names = ("u1", "v1", "u2", "v2", "u3", "v3", "u4", "v4")
    carry = tuple(params[k] for k in names)

    def body(_, c):
        u1, v1, u2, v2, u3, v3, u4, v4 = c
        v1 = _l2_normalize(jnp.sum(skew * u1, axis=(1, 3), keepdims=True))
        u1 = _l2_normalize(jnp.sum(skew * v1, axis=(0, 2), keepdims=True))
        v2 = _l2_normalize(jnp.sum(skew * u2, axis=(1, 2), keepdims=True))
        u2 = _l2_normalize(jnp.sum(skew * v2, axis=(0, 3), keepdims=True))
        v3 = _l2_normalize(jnp.sum(skew * u3, axis=(1, 2, 3), keepdims=True))
        u3 = _l2_normalize(jnp.sum(skew * v3, axis=0, keepdims=True))
        v4 = _l2_normalize(jnp.sum(skew * u4, axis=(0, 2, 3), keepdims=True))
        u4 = _l2_normalize(jnp.sum(skew * v4, axis=1, keepdims=True))
        return (u1, v1, u2, v2, u3, v3, u4, v4)

    carry = lax.fori_loop(0, num_iters, body, carry)
    out = dict(params)
    for k, v in zip(names, carry):
        out[k] = v
    return out


def compute_skew_filter(params, multiplier=1.0):
    w = params["weight"]
    skew = 0.5 * (w - _transpose_filter(w))
    s1 = jnp.sum(skew * params["u1"] * params["v1"])
    s2 = jnp.sum(skew * params["u2"] * params["v2"])
    s3 = jnp.sum(skew * params["u3"] * params["v3"])
    s4 = jnp.sum(skew * params["u4"] * params["v4"])
    sigma = jnp.minimum(jnp.minimum(s1, s2), jnp.minimum(s3, s4))
    return multiplier * skew / sigma


# -----------------------------------------------------------------------------
# Pallas kernel: truncated exp-conv (Horner) series per batch element
# -----------------------------------------------------------------------------
def _soc_conv_exp_kernel(inv_ref, x_ref, w_ref, b_ref, o_ref,
                         zbuf_ref, acc_ref, *, num_terms):
    # inv_ref : (n,)              SMEM  table of 1/i coefficients
    # x_ref   : (1, H, W, C)      VMEM  input block (NHWC, lane-padded C)
    # w_ref   : (K, K, C, C)      VMEM  skew filter, HWIO (lane-padded)
    # b_ref   : (1, C)            VMEM  bias padded to C
    # o_ref   : (1, H, W, C)      VMEM  output block
    # zbuf_ref: (H+2p, W+2A, C)   VMEM  zero-haloed current iterate (A = 8-aligned pad)
    # acc_ref : (H*W, C)          VMEM  conv accumulator (f32)
    _, H, W, C = x_ref.shape
    K = w_ref.shape[0]
    p = K // 2
    Wpad = zbuf_ref.shape[1]
    A = (Wpad - W) // 2          # sublane-aligned interior offset along W
    n = num_terms - 1
    HW = H * W

    # Re-zero only the halo bands (all stores tile-aligned).  Done every grid
    # step so the kernel is megacore-safe with "parallel" batch semantics.
    if p > 0:
        zero_rows = jnp.zeros((p, Wpad, C), jnp.float32)
        zbuf_ref[0:p] = zero_rows
        zbuf_ref[p + H:p + H + p] = zero_rows
    if A > 0:
        zero_cols = jnp.zeros((H, A, C), jnp.float32)
        zbuf_ref[p:p + H, 0:A, :] = zero_cols
        zbuf_ref[p:p + H, A + W:A + W + A, :] = zero_cols

    # z <- x  (interior store: W-offset A is a multiple of 8, C a multiple of 128)
    zbuf_ref[p:p + H, A:A + W, :] = x_ref[0].astype(jnp.float32)

    def accumulate_conv():
        # "same"-padded conv of the current iterate expressed as K*K lane-dense
        # (H*W, C) x (C, C) MXU matmuls, accumulated in VMEM (f32).
        first = True
        for dy in range(K):
            for dx in range(K):
                c0 = A - p + dx
                patch = zbuf_ref[dy:dy + H, c0:c0 + W, :].reshape(HW, C)
                contrib = jnp.dot(patch, w_ref[dy, dx],
                                  preferred_element_type=jnp.float32)
                if first:
                    acc_ref[...] = contrib
                    first = False
                else:
                    acc_ref[...] = acc_ref[...] + contrib

    def term_body(t, carry):
        accumulate_conv()
        inv_i = inv_ref[n - 1 - t]                       # 1 / i   (i = n - t)
        x2d = x_ref[0].astype(jnp.float32).reshape(HW, C)
        z_new = x2d + acc_ref[...] * inv_i
        zbuf_ref[p:p + H, A:A + W, :] = z_new.reshape(H, W, C)
        return carry

    if n > 0:
        lax.fori_loop(0, n, term_body, 0)

    z2d = zbuf_ref[p:p + H, A:A + W, :].reshape(HW, C)
    o_ref[0] = (z2d + b_ref[...]).reshape(H, W, C).astype(o_ref.dtype)


# -----------------------------------------------------------------------------
# forward wrapper (eval-mode SOC.forward semantics)
# -----------------------------------------------------------------------------
def soc_forward(params, x_nchw, *, in_channels, out_channels, kernel_size,
                stride=1, multiplier=1.0, eval_terms=15, bias=True,
                interpret=False):
    k = kernel_size
    if k == 1:
        multiplier = 1.0
    in_c = in_channels * stride * stride
    max_c = max(out_channels, in_c)
    p = k // 2
    n = eval_terms - 1          # eval-mode: no power-iteration update in forward

    skew = compute_skew_filter(params, multiplier)       # (Cmax, Cmax, K, K) OIHW
    skew_hwio = jnp.transpose(skew, (2, 3, 1, 0))        # (K, K, Cin, Cout)

    x = x_nchw
    if stride > 1:
        # einops 'b c (w k1) (h k2) -> b (c k1 k2) w h'
        b, c, hh, ww = x.shape
        x = x.reshape(b, c, hh // stride, stride, ww // stride, stride)
        x = jnp.transpose(x, (0, 1, 3, 5, 2, 4))
        x = x.reshape(b, c * stride * stride, hh // stride, ww // stride)
    if out_channels > in_c:
        x = jnp.pad(x, ((0, 0), (0, out_channels - in_c), (0, 0), (0, 0)))

    # NHWC, lane-pad channels up to a multiple of 128 (lane-dense vregs/stores).
    x_nhwc = jnp.transpose(x, (0, 2, 3, 1)).astype(jnp.float32)
    N, H, W, _ = x_nhwc.shape
    C = max(128, ((max_c + 127) // 128) * 128)
    if C > max_c:
        x_nhwc = jnp.pad(x_nhwc, ((0, 0), (0, 0), (0, 0), (0, C - max_c)))
        skew_hwio = jnp.pad(
            skew_hwio, ((0, 0), (0, 0), (0, C - max_c), (0, C - max_c)))
    skew_hwio = skew_hwio.astype(jnp.float32)

    bias_full = jnp.zeros((1, C), jnp.float32)
    if bias:
        bias_full = bias_full.at[0, :out_channels].set(
            params["bias"].astype(jnp.float32))

    # 1/i coefficients for the Horner loop, read from SMEM inside the kernel.
    inv_table = 1.0 / jnp.arange(1, max(n, 1) + 1, dtype=jnp.float32)

    A = ((p + 7) // 8) * 8 if p > 0 else 0      # sublane-aligned W halo
    w_pad_cols = W + 2 * A

    kernel = functools.partial(_soc_conv_exp_kernel, num_terms=eval_terms)
    z = pl.pallas_call(
        kernel,
        out_shape=jax.ShapeDtypeStruct((N, H, W, C), jnp.float32),
        grid_spec=pltpu.PrefetchScalarGridSpec(
            num_scalar_prefetch=0,
            grid=(N,),
            in_specs=[
                pl.BlockSpec(memory_space=pltpu.MemorySpace.SMEM),     # 1/i table
                pl.BlockSpec((1, H, W, C), lambda b: (b, 0, 0, 0)),    # x (NHWC)
                pl.BlockSpec((k, k, C, C), lambda b: (0, 0, 0, 0)),    # skew filter
                pl.BlockSpec((1, C), lambda b: (0, 0)),                # bias
            ],
            out_specs=pl.BlockSpec((1, H, W, C), lambda b: (b, 0, 0, 0)),
            scratch_shapes=[
                pltpu.VMEM((H + 2 * p, w_pad_cols, C), jnp.float32),   # iterate
                pltpu.VMEM((H * W, C), jnp.float32),                   # accumulator
            ],
        ),
        compiler_params=pltpu.CompilerParams(
            dimension_semantics=("parallel",),
            vmem_limit_bytes=48 * 1024 * 1024),
        interpret=interpret,
    )(inv_table, x_nhwc, skew_hwio, bias_full)

    z = jnp.transpose(z, (0, 3, 1, 2))           # NHWC -> NCHW
    return z[:, :out_channels]


# -----------------------------------------------------------------------------
# plain-JAX reference (mirrors torch semantics) for verification
# -----------------------------------------------------------------------------
def soc_forward_reference(params, x_nchw, *, in_channels, out_channels,
                          kernel_size, stride=1, multiplier=1.0,
                          eval_terms=15, bias=True):
    k = kernel_size
    if k == 1:
        multiplier = 1.0
    in_c = in_channels * stride * stride
    pad = k // 2
    skew = compute_skew_filter(params, multiplier)  # OIHW (like torch weight)

    x = x_nchw
    if stride > 1:
        b, c, hh, ww = x.shape
        x = x.reshape(b, c, hh // stride, stride, ww // stride, stride)
        x = jnp.transpose(x, (0, 1, 3, 5, 2, 4))
        x = x.reshape(b, c * stride * stride, hh // stride, ww // stride)
    if out_channels > in_c:
        x = jnp.pad(x, ((0, 0), (0, out_channels - in_c), (0, 0), (0, 0)))

    def conv(z):
        return lax.conv_general_dilated(
            z, skew, (1, 1), [(pad, pad), (pad, pad)],
            dimension_numbers=("NCHW", "OIHW", "NCHW"),
            precision=lax.Precision.HIGHEST)

    z = x
    for i in range(eval_terms - 1, 0, -1):
        z = x + conv(z) / i
    if out_channels < in_c:
        z = z[:, :out_channels]
    if bias:
        z = z + params["bias"].reshape(1, -1, 1, 1)
    return z


if __name__ == "__main__":
    key = jax.random.PRNGKey(0)
    in_channels, out_channels, kernel_size, stride = 4, 8, 3, 1
    batch, spatial = 2, 16

    kp, kx = jax.random.split(key)
    params = init_soc_params(kp, in_channels, out_channels, kernel_size,
                             stride=stride, bias=True)
    # Run the module's power-method (SOC.update_sigma) so the sigma
    # normalization is meaningful and the truncated exp series is
    # well-conditioned, as the torch module intends before use.
    params = run_power_method(params, num_iters=50)

    x = jax.random.normal(kx, (batch, in_channels, spatial, spatial),
                          jnp.float32)

    cfg = dict(in_channels=in_channels, out_channels=out_channels,
               kernel_size=kernel_size, stride=stride, multiplier=1.0,
               eval_terms=15, bias=True)

    out = soc_forward(params, x, **cfg)
    out = jax.block_until_ready(out)
    assert out.shape == (batch, out_channels, spatial, spatial), out.shape

    ref = soc_forward_reference(params, x, **cfg)
    denom = max(1.0, float(jnp.max(jnp.abs(ref))))
    rel_err = float(jnp.max(jnp.abs(out - ref))) / denom
    assert rel_err < 2e-2, f"mismatch vs reference: relative err = {rel_err}"

    print("KERNEL_OK")
</pallas_src>

<mosaic_0001>
module attributes {stable_mosaic.version = 11 : i64} {
  func.func @_soc_conv_exp_kernel(%arg0: i32, %arg1: memref<14xf32, #tpu.memory_space<smem>>, %arg2: memref<1x16x16x128xf32, #tpu.memory_space<vmem>>, %arg3: memref<3x3x128x128xf32, #tpu.memory_space<vmem>>, %arg4: memref<1x128xf32, #tpu.memory_space<vmem>>, %arg5: memref<1x16x16x128xf32, #tpu.memory_space<vmem>>, %arg6: memref<18x32x128xf32, #tpu.memory_space<vmem>>, %arg7: memref<256x128xf32, #tpu.memory_space<vmem>>) attributes {dimension_semantics = [#tpu.dimension_semantics<parallel>], iteration_bounds = array<i64: 2>, scalar_prefetch = 0 : i64, scratch_operands = 2 : i64, tpu.core_type = #tpu.core_type<tc>, window_params = [{transform_indices = @transform_0, window_bounds = array<i64: 14>}, {transform_indices = @transform_1, window_bounds = array<i64: 1, 16, 16, 128>}, {pipeline_mode = #tpu.pipeline_mode<synchronous>, transform_indices = @transform_2, window_bounds = array<i64: 3, 3, 128, 128>}, {pipeline_mode = #tpu.pipeline_mode<synchronous>, transform_indices = @transform_3, window_bounds = array<i64: 1, 128>}, {transform_indices = @transform_4, window_bounds = array<i64: 1, 16, 16, 128>}]} {
    %cst = arith.constant 0.000000e+00 : f32
    %0 = vector.broadcast %cst : f32 to vector<1x32x128xf32>
    %c0 = arith.constant 0 : index
    %c0_0 = arith.constant 0 : index
    %c0_1 = arith.constant 0 : index
    %1 = vector.load %arg6[%c0, %c0_0, %c0_1] : memref<18x32x128xf32, #tpu.memory_space<vmem>>, vector<1x32x128xf32>
    tpu.vector_store %arg6[%c0, %c0_0, %c0_1], %0 {strides = array<i32>} : memref<18x32x128xf32, #tpu.memory_space<vmem>>, vector<1x32x128xf32>,
    %c17 = arith.constant 17 : index
    %c0_2 = arith.constant 0 : index
    %c0_3 = arith.constant 0 : index
    %2 = vector.load %arg6[%c17, %c0_2, %c0_3] : memref<18x32x128xf32, #tpu.memory_space<vmem>>, vector<1x32x128xf32>
    tpu.vector_store %arg6[%c17, %c0_2, %c0_3], %0 {strides = array<i32>} : memref<18x32x128xf32, #tpu.memory_space<vmem>>, vector<1x32x128xf32>,
    %cst_4 = arith.constant 0.000000e+00 : f32
    %3 = vector.broadcast %cst_4 : f32 to vector<16x8x128xf32>
    %c1 = arith.constant 1 : index
    %c0_5 = arith.constant 0 : index
    %c0_6 = arith.constant 0 : index
    %4 = vector.load %arg6[%c1, %c0_5, %c0_6] : memref<18x32x128xf32, #tpu.memory_space<vmem>>, vector<16x8x128xf32>
    tpu.vector_store %arg6[%c1, %c0_5, %c0_6], %3 {strides = array<i32>} : memref<18x32x128xf32, #tpu.memory_space<vmem>>, vector<16x8x128xf32>,
    %c1_7 = arith.constant 1 : index
    %c24 = arith.constant 24 : index
    %c0_8 = arith.constant 0 : index
    %5 = vector.load %arg6[%c1_7, %c24, %c0_8] : memref<18x32x128xf32, #tpu.memory_space<vmem>>, vector<16x8x128xf32>
    tpu.vector_store %arg6[%c1_7, %c24, %c0_8], %3 {strides = array<i32>} : memref<18x32x128xf32, #tpu.memory_space<vmem>>, vector<16x8x128xf32>,
    %c0_9 = arith.constant 0 : index
    %c0_10 = arith.constant 0 : index
    %c0_11 = arith.constant 0 : index
    %c0_12 = arith.constant 0 : index
    %6 = vector.load %arg2[%c0_9, %c0_10, %c0_11, %c0_12] : memref<1x16x16x128xf32, #tpu.memory_space<vmem>>, vector<1x16x16x128xf32>
    %7 = vector.shape_cast %6 : vector<1x16x16x128xf32> to vector<16x16x128xf32>
    %c1_13 = arith.constant 1 : index
    %c8 = arith.constant 8 : index
    %c0_14 = arith.constant 0 : index
    %8 = vector.load %arg6[%c1_13, %c8, %c0_14] : memref<18x32x128xf32, #tpu.memory_space<vmem>>, vector<16x16x128xf32>
    tpu.vector_store %arg6[%c1_13, %c8, %c0_14], %7 {strides = array<i32>} : memref<18x32x128xf32, #tpu.memory_space<vmem>>, vector<16x16x128xf32>,
    %c0_i32 = arith.constant 0 : i32
    %c14_i32 = arith.constant 14 : i32
    %9 = arith.addi %c0_i32, %c14_i32 : i32
    %c1_i32 = arith.constant 1 : i32
    scf.for %arg8 = %c0_i32 to %9 step %c1_i32  : i32 {
      %c0_25 = arith.constant 0 : index
      %c7 = arith.constant 7 : index
      %c0_26 = arith.constant 0 : index
      %19 = vector.load %arg6[%c0_25, %c7, %c0_26] : memref<18x32x128xf32, #tpu.memory_space<vmem>>, vector<16x16x128xf32>
      %20 = vector.shape_cast %19 : vector<16x16x128xf32> to vector<256x128xf32>
      %c0_27 = arith.constant 0 : index
      %c0_28 = arith.constant 0 : index
      %c0_29 = arith.constant 0 : index
      %c0_30 = arith.constant 0 : index
      %21 = vector.load %arg3[%c0_27, %c0_28, %c0_29, %c0_30] : memref<3x3x128x128xf32, #tpu.memory_space<vmem>>, vector<1x1x128x128xf32>
      %22 = vector.shape_cast %21 : vector<1x1x128x128xf32> to vector<128x128xf32>
      %cst_31 = arith.constant dense<0.000000e+00> : vector<256x128xf32>
      %23 = tpu.matmul %20, %22, %cst_31 {dimension_numbers = #tpu.dot_dimension_numbers<[1], [0], [0], [1], [0, 0, 1, 1], [], []>} : vector<256x128xf32>, vector<128x128xf32>, vector<256x128xf32> -> vector<256x128xf32>
      %c0_32 = arith.constant 0 : index
      %c0_33 = arith.constant 0 : index
      %24 = vector.load %arg7[%c0_32, %c0_33] : memref<256x128xf32, #tpu.memory_space<vmem>>, vector<256x128xf32>
      tpu.vector_store %arg7[%c0_32, %c0_33], %23 {strides = array<i32>} : memref<256x128xf32, #tpu.memory_space<vmem>>, vector<256x128xf32>,
      %c0_34 = arith.constant 0 : index
      %c8_35 = arith.constant 8 : index
      %c0_36 = arith.constant 0 : index
      %25 = vector.load %arg6[%c0_34, %c8_35, %c0_36] : memref<18x32x128xf32, #tpu.memory_space<vmem>>, vector<16x16x128xf32>
      %26 = vector.shape_cast %25 : vector<16x16x128xf32> to vector<256x128xf32>
      %c0_37 = arith.constant 0 : index
      %c1_38 = arith.constant 1 : index
      %c0_39 = arith.constant 0 : index
      %c0_40 = arith.constant 0 : index
      %27 = vector.load %arg3[%c0_37, %c1_38, %c0_39, %c0_40] : memref<3x3x128x128xf32, #tpu.memory_space<vmem>>, vector<1x1x128x128xf32>
      %28 = vector.shape_cast %27 : vector<1x1x128x128xf32> to vector<128x128xf32>
      %cst_41 = arith.constant dense<0.000000e+00> : vector<256x128xf32>
      %29 = tpu.matmul %26, %28, %cst_41 {dimension_numbers = #tpu.dot_dimension_numbers<[1], [0], [0], [1], [0, 0, 1, 1], [], []>} : vector<256x128xf32>, vector<128x128xf32>, vector<256x128xf32> -> vector<256x128xf32>
      %c0_42 = arith.constant 0 : index
      %c0_43 = arith.constant 0 : index
      %30 = vector.load %arg7[%c0_42, %c0_43] : memref<256x128xf32, #tpu.memory_space<vmem>>, vector<256x128xf32>
      %31 = arith.addf %30, %29 : vector<256x128xf32>
      %c0_44 = arith.constant 0 : index
      %c0_45 = arith.constant 0 : index
      %32 = vector.load %arg7[%c0_44, %c0_45] : memref<256x128xf32, #tpu.memory_space<vmem>>, vector<256x128xf32>
      tpu.vector_store %arg7[%c0_44, %c0_45], %31 {strides = array<i32>} : memref<256x128xf32, #tpu.memory_space<vmem>>, vector<256x128xf32>,
      %c0_46 = arith.constant 0 : index
      %c9 = arith.constant 9 : index
      %c0_47 = arith.constant 0 : index
      %33 = vector.load %arg6[%c0_46, %c9, %c0_47] : memref<18x32x128xf32, #tpu.memory_space<vmem>>, vector<16x16x128xf32>
      %34 = vector.shape_cast %33 : vector<16x16x128xf32> to vector<256x128xf32>
      %c0_48 = arith.constant 0 : index
      %c2 = arith.constant 2 : index
      %c0_49 = arith.constant 0 : index
      %c0_50 = arith.constant 0 : index
      %35 = vector.load %arg3[%c0_48, %c2, %c0_49, %c0_50] : memref<3x3x128x128xf32, #tpu.memory_space<vmem>>, vector<1x1x128x128xf32>
      %36 = vector.shape_cast %35 : vector<1x1x128x128xf32> to vector<128x128xf32>
      %cst_51 = arith.constant dense<0.000000e+00> : vector<256x128xf32>
      %37 = tpu.matmul %34, %36, %cst_51 {dimension_numbers = #tpu.dot_dimension_numbers<[1], [0], [0], [1], [0, 0, 1, 1], [], []>} : vector<256x128xf32>, vector<128x128xf32>, vector<256x128xf32> -> vector<256x128xf32>
      %c0_52 = arith.constant 0 : index
      %c0_53 = arith.constant 0 : index
      %38 = vector.load %arg7[%c0_52, %c0_53] : memref<256x128xf32, #tpu.memory_space<vmem>>, vector<256x128xf32>
      %39 = arith.addf %38, %37 : vector<256x128xf32>
      %c0_54 = arith.constant 0 : index
      %c0_55 = arith.constant 0 : index
      %40 = vector.load %arg7[%c0_54, %c0_55] : memref<256x128xf32, #tpu.memory_space<vmem>>, vector<256x128xf32>
      tpu.vector_store %arg7[%c0_54, %c0_55], %39 {strides = array<i32>} : memref<256x128xf32, #tpu.memory_space<vmem>>, vector<256x128xf32>,
      %c1_56 = arith.constant 1 : index
      %c7_57 = arith.constant 7 : index
      %c0_58 = arith.constant 0 : index
      %41 = vector.load %arg6[%c1_56, %c7_57, %c0_58] : memref<18x32x128xf32, #tpu.memory_space<vmem>>, vector<16x16x128xf32>
      %42 = vector.shape_cast %41 : vector<16x16x128xf32> to vector<256x128xf32>
      %c1_59 = arith.constant 1 : index
      %c0_60 = arith.constant 0 : index
      %c0_61 = arith.constant 0 : index
      %c0_62 = arith.constant 0 : index
      %43 = vector.load %arg3[%c1_59, %c0_60, %c0_61, %c0_62] : memref<3x3x128x128xf32, #tpu.memory_space<vmem>>, vector<1x1x128x128xf32>
      %44 = vector.shape_cast %43 : vector<1x1x128x128xf32> to vector<128x128xf32>
      %cst_63 = arith.constant dense<0.000000e+00> : vector<256x128xf32>
      %45 = tpu.matmul %42, %44, %cst_63 {dimension_numbers = #tpu.dot_dimension_numbers<[1], [0], [0], [1], [0, 0, 1, 1], [], []>} : vector<256x128xf32>, vector<128x128xf32>, vector<256x128xf32> -> vector<256x128xf32>
      %c0_64 = arith.constant 0 : index
      %c0_65 = arith.constant 0 : index
      %46 = vector.load %arg7[%c0_64, %c0_65] : memref<256x128xf32, #tpu.memory_space<vmem>>, vector<256x128xf32>
      %47 = arith.addf %46, %45 : vector<256x128xf32>
      %c0_66 = arith.constant 0 : index
      %c0_67 = arith.constant 0 : index
      %48 = vector.load %arg7[%c0_66, %c0_67] : memref<256x128xf32, #tpu.memory_space<vmem>>, vector<256x128xf32>
      tpu.vector_store %arg7[%c0_66, %c0_67], %47 {strides = array<i32>} : memref<256x128xf32, #tpu.memory_space<vmem>>, vector<256x128xf32>,
      %c1_68 = arith.constant 1 : index
      %c8_69 = arith.constant 8 : index
      %c0_70 = arith.constant 0 : index
      %49 = vector.load %arg6[%c1_68, %c8_69, %c0_70] : memref<18x32x128xf32, #tpu.memory_space<vmem>>, vector<16x16x128xf32>
      %50 = vector.shape_cast %49 : vector<16x16x128xf32> to vector<256x128xf32>
      %c1_71 = arith.constant 1 : index
      %c1_72 = arith.constant 1 : index
      %c0_73 = arith.constant 0 : index
      %c0_74 = arith.constant 0 : index
      %51 = vector.load %arg3[%c1_71, %c1_72, %c0_73, %c0_74] : memref<3x3x128x128xf32, #tpu.memory_space<vmem>>, vector<1x1x128x128xf32>
      %52 = vector.shape_cast %51 : vector<1x1x128x128xf32> to vector<128x128xf32>
      %cst_75 = arith.constant dense<0.000000e+00> : vector<256x128xf32>
      %53 = tpu.matmul %50, %52, %cst_75 {dimension_numbers = #tpu.dot_dimension_numbers<[1], [0], [0], [1], [0, 0, 1, 1], [], []>} : vector<256x128xf32>, vector<128x128xf32>, vector<256x128xf32> -> vector<256x128xf32>
      %c0_76 = arith.constant 0 : index
      %c0_77 = arith.constant 0 : index
      %54 = vector.load %arg7[%c0_76, %c0_77] : memref<256x128xf32, #tpu.memory_space<vmem>>, vector<256x128xf32>
      %55 = arith.addf %54, %53 : vector<256x128xf32>
      %c0_78 = arith.constant 0 : index
      %c0_79 = arith.constant 0 : index
      %56 = vector.load %arg7[%c0_78, %c0_79] : memref<256x128xf32, #tpu.memory_space<vmem>>, vector<256x128xf32>
      tpu.vector_store %arg7[%c0_78, %c0_79], %55 {strides = array<i32>} : memref<256x128xf32, #tpu.memory_space<vmem>>, vector<256x128xf32>,
      %c1_80 = arith.constant 1 : index
      %c9_81 = arith.constant 9 : index
      %c0_82 = arith.constant 0 : index
      %57 = vector.load %arg6[%c1_80, %c9_81, %c0_82] : memref<18x32x128xf32, #tpu.memory_space<vmem>>, vector<16x16x128xf32>
      %58 = vector.shape_cast %57 : vector<16x16x128xf32> to vector<256x128xf32>
      %c1_83 = arith.constant 1 : index
      %c2_84 = arith.constant 2 : index
      %c0_85 = arith.constant 0 : index
      %c0_86 = arith.constant 0 : index
      %59 = vector.load %arg3[%c1_83, %c2_84, %c0_85, %c0_86] : memref<3x3x128x128xf32, #tpu.memory_space<vmem>>, vector<1x1x128x128xf32>
      %60 = vector.shape_cast %59 : vector<1x1x128x128xf32> to vector<128x128xf32>
      %cst_87 = arith.constant dense<0.000000e+00> : vector<256x128xf32>
      %61 = tpu.matmul %58, %60, %cst_87 {dimension_numbers = #tpu.dot_dimension_numbers<[1], [0], [0], [1], [0, 0, 1, 1], [], []>} : vector<256x128xf32>, vector<128x128xf32>, vector<256x128xf32> -> vector<256x128xf32>
      %c0_88 = arith.constant 0 : index
      %c0_89 = arith.constant 0 : index
      %62 = vector.load %arg7[%c0_88, %c0_89] : memref<256x128xf32, #tpu.memory_space<vmem>>, vector<256x128xf32>
      %63 = arith.addf %62, %61 : vector<256x128xf32>
      %c0_90 = arith.constant 0 : index
      %c0_91 = arith.constant 0 : index
      %64 = vector.load %arg7[%c0_90, %c0_91] : memref<256x128xf32, #tpu.memory_space<vmem>>, vector<256x128xf32>
      tpu.vector_store %arg7[%c0_90, %c0_91], %63 {strides = array<i32>} : memref<256x128xf32, #tpu.memory_space<vmem>>, vector<256x128xf32>,
      %c2_92 = arith.constant 2 : index
      %c7_93 = arith.constant 7 : index
      %c0_94 = arith.constant 0 : index
      %65 = vector.load %arg6[%c2_92, %c7_93, %c0_94] : memref<18x32x128xf32, #tpu.memory_space<vmem>>, vector<16x16x128xf32>
      %66 = vector.shape_cast %65 : vector<16x16x128xf32> to vector<256x128xf32>
      %c2_95 = arith.constant 2 : index
      %c0_96 = arith.constant 0 : index
      %c0_97 = arith.constant 0 : index
      %c0_98 = arith.constant 0 : index
      %67 = vector.load %arg3[%c2_95, %c0_96, %c0_97, %c0_98] : memref<3x3x128x128xf32, #tpu.memory_space<vmem>>, vector<1x1x128x128xf32>
      %68 = vector.shape_cast %67 : vector<1x1x128x128xf32> to vector<128x128xf32>
      %cst_99 = arith.constant dense<0.000000e+00> : vector<256x128xf32>
      %69 = tpu.matmul %66, %68, %cst_99 {dimension_numbers = #tpu.dot_dimension_numbers<[1], [0], [0], [1], [0, 0, 1, 1], [], []>} : vector<256x128xf32>, vector<128x128xf32>, vector<256x128xf32> -> vector<256x128xf32>
      %c0_100 = arith.constant 0 : index
      %c0_101 = arith.constant 0 : index
      %70 = vector.load %arg7[%c0_100, %c0_101] : memref<256x128xf32, #tpu.memory_space<vmem>>, vector<256x128xf32>
      %71 = arith.addf %70, %69 : vector<256x128xf32>
      %c0_102 = arith.constant 0 : index
      %c0_103 = arith.constant 0 : index
      %72 = vector.load %arg7[%c0_102, %c0_103] : memref<256x128xf32, #tpu.memory_space<vmem>>, vector<256x128xf32>
      tpu.vector_store %arg7[%c0_102, %c0_103], %71 {strides = array<i32>} : memref<256x128xf32, #tpu.memory_space<vmem>>, vector<256x128xf32>,
      %c2_104 = arith.constant 2 : index
      %c8_105 = arith.constant 8 : index
      %c0_106 = arith.constant 0 : index
      %73 = vector.load %arg6[%c2_104, %c8_105, %c0_106] : memref<18x32x128xf32, #tpu.memory_space<vmem>>, vector<16x16x128xf32>
      %74 = vector.shape_cast %73 : vector<16x16x128xf32> to vector<256x128xf32>
      %c2_107 = arith.constant 2 : index
      %c1_108 = arith.constant 1 : index
      %c0_109 = arith.constant 0 : index
      %c0_110 = arith.constant 0 : index
      %75 = vector.load %arg3[%c2_107, %c1_108, %c0_109, %c0_110] : memref<3x3x128x128xf32, #tpu.memory_space<vmem>>, vector<1x1x128x128xf32>
      %76 = vector.shape_cast %75 : vector<1x1x128x128xf32> to vector<128x128xf32>
      %cst_111 = arith.constant dense<0.000000e+00> : vector<256x128xf32>
      %77 = tpu.matmul %74, %76, %cst_111 {dimension_numbers = #tpu.dot_dimension_numbers<[1], [0], [0], [1], [0, 0, 1, 1], [], []>} : vector<256x128xf32>, vector<128x128xf32>, vector<256x128xf32> -> vector<256x128xf32>
      %c0_112 = arith.constant 0 : index
      %c0_113 = arith.constant 0 : index
      %78 = vector.load %arg7[%c0_112, %c0_113] : memref<256x128xf32, #tpu.memory_space<vmem>>, vector<256x128xf32>
      %79 = arith.addf %78, %77 : vector<256x128xf32>
      %c0_114 = arith.constant 0 : index
      %c0_115 = arith.constant 0 : index
      %80 = vector.load %arg7[%c0_114, %c0_115] : memref<256x128xf32, #tpu.memory_space<vmem>>, vector<256x128xf32>
      tpu.vector_store %arg7[%c0_114, %c0_115], %79 {strides = array<i32>} : memref<256x128xf32, #tpu.memory_space<vmem>>, vector<256x128xf32>,
      %c2_116 = arith.constant 2 : index
      %c9_117 = arith.constant 9 : index
      %c0_118 = arith.constant 0 : index
      %81 = vector.load %arg6[%c2_116, %c9_117, %c0_118] : memref<18x32x128xf32, #tpu.memory_space<vmem>>, vector<16x16x128xf32>
      %82 = vector.shape_cast %81 : vector<16x16x128xf32> to vector<256x128xf32>
      %c2_119 = arith.constant 2 : index
      %c2_120 = arith.constant 2 : index
      %c0_121 = arith.constant 0 : index
      %c0_122 = arith.constant 0 : index
      %83 = vector.load %arg3[%c2_119, %c2_120, %c0_121, %c0_122] : memref<3x3x128x128xf32, #tpu.memory_space<vmem>>, vector<1x1x128x128xf32>
      %84 = vector.shape_cast %83 : vector<1x1x128x128xf32> to vector<128x128xf32>
      %cst_123 = arith.constant dense<0.000000e+00> : vector<256x128xf32>
      %85 = tpu.matmul %82, %84, %cst_123 {dimension_numbers = #tpu.dot_dimension_numbers<[1], [0], [0], [1], [0, 0, 1, 1], [], []>} : vector<256x128xf32>, vector<128x128xf32>, vector<256x128xf32> -> vector<256x128xf32>
      %c0_124 = arith.constant 0 : index
      %c0_125 = arith.constant 0 : index
      %86 = vector.load %arg7[%c0_124, %c0_125] : memref<256x128xf32, #tpu.memory_space<vmem>>, vector<256x128xf32>
      %87 = arith.addf %86, %85 : vector<256x128xf32>
      %c0_126 = arith.constant 0 : index
      %c0_127 = arith.constant 0 : index
      %88 = vector.load %arg7[%c0_126, %c0_127] : memref<256x128xf32, #tpu.memory_space<vmem>>, vector<256x128xf32>
      tpu.vector_store %arg7[%c0_126, %c0_127], %87 {strides = array<i32>} : memref<256x128xf32, #tpu.memory_space<vmem>>, vector<256x128xf32>,
      %c13_i32 = arith.constant 13 : i32
      %89 = arith.subi %c13_i32, %arg8 : i32
      %90 = arith.index_cast %89 : i32 to index
      %91 = memref.load %arg1[%90] : memref<14xf32, #tpu.memory_space<smem>>
      %c0_128 = arith.constant 0 : index
      %c0_129 = arith.constant 0 : index
      %c0_130 = arith.constant 0 : index
      %c0_131 = arith.constant 0 : index
      %92 = vector.load %arg2[%c0_128, %c0_129, %c0_130, %c0_131] : memref<1x16x16x128xf32, #tpu.memory_space<vmem>>, vector<1x16x16x128xf32>
      %93 = vector.shape_cast %92 : vector<1x16x16x128xf32> to vector<16x16x128xf32>
      %94 = vector.shape_cast %93 : vector<16x16x128xf32> to vector<256x128xf32>
      %c0_132 = arith.constant 0 : index
      %c0_133 = arith.constant 0 : index
      %95 = vector.load %arg7[%c0_132, %c0_133] : memref<256x128xf32, #tpu.memory_space<vmem>>, vector<256x128xf32>
      %96 = vector.broadcast %91 : f32 to vector<256x128xf32>
      %97 = arith.mulf %95, %96 : vector<256x128xf32>
      %98 = arith.addf %94, %97 : vector<256x128xf32>
      %99 = vector.shape_cast %98 : vector<256x128xf32> to vector<16x16x128xf32>
      %c1_134 = arith.constant 1 : index
      %c8_135 = arith.constant 8 : index
      %c0_136 = arith.constant 0 : index
      %100 = vector.load %arg6[%c1_134, %c8_135, %c0_136] : memref<18x32x128xf32, #tpu.memory_space<vmem>>, vector<16x16x128xf32>
      tpu.vector_store %arg6[%c1_134, %c8_135, %c0_136], %99 {strides = array<i32>} : memref<18x32x128xf32, #tpu.memory_space<vmem>>, vector<16x16x128xf32>,
    }
    %c14_i32_15 = arith.constant 14 : i32
    %c1_16 = arith.constant 1 : index
    %c8_17 = arith.constant 8 : index
    %c0_18 = arith.constant 0 : index
    %10 = vector.load %arg6[%c1_16, %c8_17, %c0_18] : memref<18x32x128xf32, #tpu.memory_space<vmem>>, vector<16x16x128xf32>
    %11 = vector.shape_cast %10 : vector<16x16x128xf32> to vector<256x128xf32>
    %c0_19 = arith.constant 0 : index
    %c0_20 = arith.constant 0 : index
    %12 = vector.load %arg4[%c0_19, %c0_20] : memref<1x128xf32, #tpu.memory_space<vmem>>, vector<1x128xf32>
    %13 = vector.broadcast %12 : vector<1x128xf32> to vector<256x128xf32>
    %14 = arith.addf %11, %13 : vector<256x128xf32>
    %15 = vector.shape_cast %14 : vector<256x128xf32> to vector<16x16x128xf32>
    %c0_21 = arith.constant 0 : index
    %c0_22 = arith.constant 0 : index
    %c0_23 = arith.constant 0 : index
    %c0_24 = arith.constant 0 : index
    %16 = vector.load %arg5[%c0_21, %c0_22, %c0_23, %c0_24] : memref<1x16x16x128xf32, #tpu.memory_space<vmem>>, vector<1x16x16x128xf32>
    %17 = vector.shape_cast %16 : vector<1x16x16x128xf32> to vector<16x16x128xf32>
    %18 = vector.shape_cast %15 : vector<16x16x128xf32> to vector<1x16x16x128xf32>
    tpu.vector_store %arg5[%c0_21, %c0_22, %c0_23, %c0_24], %18 {strides = array<i32>} : memref<1x16x16x128xf32, #tpu.memory_space<vmem>>, vector<1x16x16x128xf32>,
    return
  }
  func.func @transform_0(%arg0: i32) -> i32 {
    %c0_i32 = arith.constant 0 : i32
    %c0_i32_0 = arith.constant 0 : i32
    return %c0_i32 : i32
  }
  func.func @transform_1(%arg0: i32) -> (i32, i32, i32, i32) {
    %c0_i32 = arith.constant 0 : i32
    %c0_i32_0 = arith.constant 0 : i32
    %c0_i32_1 = arith.constant 0 : i32
    %c0_i32_2 = arith.constant 0 : i32
    return %arg0, %c0_i32, %c0_i32_0, %c0_i32_1 : i32, i32, i32, i32
  }
  func.func @transform_2(%arg0: i32) -> (i32, i32, i32, i32) {
    %c0_i32 = arith.constant 0 : i32
    %c0_i32_0 = arith.constant 0 : i32
    %c0_i32_1 = arith.constant 0 : i32
    %c0_i32_2 = arith.constant 0 : i32
    %c0_i32_3 = arith.constant 0 : i32
    return %c0_i32, %c0_i32_0, %c0_i32_1, %c0_i32_2 : i32, i32, i32, i32
  }
  func.func @transform_3(%arg0: i32) -> (i32, i32) {
    %c0_i32 = arith.constant 0 : i32
    %c0_i32_0 = arith.constant 0 : i32
    %c0_i32_1 = arith.constant 0 : i32
    return %c0_i32, %c0_i32_0 : i32, i32
  }
  func.func @transform_4(%arg0: i32) -> (i32, i32, i32, i32) {
    %c0_i32 = arith.constant 0 : i32
    %c0_i32_0 = arith.constant 0 : i32
    %c0_i32_1 = arith.constant 0 : i32
    %c0_i32_2 = arith.constant 0 : i32
    return %arg0, %c0_i32, %c0_i32_0, %c0_i32_1 : i32, i32, i32, i32
  }
}

</mosaic_0001>

<llo_original>
// kernel: tpu_custom_call.1
$region0: #{tpu_custom_call.1}
  #allocation0 [shape = 'u32[]', space=smem, size = 0x4, offset = 0x4, fixed_abs, tag = 'smem constant byte address 0x4 - core index']
  #allocation1 [shape = 'u32[144,128]{1,0:T(1,128)}', space=vmem, size = 0x12000, scoped, tag = 'internal scratch']
  #allocation2 [shape = 'f32[18,32,128]{2,1,0:T(8,128)}', space=vmem, size = 0x48000, scoped, tag = 'scratch operand']
  #allocation3 [shape = 'f32[256,128]{1,0:T(8,128)}', space=vmem, size = 0x20000, scoped, tag = 'scratch operand']
  %s0 = inlined_call_operand.hbm [shape: f32[14], index: 0, kind: input, shape index: {}]
  %s1 = inlined_call_operand.hbm [shape: f32[2,16,16,128], index: 1, kind: input, shape index: {}]
  %s2 = inlined_call_operand.hbm [shape: f32[3,3,128,128], index: 2, kind: input, shape index: {}]
  %s3 = inlined_call_operand.vmem [shape: f32[1,128], index: 3, kind: input, shape index: {}]
  %s4 = inlined_call_operand.hbm [shape: f32[2,16,16,128], index: 4, kind: output, shape index: {}]
  %s5 = sld [smem:[#allocation0]]
  $region68: #{tpu_custom_call.1} parent=0
    _
  %s7 = ssub.s32 1, %s5
  %s8 = scalar_select 0, %s7, %s5
  $region1: #{tpu_custom_call.1} parent=0
    #allocation4 [shape = 'u8[512]{0}', space=smem, size = 0x200, scoped, tag = 'input window, operand 0, single buffered']
    #allocation5 [shape = 's32[2]{0}', space=sflag, size = 0x8, scoped, tag = 'scoped memory for tpu_custom_call.1']
    #allocation6 [shape = 's32[2]{0}', space=sflag, size = 0x8, scoped, tag = 'scoped memory for tpu_custom_call.1']
    #allocation7 [shape = 's32[2]{0}', space=sflag, size = 0x8, scoped, tag = 'scoped memory for tpu_custom_call.1']
    #allocation8 [shape = 'u8[262144]{0}', space=vmem, size = 0x40000, scoped, tag = 'input window, operand 1']
    #allocation9 [shape = 'u8[589824]{0}', space=vmem, size = 0x90000, scoped, tag = 'input window, operand 2, single buffered']
    #allocation10 [shape = 's32[1]{0}', space=sflag, size = 0x4, scoped, tag = 'scoped memory for tpu_custom_call.1']
    #allocation11 [shape = 'u8[262144]{0}', space=vmem, size = 0x40000, scoped, tag = 'output window, operand 0']
    %9 = vsyncpa [#allocation7], 0
    %10 = vsyncpa [#allocation5], 0
    %s11 = scalar_lea.sflag [#allocation5], 1
    %12 = vsyncpa %s11, 0
    %13 = vsyncpa [#allocation10], 0
    %14 = vsyncpa [#allocation6], 0
    %s15 = scalar_lea.sflag [#allocation6], 1
    %16 = vsyncpa %s15, 0
    loop: start=0, step=1, limit=4
    $region2: #{tpu_custom_call.1} parent=1 // loop_pre_header
      _
    $region3: #{tpu_custom_call.1} parent=1 // loop_header
      %s18 = sphi 0, %s22
      %p19 = scmp.ge.s32.totalorder %s18, 4
      %s26 = sphi 0, %s26
      %s28 = sphi 0, %s26
      %s29 = sphi 0, %s28
      %s43 = sphi 0, %s29
      %s49 = sphi 0, %s51
      %s52 = sphi 0, %s49
      %s53 = sphi 0, %s52
      %s69 = sphi 0, %s53
      %s73 = sphi 0, %s73
      %s75 = sphi 0, %s73
      %s76 = sphi 0, %s75
      %s90 = sphi 0, %s76
      %s94 = sphi 0, %s94
      %s96 = sphi 0, %s94
      %s97 = sphi 0, %s96
      %s111 = sphi 0, %s97
      %s117 = sphi 0, %s119
      %s120 = sphi 0, %s117
      %s121 = sphi 0, %s120
      %s137 = sphi 0, %s121
    $region4: #{tpu_custom_call.1} parent=1 // loop_header_branch
      %21 = sbr.rel (%p19) target = $region8
    $region5: #{tpu_custom_call.1} parent=1 // loop_body
      %s23 = ssub.s32 %s18, 1
      %s24 = ssub.s32 %s18, 2
      %s25 = sadd.s32 %s18, 1
      %s27 = sadd.s32 %s26, 1
      %p30 = scmp.eq.s32.totalorder %s18, 1
      %p31 = scmp.ne.s32.totalorder %s26, %s28
      %p32 = scmp.eq.s32.totalorder %s18, 0
      %p33 = por %p31, %p32
      %p34 = scmp.ne.s32.totalorder %s26, %s28
      %p35 = scmp.eq.s32.totalorder %s23, 1
      %p36 = por %p34, %p35
      %p37 = scmp.ne.s32.totalorder %s28, %s29
      %p38 = scmp.eq.s32.totalorder %s23, 0
      %p39 = por %p37, %p38
      %p40 = scmp.ne.s32.totalorder %s28, %s29
      %p41 = scmp.eq.s32.totalorder %s24, 1
      %p42 = por %p40, %p41
      %p44 = scmp.ne.s32.totalorder %s29, %s43
      %p45 = scmp.eq.s32.totalorder %s24, 0
      %p46 = por %p44, %p45
      %s47 = ssub.s32 %s18, %s25
      %p48 = scmp.eq.s32.totalorder %s47, 0
      %s50 = sadd.s32 %s49, 1
      %s51 = scalar_select %p48, %s49, %s50
      %p54 = pneg %p48
      %p55 = scmp.eq.s32.totalorder %s18, 1
      %p56 = por %p54, %p55
      %p57 = scmp.ne.s32.totalorder %s49, %s52
      %p58 = scmp.eq.s32.totalorder %s18, 0
      %p59 = por %p57, %p58
      %p60 = scmp.ne.s32.totalorder %s49, %s52
      %p61 = scmp.eq.s32.totalorder %s23, 1
      %p62 = por %p60, %p61
      %p63 = scmp.ne.s32.totalorder %s52, %s53
      %p64 = scmp.eq.s32.totalorder %s23, 0
      %p65 = por %p63, %p64
      %p66 = scmp.ne.s32.totalorder %s52, %s53
      %p67 = scmp.eq.s32.totalorder %s24, 1
      %p68 = por %p66, %p67
      %p70 = scmp.ne.s32.totalorder %s53, %s69
      %p71 = scmp.eq.s32.totalorder %s24, 0
      %p72 = por %p70, %p71
      %s74 = sadd.s32 %s73, 1
      %p77 = scmp.eq.s32.totalorder %s18, 1
      %p78 = scmp.ne.s32.totalorder %s73, %s75
      %p79 = scmp.eq.s32.totalorder %s18, 0
      %p80 = por %p78, %p79
      %p81 = scmp.ne.s32.totalorder %s73, %s75
      %p82 = scmp.eq.s32.totalorder %s23, 1
      %p83 = por %p81, %p82
      %p84 = scmp.ne.s32.totalorder %s75, %s76
      %p85 = scmp.eq.s32.totalorder %s23, 0
      %p86 = por %p84, %p85
      %p87 = scmp.ne.s32.totalorder %s75, %s76
      %p88 = scmp.eq.s32.totalorder %s24, 1
      %p89 = por %p87, %p88
      %p91 = scmp.ne.s32.totalorder %s76, %s90
      %p92 = scmp.eq.s32.totalorder %s24, 0
      %p93 = por %p91, %p92
      %s95 = sadd.s32 %s94, 1
      %p98 = scmp.eq.s32.totalorder %s18, 1
      %p99 = scmp.ne.s32.totalorder %s94, %s96
      %p100 = scmp.eq.s32.totalorder %s18, 0
      %p101 = por %p99, %p100
      %p102 = scmp.ne.s32.totalorder %s94, %s96
      %p103 = scmp.eq.s32.totalorder %s23, 1
      %p104 = por %p102, %p103
      %p105 = scmp.ne.s32.totalorder %s96, %s97
      %p106 = scmp.eq.s32.totalorder %s23, 0
      %p107 = por %p105, %p106
      %p108 = scmp.ne.s32.totalorder %s96, %s97
      %p109 = scmp.eq.s32.totalorder %s24, 1
      %p110 = por %p108, %p109
      %p112 = scmp.ne.s32.totalorder %s97, %s111
      %p113 = scmp.eq.s32.totalorder %s24, 0
      %p114 = por %p112, %p113
      %s115 = ssub.s32 %s18, %s25
      %p116 = scmp.eq.s32.totalorder %s115, 0
      %s118 = sadd.s32 %s117, 1
      %s119 = scalar_select %p116, %s117, %s118
      %p122 = pneg %p116
      %p123 = scmp.eq.s32.totalorder %s18, 1
      %p124 = por %p122, %p123
      %p125 = scmp.ne.s32.totalorder %s117, %s120
      %p126 = scmp.eq.s32.totalorder %s18, 0
      %p127 = por %p125, %p126
      %p128 = scmp.ne.s32.totalorder %s117, %s120
      %p129 = scmp.eq.s32.totalorder %s23, 1
      %p130 = por %p128, %p129
      %p131 = scmp.ne.s32.totalorder %s120, %s121
      %p132 = scmp.eq.s32.totalorder %s23, 0
      %p133 = por %p131, %p132
      %p134 = scmp.ne.s32.totalorder %s120, %s121
      %p135 = scmp.eq.s32.totalorder %s24, 1
      %p136 = por %p134, %p135
      %p138 = scmp.ne.s32.totalorder %s121, %s137
      %p139 = scmp.eq.s32.totalorder %s24, 0
      %p140 = por %p138, %p139
      %p141 = scmp.le.s32.totalorder 1, %s18
      %p142 = scmp.lt.s32.totalorder %s18, 3
      %p143 = pnand %p141, %p142
      %p144 = pneg %p143
      // Predicated region
      $region9: #{tpu_custom_call.1} parent=5 // pred_check
        _
      $region10: #{tpu_custom_call.1} parent=5 // pred_check_branch
        %146 = sbr.rel (%p143) target = $region12
      $region11: #{tpu_custom_call.1} parent=5 // pred_region
        %s147 = ssub.s32 %s18, 1
        // Predicated region
        $region13: #{tpu_custom_call.1} parent=11 // pred_check
          %p148 = pneg %p39
        $region14: #{tpu_custom_call.1} parent=11 // pred_check_branch
          %150 = sbr.rel (%p148) target = $region16
        $region15: #{tpu_custom_call.1} parent=11 // pred_region
          %s152 = ssub.s32 16, 16
          %153 = vsyncadd [#allocation7], %s152
          %156 = dma.hbm_to_smem %s0, 16, [#allocation4], [#allocation7]
        $region16: #{tpu_custom_call.1} parent=11 // pred_fallthru
          _
        // Predicated region
        $region17: #{tpu_custom_call.1} parent=11 // pred_check
          %p157 = pneg %p86
        $region18: #{tpu_custom_call.1} parent=11 // pred_check_branch
          %159 = sbr.rel (%p157) target = $region20
        $region19: #{tpu_custom_call.1} parent=11 // pred_region
          %s161 = ssub.s32 18432, 18432
          %162 = vsyncadd [#allocation10], %s161
          %s163 = sshll.u32 [#allocation9], 4
          %s164 = int_to_ptr.vmem [resolvable:$true] %s163
          %169 = dma.hbm_to_vmem [thread:$0]  %s2, 18432, %s164, [#allocation10], 128, 128, 8
        $region20: #{tpu_custom_call.1} parent=11 // pred_fallthru
          _
        // Predicated region
        $region21: #{tpu_custom_call.1} parent=11 // pred_check
          %p170 = pneg %p107
        $region22: #{tpu_custom_call.1} parent=11 // pred_check_branch
          %172 = sbr.rel (%p170) target = $region24
        $region23: #{tpu_custom_call.1} parent=11 // pred_region
          _
        $region24: #{tpu_custom_call.1} parent=11 // pred_fallthru
          _
      $region12: #{tpu_custom_call.1} parent=5 // pred_fallthru
        _
      %p173 = scmp.lt.s32.totalorder %s18, 2
      // Predicated region
      $region25: #{tpu_custom_call.1} parent=5 // pred_check
        %p174 = pneg %p173
      $region26: #{tpu_custom_call.1} parent=5 // pred_check_branch
        %176 = sbr.rel (%p174) target = $region28
      $region27: #{tpu_custom_call.1} parent=5 // pred_region
        // Predicated region
        $region29: #{tpu_custom_call.1} parent=27 // pred_check
          %p177 = pneg %p59
        $region30: #{tpu_custom_call.1} parent=27 // pred_check_branch
          %179 = sbr.rel (%p177) target = $region32
        $region31: #{tpu_custom_call.1} parent=27 // pred_region
          %s180 = sand.u32 %s49, 1
          %s181 = scalar_lea.sflag [#allocation5], %s180
          %s182 = sand.u32 %s49, 1
          %s183 = smul.addr %s182, 256
          %s184 = scalar_lea.vmem [#allocation8], %s183
          %s186 = ssub.s32 4096, 4096
          %187 = vsyncadd %s181, %s186
          %s188 = smul.addr %s18, 32
          %s189 = smul.addr %s188, 128
          %s190 = scalar_lea.hbm %s1, %s189
          %s191 = sshll.u32 %s184, 4
          %s192 = int_to_ptr.vmem [resolvable:$true] %s191
          %197 = dma.hbm_to_vmem [thread:$0]  %s190, 4096, %s192, %s181, 128, 128, 8
        $region32: #{tpu_custom_call.1} parent=27 // pred_fallthru
          _
      $region28: #{tpu_custom_call.1} parent=5 // pred_fallthru
        _
      %p198 = scmp.le.s32.totalorder 1, %s18
      %p199 = scmp.lt.s32.totalorder %s18, 3
      %p200 = pnand %p198, %p199
      %p201 = pneg %p200
      // Predicated region
      $region33: #{tpu_custom_call.1} parent=5 // pred_check
        _
      $region34: #{tpu_custom_call.1} parent=5 // pred_check_branch
        %203 = sbr.rel (%p200) target = $region36
      $region35: #{tpu_custom_call.1} parent=5 // pred_region
        %s204 = ssub.s32 %s18, 1
        // Predicated region
        $region37: #{tpu_custom_call.1} parent=35 // pred_check
          %p205 = pneg %p39
        $region38: #{tpu_custom_call.1} parent=35 // pred_check_branch
          %207 = sbr.rel (%p205) target = $region40
        $region39: #{tpu_custom_call.1} parent=35 // pred_region
          %208 = dma.done [#allocation7], 16
        $region40: #{tpu_custom_call.1} parent=35 // pred_fallthru
          _
        %s209 = sand.u32 %s52, 1
        %s210 = scalar_lea.sflag [#allocation5], %s209
        %s211 = sand.u32 %s52, 1
        %s212 = smul.addr %s211, 256
        %s213 = scalar_lea.vmem [#allocation8], %s212
        // Predicated region
        $region41: #{tpu_custom_call.1} parent=35 // pred_check
          %p214 = pneg %p65
        $region42: #{tpu_custom_call.1} parent=35 // pred_check_branch
          %216 = sbr.rel (%p214) target = $region44
        $region43: #{tpu_custom_call.1} parent=35 // pred_region
          %217 = dma.done %s210, 4096
        $region44: #{tpu_custom_call.1} parent=35 // pred_fallthru
          _
        // Predicated region
        $region45: #{tpu_custom_call.1} parent=35 // pred_check
          %p218 = pneg %p86
        $region46: #{tpu_custom_call.1} parent=35 // pred_check_branch
          %220 = sbr.rel (%p218) target = $region48
        $region47: #{tpu_custom_call.1} parent=35 // pred_region
          %221 = dma.done [#allocation10], 18432
        $region48: #{tpu_custom_call.1} parent=35 // pred_fallthru
          _
        %222 = sfence
        %p223 = pneg %p39
        %p224 = pneg %p36
        %s225 = sand.u32 %s52, 1
        %s226 = scalar_lea.sflag [#allocation5], %s225
        %s227 = sand.u32 %s52, 1
        %s228 = smul.addr %s227, 256
        %s229 = scalar_lea.vmem [#allocation8], %s228
        %p230 = pneg %p65
        %p231 = pneg %p62
        %p232 = pneg %p86
        %p233 = pneg %p83
        %p234 = pneg %p107
        %p235 = pneg %p104
        %p236 = pneg %p133
        %p237 = pneg %p130
        %s238 = sand.u32 %s120, 1
        %s239 = scalar_lea.sflag [#allocation6], %s238
        %s240 = sand.u32 %s120, 1
        %s241 = smul.addr %s240, 256
        %s242 = scalar_lea.vmem [#allocation11], %s241
        %243 = vst [vmem:[#allocation2] sm:$0xff] 0.0
        %244 = vst [vmem:[#allocation2 + $0x8] sm:$0xff] 0.0
        %245 = vst [vmem:[#allocation2 + $0x10] sm:$0xff] 0.0
        %246 = vst [vmem:[#allocation2 + $0x18] sm:$0xff] 0.0
        %s247 = scalar_lea.vmem [#allocation2], 544
        %248 = vst [vmem:[%s247] sm:$0xff] 0.0
        %249 = vst [vmem:[%s247 + $0x8] sm:$0xff] 0.0
        %250 = vst [vmem:[%s247 + $0x10] sm:$0xff] 0.0
        %251 = vst [vmem:[%s247 + $0x18] sm:$0xff] 0.0
        %s252 = scalar_lea.vmem [#allocation2], 32
        %253 = vst [vmem:[%s252] sm:$0xff] 0.0
        %254 = vst [vmem:[%s252 + $0x20] sm:$0xff] 0.0
        %255 = vst [vmem:[%s252 + $0x40] sm:$0xff] 0.0
        %256 = vst [vmem:[%s252 + $0x60] sm:$0xff] 0.0
        %257 = vst [vmem:[%s252 + $0x80] sm:$0xff] 0.0
        %258 = vst [vmem:[%s252 + $0xa0] sm:$0xff] 0.0
        %259 = vst [vmem:[%s252 + $0xc0] sm:$0xff] 0.0
        %260 = vst [vmem:[%s252 + $0xe0] sm:$0xff] 0.0
        %261 = vst [vmem:[%s252 + $0x100] sm:$0xff] 0.0
        %262 = vst [vmem:[%s252 + $0x120] sm:$0xff] 0.0
        %263 = vst [vmem:[%s252 + $0x140] sm:$0xff] 0.0
        %264 = vst [vmem:[%s252 + $0x160] sm:$0xff] 0.0
        %265 = vst [vmem:[%s252 + $0x180] sm:$0xff] 0.0
        %266 = vst [vmem:[%s252 + $0x1a0] sm:$0xff] 0.0
        %267 = vst [vmem:[%s252 + $0x1c0] sm:$0xff] 0.0
        %268 = vst [vmem:[%s252 + $0x1e0] sm:$0xff] 0.0
        %269 = vst [vmem:[%s252 + $0x18] sm:$0xff] 0.0
        %270 = vst [vmem:[%s252 + $0x38] sm:$0xff] 0.0
        %271 = vst [vmem:[%s252 + $0x58] sm:$0xff] 0.0
        %272 = vst [vmem:[%s252 + $0x78] sm:$0xff] 0.0
        %273 = vst [vmem:[%s252 + $0x98] sm:$0xff] 0.0
        %274 = vst [vmem:[%s252 + $0xb8] sm:$0xff] 0.0
        %275 = vst [vmem:[%s252 + $0xd8] sm:$0xff] 0.0
        %276 = vst [vmem:[%s252 + $0xf8] sm:$0xff] 0.0
        %277 = vst [vmem:[%s252 + $0x118] sm:$0xff] 0.0
        %278 = vst [vmem:[%s252 + $0x138] sm:$0xff] 0.0
        %279 = vst [vmem:[%s252 + $0x158] sm:$0xff] 0.0
        %280 = vst [vmem:[%s252 + $0x178] sm:$0xff] 0.0
        %281 = vst [vmem:[%s252 + $0x198] sm:$0xff] 0.0
        %282 = vst [vmem:[%s252 + $0x1b8] sm:$0xff] 0.0
        %283 = vst [vmem:[%s252 + $0x1d8] sm:$0xff] 0.0
        %284 = vst [vmem:[%s252 + $0x1f8] sm:$0xff] 0.0
        %v285 = vld [vmem:[%s213] sm:$0xff]
        %v286 = vld [vmem:[%s213 + $0x8] sm:$0xff]
        %v287 = vld [vmem:[%s213 + $0x10] sm:$0xff]
        %v288 = vld [vmem:[%s213 + $0x18] sm:$0xff]
        %v289 = vld [vmem:[%s213 + $0x20] sm:$0xff]
        %v290 = vld [vmem:[%s213 + $0x28] sm:$0xff]
        %v291 = vld [vmem:[%s213 + $0x30] sm:$0xff]
        %v292 = vld [vmem:[%s213 + $0x38] sm:$0xff]
        %v293 = vld [vmem:[%s213 + $0x40] sm:$0xff]
        %v294 = vld [vmem:[%s213 + $0x48] sm:$0xff]
        %v295 = vld [vmem:[%s213 + $0x50] sm:$0xff]
        %v296 = vld [vmem:[%s213 + $0x58] sm:$0xff]
        %v297 = vld [vmem:[%s213 + $0x60] sm:$0xff]
        %v298 = vld [vmem:[%s213 + $0x68] sm:$0xff]
        %v299 = vld [vmem:[%s213 + $0x70] sm:$0xff]
        %v300 = vld [vmem:[%s213 + $0x78] sm:$0xff]
        %v301 = vld [vmem:[%s213 + $0x80] sm:$0xff]
        %v302 = vld [vmem:[%s213 + $0x88] sm:$0xff]
        %v303 = vld [vmem:[%s213 + $0x90] sm:$0xff]
        %v304 = vld [vmem:[%s213 + $0x98] sm:$0xff]
        %v305 = vld [vmem:[%s213 + $0xa0] sm:$0xff]
        %v306 = vld [vmem:[%s213 + $0xa8] sm:$0xff]
        %v307 = vld [vmem:[%s213 + $0xb0] sm:$0xff]
        %v308 = vld [vmem:[%s213 + $0xb8] sm:$0xff]
        %v309 = vld [vmem:[%s213 + $0xc0] sm:$0xff]
        %v310 = vld [vmem:[%s213 + $0xc8] sm:$0xff]
        %v311 = vld [vmem:[%s213 + $0xd0] sm:$0xff]
        %v312 = vld [vmem:[%s213 + $0xd8] sm:$0xff]
        %v313 = vld [vmem:[%s213 + $0xe0] sm:$0xff]
        %v314 = vld [vmem:[%s213 + $0xe8] sm:$0xff]
        %v315 = vld [vmem:[%s213 + $0xf0] sm:$0xff]
        %v316 = vld [vmem:[%s213 + $0xf8] sm:$0xff]
        %317 = vst [vmem:[%s252 + $0x8] sm:$0xff] %v285
        %318 = vst [vmem:[%s252 + $0x10] sm:$0xff] %v286
        %319 = vst [vmem:[%s252 + $0x28] sm:$0xff] %v287
        %320 = vst [vmem:[%s252 + $0x30] sm:$0xff] %v288
        %321 = vst [vmem:[%s252 + $0x48] sm:$0xff] %v289
        %322 = vst [vmem:[%s252 + $0x50] sm:$0xff] %v290
        %323 = vst [vmem:[%s252 + $0x68] sm:$0xff] %v291
        %324 = vst [vmem:[%s252 + $0x70] sm:$0xff] %v292
        %325 = vst [vmem:[%s252 + $0x88] sm:$0xff] %v293
        %326 = vst [vmem:[%s252 + $0x90] sm:$0xff] %v294
        %327 = vst [vmem:[%s252 + $0xa8] sm:$0xff] %v295
        %328 = vst [vmem:[%s252 + $0xb0] sm:$0xff] %v296
        %329 = vst [vmem:[%s252 + $0xc8] sm:$0xff] %v297
        %330 = vst [vmem:[%s252 + $0xd0] sm:$0xff] %v298
        %331 = vst [vmem:[%s252 + $0xe8] sm:$0xff] %v299
        %332 = vst [vmem:[%s252 + $0xf0] sm:$0xff] %v300
        %333 = vst [vmem:[%s252 + $0x108] sm:$0xff] %v301
        %334 = vst [vmem:[%s252 + $0x110] sm:$0xff] %v302
        %335 = vst [vmem:[%s252 + $0x128] sm:$0xff] %v303
        %336 = vst [vmem:[%s252 + $0x130] sm:$0xff] %v304
        %337 = vst [vmem:[%s252 + $0x148] sm:$0xff] %v305
        %338 = vst [vmem:[%s252 + $0x150] sm:$0xff] %v306
        %339 = vst [vmem:[%s252 + $0x168] sm:$0xff] %v307
        %340 = vst [vmem:[%s252 + $0x170] sm:$0xff] %v308
        %341 = vst [vmem:[%s252 + $0x188] sm:$0xff] %v309
        %342 = vst [vmem:[%s252 + $0x190] sm:$0xff] %v310
        %343 = vst [vmem:[%s252 + $0x1a8] sm:$0xff] %v311
        %344 = vst [vmem:[%s252 + $0x1b0] sm:$0xff] %v312
        %345 = vst [vmem:[%s252 + $0x1c8] sm:$0xff] %v313
        %346 = vst [vmem:[%s252 + $0x1d0] sm:$0xff] %v314
        %347 = vst [vmem:[%s252 + $0x1e8] sm:$0xff] %v315
        %348 = vst [vmem:[%s252 + $0x1f0] sm:$0xff] %v316
        loop: start=0, step=1, limit=14
        $region49: #{tpu_custom_call.1} parent=35 // loop_pre_header
          _
        $region50: #{tpu_custom_call.1} parent=35 // loop_header
          %s350 = sphi 0, %s354
          %p351 = scmp.ge.s32.totalorder %s350, 14
        $region51: #{tpu_custom_call.1} parent=35 // loop_header_branch
          %353 = sbr.rel (%p351) target = $region55
        $region52: #{tpu_custom_call.1} parent=35 // loop_body
          %v355 = vld [vmem:[#allocation2 + $0x7] sm:$0xff]
          %v356 = vld [vmem:[#allocation2 + $0xf] sm:$0xff]
          %v357 = vld [vmem:[#allocation2 + $0x27] sm:$0xff]
          %v358 = vld [vmem:[#allocation2 + $0x2f] sm:$0xff]
          %v359 = vld [vmem:[#allocation2 + $0x47] sm:$0xff]
          %v360 = vld [vmem:[#allocation2 + $0x4f] sm:$0xff]
          %v361 = vld [vmem:[#allocation2 + $0x67] sm:$0xff]
          %v362 = vld [vmem:[#allocation2 + $0x6f] sm:$0xff]
          %v363 = vld [vmem:[#allocation2 + $0x87] sm:$0xff]
          %v364 = vld [vmem:[#allocation2 + $0x8f] sm:$0xff]
          %v365 = vld [vmem:[#allocation2 + $0xa7] sm:$0xff]
          %v366 = vld [vmem:[#allocation2 + $0xaf] sm:$0xff]
          %v367 = vld [vmem:[#allocation2 + $0xc7] sm:$0xff]
          %v368 = vld [vmem:[#allocation2 + $0xcf] sm:$0xff]
          %v369 = vld [vmem:[#allocation2 + $0xe7] sm:$0xff]
          %v370 = vld [vmem:[#allocation2 + $0xef] sm:$0xff]
          %v371 = vld [vmem:[#allocation2 + $0x107] sm:$0xff]
          %v372 = vld [vmem:[#allocation2 + $0x10f] sm:$0xff]
          %v373 = vld [vmem:[#allocation2 + $0x127] sm:$0xff]
          %v374 = vld [vmem:[#allocation2 + $0x12f] sm:$0xff]
          %v375 = vld [vmem:[#allocation2 + $0x147] sm:$0xff]
          %v376 = vld [vmem:[#allocation2 + $0x14f] sm:$0xff]
          %v377 = vld [vmem:[#allocation2 + $0x167] sm:$0xff]
          %v378 = vld [vmem:[#allocation2 + $0x16f] sm:$0xff]
          %v379 = vld [vmem:[#allocation2 + $0x187] sm:$0xff]
          %v380 = vld [vmem:[#allocation2 + $0x18f] sm:$0xff]
          %v381 = vld [vmem:[#allocation2 + $0x1a7] sm:$0xff]
          %v382 = vld [vmem:[#allocation2 + $0x1af] sm:$0xff]
          %v383 = vld [vmem:[#allocation2 + $0x1c7] sm:$0xff]
          %v384 = vld [vmem:[#allocation2 + $0x1cf] sm:$0xff]
          %v385 = vld [vmem:[#allocation2 + $0x1e7] sm:$0xff]
          %v386 = vld [vmem:[#allocation2 + $0x1ef] sm:$0xff]
          %v387 = vld [vmem:[#allocation9] sm:$0xff]
          %v388 = vld [vmem:[#allocation9 + $0x8] sm:$0xff]
          %v389 = vld [vmem:[#allocation9 + $0x10] sm:$0xff]
          %v390 = vld [vmem:[#allocation9 + $0x18] sm:$0xff]
          %v391 = vld [vmem:[#allocation9 + $0x20] sm:$0xff]
          %v392 = vld [vmem:[#allocation9 + $0x28] sm:$0xff]
          %v393 = vld [vmem:[#allocation9 + $0x30] sm:$0xff]
          %v394 = vld [vmem:[#allocation9 + $0x38] sm:$0xff]
          %v395 = vld [vmem:[#allocation9 + $0x40] sm:$0xff]
          %v396 = vld [vmem:[#allocation9 + $0x48] sm:$0xff]
          %v397 = vld [vmem:[#allocation9 + $0x50] sm:$0xff]
          %v398 = vld [vmem:[#allocation9 + $0x58] sm:$0xff]
          %v399 = vld [vmem:[#allocation9 + $0x60] sm:$0xff]
          %v400 = vld [vmem:[#allocation9 + $0x68] sm:$0xff]
          %v401 = vld [vmem:[#allocation9 + $0x70] sm:$0xff]
          %v402 = vld [vmem:[#allocation9 + $0x78] sm:$0xff]
          %403 = vmatprep.subr.mxu0 0.0
          %404 = vmatpush1.msra.mxu0 %v387
          %405 = vmatprep.subr.mxu0 0.0
          %406 = vmatpush1.msra.mxu0 %v388
          %407 = vmatprep.subr.mxu0 0.0
          %408 = vmatpush1.msra.mxu0 %v389
          %409 = vmatprep.subr.mxu0 0.0
          %410 = vmatpush1.msra.mxu0 %v390
          %411 = vmatprep.subr.mxu0 0.0
          %412 = vmatpush1.msra.mxu0 %v391
          %413 = vmatprep.subr.mxu0 0.0
          %414 = vmatpush1.msra.mxu0 %v392
          %415 = vmatprep.subr.mxu0 0.0
          %416 = vmatpush1.msra.mxu0 %v393
          %417 = vmatprep.subr.mxu0 0.0
          %418 = vmatpush1.msra.mxu0 %v394
          %419 = vmatprep.subr.mxu0 0.0
          %420 = vmatpush1.msra.mxu0 %v395
          %421 = vmatprep.subr.mxu0 0.0
          %422 = vmatpush1.msra.mxu0 %v396
          %423 = vmatprep.subr.mxu0 0.0
          %424 = vmatpush1.msra.mxu0 %v397
          %425 = vmatprep.subr.mxu0 0.0
          %426 = vmatpush1.msra.mxu0 %v398
          %427 = vmatprep.subr.mxu0 0.0
          %428 = vmatpush1.msra.mxu0 %v399
          %429 = vmatprep.subr.mxu0 0.0
          %430 = vmatpush1.msra.mxu0 %v400
          %431 = vmatprep.subr.mxu0 0.0
          %432 = vmatpush1.msra.mxu0 %v401
          %433 = vmatprep.subr.mxu0 0.0
          %434 = vmatpush1.msra.mxu0 %v402
          %435 = vmatprep.subr.mxu0 0.0
          %436 = vmatpush1.msra.mxu0 0.0
          %437 = vmatprep.subr.mxu0 0.0
          %438 = vmatpush1.msra.mxu0 0.0
          %439 = vmatprep.subr.mxu0 0.0
          %440 = vmatpush1.msra.mxu0 0.0
          %441 = vmatprep.subr.mxu0 0.0
          %442 = vmatpush1.msra.mxu0 0.0
          %443 = vmatprep.subr.mxu0 0.0
          %444 = vmatpush1.msra.mxu0 0.0
          %445 = vmatprep.subr.mxu0 0.0
          %446 = vmatpush1.msra.mxu0 0.0
          %447 = vmatprep.subr.mxu0 0.0
          %448 = vmatpush1.msra.mxu0 0.0
          %449 = vmatprep.subr.mxu0 0.0
          %450 = vmatpush1.msra.mxu0 0.0
          %451 = vmatprep.subr.mxu0 0.0
          %452 = vmatpush1.msra.mxu0 0.0
          %453 = vmatprep.subr.mxu0 0.0
          %454 = vmatpush1.msra.mxu0 0.0
          %455 = vmatprep.subr.mxu0 0.0
          %456 = vmatpush1.msra.mxu0 0.0
          %457 = vmatprep.subr.mxu0 0.0
          %458 = vmatpush1.msra.mxu0 0.0
          %459 = vmatprep.subr.mxu0 0.0
          %460 = vmatpush1.msra.mxu0 0.0
          %461 = vmatprep.subr.mxu0 0.0
          %462 = vmatpush1.msra.mxu0 0.0
          %463 = vmatprep.subr.mxu0 0.0
          %464 = vmatpush1.msra.mxu0 0.0
          %465 = vmatprep.subr.mxu0 0.0
          %466 = vmatpush1.msra.mxu0 0.0
          %467 = vmatprep.mubr.f32.mxu0 0.0
          %468 = vmatmul.mubr.f32.gmra.mrb[0].mxu0 %v355
          %v469 = vpop.f32.mrb[0].mxu0
          %v470 = vadd.f32 0.0, %v469
          %v471 = vpop.f32.mrb[0].mxu0
          %472 = vmatprep.mubr.f32.mxu0 0.0
          %473 = vmatmul.mubr.f32.gmra.mrb[0].mxu0 %v356
          %v474 = vpop.f32.mrb[0].mxu0
          %v475 = vadd.f32 0.0, %v474
          %v476 = vpop.f32.mrb[0].mxu0
          %477 = vmatprep.mubr.f32.mxu0 0.0
          %478 = vmatmul.mubr.f32.gmra.mrb[0].mxu0 %v357
          %v479 = vpop.f32.mrb[0].mxu0
          %v480 = vadd.f32 0.0, %v479
          %v481 = vpop.f32.mrb[0].mxu0
          %482 = vmatprep.mubr.f32.mxu0 0.0
          %483 = vmatmul.mubr.f32.gmra.mrb[0].mxu0 %v358
          %v484 = vpop.f32.mrb[0].mxu0
          %v485 = vadd.f32 0.0, %v484
          %v486 = vpop.f32.mrb[0].mxu0
          %487 = vmatprep.mubr.f32.mxu0 0.0
          %488 = vmatmul.mubr.f32.gmra.mrb[0].mxu0 %v359
          %v489 = vpop.f32.mrb[0].mxu0
          %v490 = vadd.f32 0.0, %v489
          %v491 = vpop.f32.mrb[0].mxu0
          %492 = vmatprep.mubr.f32.mxu0 0.0
          %493 = vmatmul.mubr.f32.gmra.mrb[0].mxu0 %v360
          %v494 = vpop.f32.mrb[0].mxu0
          %v495 = vadd.f32 0.0, %v494
          %v496 = vpop.f32.mrb[0].mxu0
          %497 = vmatprep.mubr.f32.mxu0 0.0
          %498 = vmatmul.mubr.f32.gmra.mrb[0].mxu0 %v361
          %v499 = vpop.f32.mrb[0].mxu0
          %v500 = vadd.f32 0.0, %v499
          %v501 = vpop.f32.mrb[0].mxu0
          %502 = vmatprep.mubr.f32.mxu0 0.0
          %503 = vmatmul.mubr.f32.gmra.mrb[0].mxu0 %v362
          %v504 = vpop.f32.mrb[0].mxu0
          %v505 = vadd.f32 0.0, %v504
          %v506 = vpop.f32.mrb[0].mxu0
          %507 = vmatprep.mubr.f32.mxu0 0.0
          %508 = vmatmul.mubr.f32.gmra.mrb[0].mxu0 %v363
          %v509 = vpop.f32.mrb[0].mxu0
          %v510 = vadd.f32 0.0, %v509
          %v511 = vpop.f32.mrb[0].mxu0
          %512 = vmatprep.mubr.f32.mxu0 0.0
          %513 = vmatmul.mubr.f32.gmra.mrb[0].mxu0 %v364
          %v514 = vpop.f32.mrb[0].mxu0
          %v515 = vadd.f32 0.0, %v514
          %v516 = vpop.f32.mrb[0].mxu0
          %517 = vmatprep.mubr.f32.mxu0 0.0
          %518 = vmatmul.mubr.f32.gmra.mrb[0].mxu0 %v365
          %v519 = vpop.f32.mrb[0].mxu0
          %v520 = vadd.f32 0.0, %v519
          %v521 = vpop.f32.mrb[0].mxu0
          %522 = vmatprep.mubr.f32.mxu0 0.0
          %523 = vmatmul.mubr.f32.gmra.mrb[0].mxu0 %v366
          %v524 = vpop.f32.mrb[0].mxu0
          %v525 = vadd.f32 0.0, %v524
          %v526 = vpop.f32.mrb[0].mxu0
          %527 = vmatprep.mubr.f32.mxu0 0.0
          %528 = vmatmul.mubr.f32.gmra.mrb[0].mxu0 %v367
          %v529 = vpop.f32.mrb[0].mxu0
          %v530 = vadd.f32 0.0, %v529
          %v531 = vpop.f32.mrb[0].mxu0
          %532 = vmatprep.mubr.f32.mxu0 0.0
          %533 = vmatmul.mubr.f32.gmra.mrb[0].mxu0 %v368
          %v534 = vpop.f32.mrb[0].mxu0
          %v535 = vadd.f32 0.0, %v534
          %v536 = vpop.f32.mrb[0].mxu0
          %537 = vmatprep.mubr.f32.mxu0 0.0
          %538 = vmatmul.mubr.f32.gmra.mrb[0].mxu0 %v369
          %v539 = vpop.f32.mrb[0].mxu0
          %v540 = vadd.f32 0.0, %v539
          %v541 = vpop.f32.mrb[0].mxu0
          %542 = vmatprep.mubr.f32.mxu0 0.0
          %543 = vmatmul.mubr.f32.gmra.mrb[0].mxu0 %v370
          %v544 = vpop.f32.mrb[0].mxu0
          %v545 = vadd.f32 0.0, %v544
          %v546 = vpop.f32.mrb[0].mxu0
          %547 = vmatprep.mubr.f32.mxu0 0.0
          %548 = vmatmul.mubr.f32.gmra.mrb[0].mxu0 %v371
          %v549 = vpop.f32.mrb[0].mxu0
          %v550 = vadd.f32 0.0, %v549
          %v551 = vpop.f32.mrb[0].mxu0
          %552 = vmatprep.mubr.f32.mxu0 0.0
          %553 = vmatmul.mubr.f32.gmra.mrb[0].mxu0 %v372
          %v554 = vpop.f32.mrb[0].mxu0
          %v555 = vadd.f32 0.0, %v554
          %v556 = vpop.f32.mrb[0].mxu0
          %557 = vmatprep.mubr.f32.mxu0 0.0
          %558 = vmatmul.mubr.f32.gmra.mrb[0].mxu0 %v373
          %v559 = vpop.f32.mrb[0].mxu0
          %v560 = vadd.f32 0.0, %v559
          %v561 = vpop.f32.mrb[0].mxu0
          %562 = vmatprep.mubr.f32.mxu0 0.0
          %563 = vmatmul.mubr.f32.gmra.mrb[0].mxu0 %v374
          %v564 = vpop.f32.mrb[0].mxu0
          %v565 = vadd.f32 0.0, %v564
          %v566 = vpop.f32.mrb[0].mxu0
          %567 = vmatprep.mubr.f32.mxu0 0.0
          %568 = vmatmul.mubr.f32.gmra.mrb[0].mxu0 %v375
          %v569 = vpop.f32.mrb[0].mxu0
          %v570 = vadd.f32 0.0, %v569
          %v571 = vpop.f32.mrb[0].mxu0
          %572 = vmatprep.mubr.f32.mxu0 0.0
          %573 = vmatmul.mubr.f32.gmra.mrb[0].mxu0 %v376
          %v574 = vpop.f32.mrb[0].mxu0
          %v575 = vadd.f32 0.0, %v574
          %v576 = vpop.f32.mrb[0].mxu0
          %577 = vmatprep.mubr.f32.mxu0 0.0
          %578 = vmatmul.mubr.f32.gmra.mrb[0].mxu0 %v377
          %v579 = vpop.f32.mrb[0].mxu0
          %v580 = vadd.f32 0.0, %v579
          %v581 = vpop.f32.mrb[0].mxu0
          %582 = vmatprep.mubr.f32.mxu0 0.0
          %583 = vmatmul.mubr.f32.gmra.mrb[0].mxu0 %v378
          %v584 = vpop.f32.mrb[0].mxu0
          %v585 = vadd.f32 0.0, %v584
          %v586 = vpop.f32.mrb[0].mxu0
          %587 = vmatprep.mubr.f32.mxu0 0.0
          %588 = vmatmul.mubr.f32.gmra.mrb[0].mxu0 %v379
          %v589 = vpop.f32.mrb[0].mxu0
          %v590 = vadd.f32 0.0, %v589
          %v591 = vpop.f32.mrb[0].mxu0
          %592 = vmatprep.mubr.f32.mxu0 0.0
          %593 = vmatmul.mubr.f32.gmra.mrb[0].mxu0 %v380
          %v594 = vpop.f32.mrb[0].mxu0
          %v595 = vadd.f32 0.0, %v594
          %v596 = vpop.f32.mrb[0].mxu0
          %597 = vmatprep.mubr.f32.mxu0 0.0
          %598 = vmatmul.mubr.f32.gmra.mrb[0].mxu0 %v381
          %v599 = vpop.f32.mrb[0].mxu0
          %v600 = vadd.f32 0.0, %v599
          %v601 = vpop.f32.mrb[0].mxu0
          %602 = vmatprep.mubr.f32.mxu0 0.0
          %603 = vmatmul.mubr.f32.gmra.mrb[0].mxu0 %v382
          %v604 = vpop.f32.mrb[0].mxu0
          %v605 = vadd.f32 0.0, %v604
          %v606 = vpop.f32.mrb[0].mxu0
          %607 = vmatprep.mubr.f32.mxu0 0.0
          %608 = vmatmul.mubr.f32.gmra.mrb[0].mxu0 %v383
          %v609 = vpop.f32.mrb[0].mxu0
          %v610 = vadd.f32 0.0, %v609
          %v611 = vpop.f32.mrb[0].mxu0
          %612 = vmatprep.mubr.f32.mxu0 0.0
          %613 = vmatmul.mubr.f32.gmra.mrb[0].mxu0 %v384
          %v614 = vpop.f32.mrb[0].mxu0
          %v615 = vadd.f32 0.0, %v614
          %v616 = vpop.f32.mrb[0].mxu0
          %617 = vmatprep.mubr.f32.mxu0 0.0
          %618 = vmatmul.mubr.f32.gmra.mrb[0].mxu0 %v385
          %v619 = vpop.f32.mrb[0].mxu0
          %v620 = vadd.f32 0.0, %v619
          %v621 = vpop.f32.mrb[0].mxu0
          %622 = vmatprep.mubr.f32.mxu0 0.0
          %623 = vmatmul.mubr.f32.gmra.mrb[0].mxu0 %v386
          %v624 = vpop.f32.mrb[0].mxu0
          %v625 = vadd.f32 0.0, %v624
          %v626 = vpop.f32.mrb[0].mxu0
          %627 = vdwg.mxu0
          %628 = vst [vmem:[#allocation3] sm:$0xff] %v470
          %629 = vst [vmem:[#allocation3 + $0x8] sm:$0xff] %v475
          %630 = vst [vmem:[#allocation3 + $0x10] sm:$0xff] %v480
          %631 = vst [vmem:[#allocation3 + $0x18] sm:$0xff] %v485
          %632 = vst [vmem:[#allocation3 + $0x20] sm:$0xff] %v490
          %633 = vst [vmem:[#allocation3 + $0x28] sm:$0xff] %v495
          %634 = vst [vmem:[#allocation3 + $0x30] sm:$0xff] %v500
          %635 = vst [vmem:[#allocation3 + $0x38] sm:$0xff] %v505
          %636 = vst [vmem:[#allocation3 + $0x40] sm:$0xff] %v510
          %637 = vst [vmem:[#allocation3 + $0x48] sm:$0xff] %v515
          %638 = vst [vmem:[#allocation3 + $0x50] sm:$0xff] %v520
          %639 = vst [vmem:[#allocation3 + $0x58] sm:$0xff] %v525
          %640 = vst [vmem:[#allocation3 + $0x60] sm:$0xff] %v530
          %641 = vst [vmem:[#allocation3 + $0x68] sm:$0xff] %v535
          %642 = vst [vmem:[#allocation3 + $0x70] sm:$0xff] %v540
          %643 = vst [vmem:[#allocation3 + $0x78] sm:$0xff] %v545
          %644 = vst [vmem:[#allocation3 + $0x80] sm:$0xff] %v550
          %645 = vst [vmem:[#allocation3 + $0x88] sm:$0xff] %v555
          %646 = vst [vmem:[#allocation3 + $0x90] sm:$0xff] %v560
          %647 = vst [vmem:[#allocation3 + $0x98] sm:$0xff] %v565
          %648 = vst [vmem:[#allocation3 + $0xa0] sm:$0xff] %v570
          %649 = vst [vmem:[#allocation3 + $0xa8] sm:$0xff] %v575
          %650 = vst [vmem:[#allocation3 + $0xb0] sm:$0xff] %v580
          %651 = vst [vmem:[#allocation3 + $0xb8] sm:$0xff] %v585
          %652 = vst [vmem:[#allocation3 + $0xc0] sm:$0xff] %v590
          %653 = vst [vmem:[#allocation3 + $0xc8] sm:$0xff] %v595
          %654 = vst [vmem:[#allocation3 + $0xd0] sm:$0xff] %v600
          %655 = vst [vmem:[#allocation3 + $0xd8] sm:$0xff] %v605
          %656 = vst [vmem:[#allocation3 + $0xe0] sm:$0xff] %v610
          %657 = vst [vmem:[#allocation3 + $0xe8] sm:$0xff] %v615
          %658 = vst [vmem:[#allocation3 + $0xf0] sm:$0xff] %v620
          %659 = vst [vmem:[#allocation3 + $0xf8] sm:$0xff] %v625
          %v660 = vld [vmem:[#allocation2 + $0x8] sm:$0xff]
          %v661 = vld [vmem:[#allocation2 + $0x10] sm:$0xff]
          %v662 = vld [vmem:[#allocation2 + $0x28] sm:$0xff]
          %v663 = vld [vmem:[#allocation2 + $0x30] sm:$0xff]
          %v664 = vld [vmem:[#allocation2 + $0x48] sm:$0xff]
          %v665 = vld [vmem:[#allocation2 + $0x50] sm:$0xff]
          %v666 = vld [vmem:[#allocation2 + $0x68] sm:$0xff]
          %v667 = vld [vmem:[#allocation2 + $0x70] sm:$0xff]
          %v668 = vld [vmem:[#allocation2 + $0x88] sm:$0xff]
          %v669 = vld [vmem:[#allocation2 + $0x90] sm:$0xff]
          %v670 = vld [vmem:[#allocation2 + $0xa8] sm:$0xff]
          %v671 = vld [vmem:[#allocation2 + $0xb0] sm:$0xff]
          %v672 = vld [vmem:[#allocation2 + $0xc8] sm:$0xff]
          %v673 = vld [vmem:[#allocation2 + $0xd0] sm:$0xff]
          %v674 = vld [vmem:[#allocation2 + $0xe8] sm:$0xff]
          %v675 = vld [vmem:[#allocation2 + $0xf0] sm:$0xff]
          %v676 = vld [vmem:[#allocation2 + $0x108] sm:$0xff]
          %v677 = vld [vmem:[#allocation2 + $0x110] sm:$0xff]
          %v678 = vld [vmem:[#allocation2 + $0x128] sm:$0xff]
          %v679 = vld [vmem:[#allocation2 + $0x130] sm:$0xff]
          %v680 = vld [vmem:[#allocation2 + $0x148] sm:$0xff]
          %v681 = vld [vmem:[#allocation2 + $0x150] sm:$0xff]
          %v682 = vld [vmem:[#allocation2 + $0x168] sm:$0xff]
          %v683 = vld [vmem:[#allocation2 + $0x170] sm:$0xff]
          %v684 = vld [vmem:[#allocation2 + $0x188] sm:$0xff]
          %v685 = vld [vmem:[#allocation2 + $0x190] sm:$0xff]
          %v686 = vld [vmem:[#allocation2 + $0x1a8] sm:$0xff]
          %v687 = vld [vmem:[#allocation2 + $0x1b0] sm:$0xff]
          %v688 = vld [vmem:[#allocation2 + $0x1c8] sm:$0xff]
          %v689 = vld [vmem:[#allocation2 + $0x1d0] sm:$0xff]
          %v690 = vld [vmem:[#allocation2 + $0x1e8] sm:$0xff]
          %v691 = vld [vmem:[#allocation2 + $0x1f0] sm:$0xff]
          %s692 = scalar_lea.vmem [#allocation9], 128
          %v693 = vld [vmem:[%s692] sm:$0xff]
          %v694 = vld [vmem:[%s692 + $0x8] sm:$0xff]
          %v695 = vld [vmem:[%s692 + $0x10] sm:$0xff]
          %v696 = vld [vmem:[%s692 + $0x18] sm:$0xff]
          %v697 = vld [vmem:[%s692 + $0x20] sm:$0xff]
          %v698 = vld [vmem:[%s692 + $0x28] sm:$0xff]
          %v699 = vld [vmem:[%s692 + $0x30] sm:$0xff]
          %v700 = vld [vmem:[%s692 + $0x38] sm:$0xff]
          %v701 = vld [vmem:[%s692 + $0x40] sm:$0xff]
          %v702 = vld [vmem:[%s692 + $0x48] sm:$0xff]
          %v703 = vld [vmem:[%s692 + $0x50] sm:$0xff]
          %v704 = vld [vmem:[%s692 + $0x58] sm:$0xff]
          %v705 = vld [vmem:[%s692 + $0x60] sm:$0xff]
          %v706 = vld [vmem:[%s692 + $0x68] sm:$0xff]
          %v707 = vld [vmem:[%s692 + $0x70] sm:$0xff]
          %v708 = vld [vmem:[%s692 + $0x78] sm:$0xff]
          %709 = vmatprep.subr.mxu0 0.0
          %710 = vmatpush1.msra.mxu0 %v693
          %711 = vmatprep.subr.mxu0 0.0
          %712 = vmatpush1.msra.mxu0 %v694
          %713 = vmatprep.subr.mxu0 0.0
          %714 = vmatpush1.msra.mxu0 %v695
          %715 = vmatprep.subr.mxu0 0.0
          %716 = vmatpush1.msra.mxu0 %v696
          %717 = vmatprep.subr.mxu0 0.0
          %718 = vmatpush1.msra.mxu0 %v697
          %719 = vmatprep.subr.mxu0 0.0
          %720 = vmatpush1.msra.mxu0 %v698
          %721 = vmatprep.subr.mxu0 0.0
          %722 = vmatpush1.msra.mxu0 %v699
          %723 = vmatprep.subr.mxu0 0.0
          %724 = vmatpush1.msra.mxu0 %v700
          %725 = vmatprep.subr.mxu0 0.0
          %726 = vmatpush1.msra.mxu0 %v701
          %727 = vmatprep.subr.mxu0 0.0
          %728 = vmatpush1.msra.mxu0 %v702
          %729 = vmatprep.subr.mxu0 0.0
          %730 = vmatpush1.msra.mxu0 %v703
          %731 = vmatprep.subr.mxu0 0.0
          %732 = vmatpush1.msra.mxu0 %v704
          %733 = vmatprep.subr.mxu0 0.0
          %734 = vmatpush1.msra.mxu0 %v705
          %735 = vmatprep.subr.mxu0 0.0
          %736 = vmatpush1.msra.mxu0 %v706
          %737 = vmatprep.subr.mxu0 0.0
          %738 = vmatpush1.msra.mxu0 %v707
          %739 = vmatprep.subr.mxu0 0.0
          %740 = vmatpush1.msra.mxu0 %v708
          %741 = vmatprep.subr.mxu0 0.0
          %742 = vmatpush1.msra.mxu0 0.0
          %743 = vmatprep.subr.mxu0 0.0
          %744 = vmatpush1.msra.mxu0 0.0
          %745 = vmatprep.subr.mxu0 0.0
          %746 = vmatpush1.msra.mxu0 0.0
          %747 = vmatprep.subr.mxu0 0.0
          %748 = vmatpush1.msra.mxu0 0.0
          %749 = vmatprep.subr.mxu0 0.0
          %750 = vmatpush1.msra.mxu0 0.0
          %751 = vmatprep.subr.mxu0 0.0
          %752 = vmatpush1.msra.mxu0 0.0
          %753 = vmatprep.subr.mxu0 0.0
          %754 = vmatpush1.msra.mxu0 0.0
          %755 = vmatprep.subr.mxu0 0.0
          %756 = vmatpush1.msra.mxu0 0.0
          %757 = vmatprep.subr.mxu0 0.0
          %758 = vmatpush1.msra.mxu0 0.0
          %759 = vmatprep.subr.mxu0 0.0
          %760 = vmatpush1.msra.mxu0 0.0
          %761 = vmatprep.subr.mxu0 0.0
          %762 = vmatpush1.msra.mxu0 0.0
          %763 = vmatprep.subr.mxu0 0.0
          %764 = vmatpush1.msra.mxu0 0.0
          %765 = vmatprep.subr.mxu0 0.0
          %766 = vmatpush1.msra.mxu0 0.0
          %767 = vmatprep.subr.mxu0 0.0
          %768 = vmatpush1.msra.mxu0 0.0
          %769 = vmatprep.subr.mxu0 0.0
          %770 = vmatpush1.msra.mxu0 0.0
          %771 = vmatprep.subr.mxu0 0.0
          %772 = vmatpush1.msra.mxu0 0.0
          %773 = vmatprep.mubr.f32.mxu0 0.0
          %774 = vmatmul.mubr.f32.gmra.mrb[0].mxu0 %v660
          %v775 = vpop.f32.mrb[0].mxu0
          %v776 = vadd.f32 0.0, %v775
          %v777 = vpop.f32.mrb[0].mxu0
          %778 = vmatprep.mubr.f32.mxu0 0.0
          %779 = vmatmul.mubr.f32.gmra.mrb[0].mxu0 %v661
          %v780 = vpop.f32.mrb[0].mxu0
          %v781 = vadd.f32 0.0, %v780
          %v782 = vpop.f32.mrb[0].mxu0
          %783 = vmatprep.mubr.f32.mxu0 0.0
          %784 = vmatmul.mubr.f32.gmra.mrb[0].mxu0 %v662
          %v785 = vpop.f32.mrb[0].mxu0
          %v786 = vadd.f32 0.0, %v785
          %v787 = vpop.f32.mrb[0].mxu0
          %788 = vmatprep.mubr.f32.mxu0 0.0
          %789 = vmatmul.mubr.f32.gmra.mrb[0].mxu0 %v663
          %v790 = vpop.f32.mrb[0].mxu0
          %v791 = vadd.f32 0.0, %v790
          %v792 = vpop.f32.mrb[0].mxu0
          %793 = vmatprep.mubr.f32.mxu0 0.0
          %794 = vmatmul.mubr.f32.gmra.mrb[0].mxu0 %v664
          %v795 = vpop.f32.mrb[0].mxu0
          %v796 = vadd.f32 0.0, %v795
          %v797 = vpop.f32.mrb[0].mxu0
          %798 = vmatprep.mubr.f32.mxu0 0.0
          %799 = vmatmul.mubr.f32.gmra.mrb[0].mxu0 %v665
          %v800 = vpop.f32.mrb[0].mxu0
          %v801 = vadd.f32 0.0, %v800
          %v802 = vpop.f32.mrb[0].mxu0
          %803 = vmatprep.mubr.f32.mxu0 0.0
          %804 = vmatmul.mubr.f32.gmra.mrb[0].mxu0 %v666
          %v805 = vpop.f32.mrb[0].mxu0
          %v806 = vadd.f32 0.0, %v805
          %v807 = vpop.f32.mrb[0].mxu0
          %808 = vmatprep.mubr.f32.mxu0 0.0
          %809 = vmatmul.mubr.f32.gmra.mrb[0].mxu0 %v667
          %v810 = vpop.f32.mrb[0].mxu0
          %v811 = vadd.f32 0.0, %v810
          %v812 = vpop.f32.mrb[0].mxu0
          %813 = vmatprep.mubr.f32.mxu0 0.0
          %814 = vmatmul.mubr.f32.gmra.mrb[0].mxu0 %v668
          %v815 = vpop.f32.mrb[0].mxu0
          %v816 = vadd.f32 0.0, %v815
          %v817 = vpop.f32.mrb[0].mxu0
          %818 = vmatprep.mubr.f32.mxu0 0.0
          %819 = vmatmul.mubr.f32.gmra.mrb[0].mxu0 %v669
          %v820 = vpop.f32.mrb[0].mxu0
          %v821 = vadd.f32 0.0, %v820
          %v822 = vpop.f32.mrb[0].mxu0
          %823 = vmatprep.mubr.f32.mxu0 0.0
          %824 = vmatmul.mubr.f32.gmra.mrb[0].mxu0 %v670
          %v825 = vpop.f32.mrb[0].mxu0
          %v826 = vadd.f32 0.0, %v825
          %v827 = vpop.f32.mrb[0].mxu0
          %828 = vmatprep.mubr.f32.mxu0 0.0
          %829 = vmatmul.mubr.f32.gmra.mrb[0].mxu0 %v671
          %v830 = vpop.f32.mrb[0].mxu0
          %v831 = vadd.f32 0.0, %v830
          %v832 = vpop.f32.mrb[0].mxu0
          %833 = vmatprep.mubr.f32.mxu0 0.0
          %834 = vmatmul.mubr.f32.gmra.mrb[0].mxu0 %v672
          %v835 = vpop.f32.mrb[0].mxu0
          %v836 = vadd.f32 0.0, %v835
          %v837 = vpop.f32.mrb[0].mxu0
          %838 = vmatprep.mubr.f32.mxu0 0.0
          %839 = vmatmul.mubr.f32.gmra.mrb[0].mxu0 %v673
          %v840 = vpop.f32.mrb[0].mxu0
          %v841 = vadd.f32 0.0, %v840
          %v842 = vpop.f32.mrb[0].mxu0
          %843 = vmatprep.mubr.f32.mxu0 0.0
          %844 = vmatmul.mubr.f32.gmra.mrb[0].mxu0 %v674
          %v845 = vpop.f32.mrb[0].mxu0
          %v846 = vadd.f32 0.0, %v845
          %v847 = vpop.f32.mrb[0].mxu0
          %848 = vmatprep.mubr.f32.mxu0 0.0
          %849 = vmatmul.mubr.f32.gmra.mrb[0].mxu0 %v675
          %v850 = vpop.f32.mrb[0].mxu0
          %v851 = vadd.f32 0.0, %v850
          %v852 = vpop.f32.mrb[0].mxu0
          %853 = vmatprep.mubr.f32.mxu0 0.0
          %854 = vmatmul.mubr.f32.gmra.mrb[0].mxu0 %v676
          %v855 = vpop.f32.mrb[0].mxu0
          %v856 = vadd.f32 0.0, %v855
          %v857 = vpop.f32.mrb[0].mxu0
          %858 = vmatprep.mubr.f32.mxu0 0.0
          %859 = vmatmul.mubr.f32.gmra.mrb[0].mxu0 %v677
          %v860 = vpop.f32.mrb[0].mxu0
          %v861 = vadd.f32 0.0, %v860
          %v862 = vpop.f32.mrb[0].mxu0
          %863 = vmatprep.mubr.f32.mxu0 0.0
          %864 = vmatmul.mubr.f32.gmra.mrb[0].mxu0 %v678
          %v865 = vpop.f32.mrb[0].mxu0
          %v866 = vadd.f32 0.0, %v865
          %v867 = vpop.f32.mrb[0].mxu0
          %868 = vmatprep.mubr.f32.mxu0 0.0
          %869 = vmatmul.mubr.f32.gmra.mrb[0].mxu0 %v679
          %v870 = vpop.f32.mrb[0].mxu0
          %v871 = vadd.f32 0.0, %v870
          %v872 = vpop.f32.mrb[0].mxu0
          %873 = vmatprep.mubr.f32.mxu0 0.0
          %874 = vmatmul.mubr.f32.gmra.mrb[0].mxu0 %v680
          %v875 = vpop.f32.mrb[0].mxu0
          %v876 = vadd.f32 0.0, %v875
          %v877 = vpop.f32.mrb[0].mxu0
          %878 = vmatprep.mubr.f32.mxu0 0.0
          %879 = vmatmul.mubr.f32.gmra.mrb[0].mxu0 %v681
          %v880 = vpop.f32.mrb[0].mxu0
          %v881 = vadd.f32 0.0, %v880
          %v882 = vpop.f32.mrb[0].mxu0
          %883 = vmatprep.mubr.f32.mxu0 0.0
          %884 = vmatmul.mubr.f32.gmra.mrb[0].mxu0 %v682
          %v885 = vpop.f32.mrb[0].mxu0
          %v886 = vadd.f32 0.0, %v885
          %v887 = vpop.f32.mrb[0].mxu0
          %888 = vmatprep.mubr.f32.mxu0 0.0
          %889 = vmatmul.mubr.f32.gmra.mrb[0].mxu0 %v683
          %v890 = vpop.f32.mrb[0].mxu0
          %v891 = vadd.f32 0.0, %v890
          %v892 = vpop.f32.mrb[0].mxu0
          %893 = vmatprep.mubr.f32.mxu0 0.0
          %894 = vmatmul.mubr.f32.gmra.mrb[0].mxu0 %v684
          %v895 = vpop.f32.mrb[0].mxu0
          %v896 = vadd.f32 0.0, %v895
          %v897 = vpop.f32.mrb[0].mxu0
          %898 = vmatprep.mubr.f32.mxu0 0.0
          %899 = vmatmul.mubr.f32.gmra.mrb[0].mxu0 %v685
          %v900 = vpop.f32.mrb[0].mxu0
          %v901 = vadd.f32 0.0, %v900
          %v902 = vpop.f32.mrb[0].mxu0
          %903 = vmatprep.mubr.f32.mxu0 0.0
          %904 = vmatmul.mubr.f32.gmra.mrb[0].mxu0 %v686
          %v905 = vpop.f32.mrb[0].mxu0
          %v906 = vadd.f32 0.0, %v905
          %v907 = vpop.f32.mrb[0].mxu0
          %908 = vmatprep.mubr.f32.mxu0 0.0
          %909 = vmatmul.mubr.f32.gmra.mrb[0].mxu0 %v687
          %v910 = vpop.f32.mrb[0].mxu0
          %v911 = vadd.f32 0.0, %v910
          %v912 = vpop.f32.mrb[0].mxu0
          %913 = vmatprep.mubr.f32.mxu0 0.0
          %914 = vmatmul.mubr.f32.gmra.mrb[0].mxu0 %v688
          %v915 = vpop.f32.mrb[0].mxu0
          %v916 = vadd.f32 0.0, %v915
          %v917 = vpop.f32.mrb[0].mxu0
          %918 = vmatprep.mubr.f32.mxu0 0.0
          %919 = vmatmul.mubr.f32.gmra.mrb[0].mxu0 %v689
          %v920 = vpop.f32.mrb[0].mxu0
          %v921 = vadd.f32 0.0, %v920
          %v922 = vpop.f32.mrb[0].mxu0
          %923 = vmatprep.mubr.f32.mxu0 0.0
          %924 = vmatmul.mubr.f32.gmra.mrb[0].mxu0 %v690
          %v925 = vpop.f32.mrb[0].mxu0
          %v926 = vadd.f32 0.0, %v925
          %v927 = vpop.f32.mrb[0].mxu0
          %928 = vmatprep.mubr.f32.mxu0 0.0
          %929 = vmatmul.mubr.f32.gmra.mrb[0].mxu0 %v691
          %v930 = vpop.f32.mrb[0].mxu0
          %v931 = vadd.f32 0.0, %v930
          %v932 = vpop.f32.mrb[0].mxu0
          %933 = vdwg.mxu0
          %v934 = vld [vmem:[#allocation3] sm:$0xff]
          %v935 = vld [vmem:[#allocation3 + $0x8] sm:$0xff]
          %v936 = vld [vmem:[#allocation3 + $0x10] sm:$0xff]
          %v937 = vld [vmem:[#allocation3 + $0x18] sm:$0xff]
          %v938 = vld [vmem:[#allocation3 + $0x20] sm:$0xff]
          %v939 = vld [vmem:[#allocation3 + $0x28] sm:$0xff]
          %v940 = vld [vmem:[#allocation3 + $0x30] sm:$0xff]
          %v941 = vld [vmem:[#allocation3 + $0x38] sm:$0xff]
          %v942 = vld [vmem:[#allocation3 + $0x40] sm:$0xff]
          %v943 = vld [vmem:[#allocation3 + $0x48] sm:$0xff]
          %v944 = vld [vmem:[#allocation3 + $0x50] sm:$0xff]
          %v945 = vld [vmem:[#allocation3 + $0x58] sm:$0xff]
          %v946 = vld [vmem:[#allocation3 + $0x60] sm:$0xff]
          %v947 = vld [vmem:[#allocation3 + $0x68] sm:$0xff]
          %v948 = vld [vmem:[#allocation3 + $0x70] sm:$0xff]
          %v949 = vld [vmem:[#allocation3 + $0x78] sm:$0xff]
          %v950 = vld [vmem:[#allocation3 + $0x80] sm:$0xff]
          %v951 = vld [vmem:[#allocation3 + $0x88] sm:$0xff]
          %v952 = vld [vmem:[#allocation3 + $0x90] sm:$0xff]
          %v953 = vld [vmem:[#allocation3 + $0x98] sm:$0xff]
          %v954 = vld [vmem:[#allocation3 + $0xa0] sm:$0xff]
          %v955 = vld [vmem:[#allocation3 + $0xa8] sm:$0xff]
          %v956 = vld [vmem:[#allocation3 + $0xb0] sm:$0xff]
          %v957 = vld [vmem:[#allocation3 + $0xb8] sm:$0xff]
          %v958 = vld [vmem:[#allocation3 + $0xc0] sm:$0xff]
          %v959 = vld [vmem:[#allocation3 + $0xc8] sm:$0xff]
          %v960 = vld [vmem:[#allocation3 + $0xd0] sm:$0xff]
          %v961 = vld [vmem:[#allocation3 + $0xd8] sm:$0xff]
          %v962 = vld [vmem:[#allocation3 + $0xe0] sm:$0xff]
          %v963 = vld [vmem:[#allocation3 + $0xe8] sm:$0xff]
          %v964 = vld [vmem:[#allocation3 + $0xf0] sm:$0xff]
          %v965 = vld [vmem:[#allocation3 + $0xf8] sm:$0xff]
          %v966 = vadd.f32 %v934, %v776
          %v967 = vadd.f32 %v935, %v781
          %v968 = vadd.f32 %v936, %v786
          %v969 = vadd.f32 %v937, %v791
          %v970 = vadd.f32 %v938, %v796
          %v971 = vadd.f32 %v939, %v801
          %v972 = vadd.f32 %v940, %v806
          %v973 = vadd.f32 %v941, %v811
          %v974 = vadd.f32 %v942, %v816
          %v975 = vadd.f32 %v943, %v821
          %v976 = vadd.f32 %v944, %v826
          %v977 = vadd.f32 %v945, %v831
          %v978 = vadd.f32 %v946, %v836
          %v979 = vadd.f32 %v947, %v841
          %v980 = vadd.f32 %v948, %v846
          %v981 = vadd.f32 %v949, %v851
          %v982 = vadd.f32 %v950, %v856
          %v983 = vadd.f32 %v951, %v861
          %v984 = vadd.f32 %v952, %v866
          %v985 = vadd.f32 %v953, %v871
          %v986 = vadd.f32 %v954, %v876
          %v987 = vadd.f32 %v955, %v881
          %v988 = vadd.f32 %v956, %v886
          %v989 = vadd.f32 %v957, %v891
          %v990 = vadd.f32 %v958, %v896
          %v991 = vadd.f32 %v959, %v901
          %v992 = vadd.f32 %v960, %v906
          %v993 = vadd.f32 %v961, %v911
          %v994 = vadd.f32 %v962, %v916
          %v995 = vadd.f32 %v963, %v921
          %v996 = vadd.f32 %v964, %v926
          %v997 = vadd.f32 %v965, %v931
          %998 = vst [vmem:[#allocation3] sm:$0xff] %v966
          %999 = vst [vmem:[#allocation3 + $0x8] sm:$0xff] %v967
          %1000 = vst [vmem:[#allocation3 + $0x10] sm:$0xff] %v968
          %1001 = vst [vmem:[#allocation3 + $0x18] sm:$0xff] %v969
          %1002 = vst [vmem:[#allocation3 + $0x20] sm:$0xff] %v970
          %1003 = vst [vmem:[#allocation3 + $0x28] sm:$0xff] %v971
          %1004 = vst [vmem:[#allocation3 + $0x30] sm:$0xff] %v972
          %1005 = vst [vmem:[#allocation3 + $0x38] sm:$0xff] %v973
          %1006 = vst [vmem:[#allocation3 + $0x40] sm:$0xff] %v974
          %1007 = vst [vmem:[#allocation3 + $0x48] sm:$0xff] %v975
          %1008 = vst [vmem:[#allocation3 + $0x50] sm:$0xff] %v976
          %1009 = vst [vmem:[#allocation3 + $0x58] sm:$0xff] %v977
          %1010 = vst [vmem:[#allocation3 + $0x60] sm:$0xff] %v978
          %1011 = vst [vmem:[#allocation3 + $0x68] sm:$0xff] %v979
          %1012 = vst [vmem:[#allocation3 + $0x70] sm:$0xff] %v980
          %1013 = vst [vmem:[#allocation3 + $0x78] sm:$0xff] %v981
          %1014 = vst [vmem:[#allocation3 + $0x80] sm:$0xff] %v982
          %1015 = vst [vmem:[#allocation3 + $0x88] sm:$0xff] %v983
          %1016 = vst [vmem:[#allocation3 + $0x90] sm:$0xff] %v984
          %1017 = vst [vmem:[#allocation3 + $0x98] sm:$0xff] %v985
          %1018 = vst [vmem:[#allocation3 + $0xa0] sm:$0xff] %v986
          %1019 = vst [vmem:[#allocation3 + $0xa8] sm:$0xff] %v987
          %1020 = vst [vmem:[#allocation3 + $0xb0] sm:$0xff] %v988
          %1021 = vst [vmem:[#allocation3 + $0xb8] sm:$0xff] %v989
          %1022 = vst [vmem:[#allocation3 + $0xc0] sm:$0xff] %v990
          %1023 = vst [vmem:[#allocation3 + $0xc8] sm:$0xff] %v991
          %1024 = vst [vmem:[#allocation3 + $0xd0] sm:$0xff] %v992
          %1025 = vst [vmem:[#allocation3 + $0xd8] sm:$0xff] %v993
          %1026 = vst [vmem:[#allocation3 + $0xe0] sm:$0xff] %v994
          %1027 = vst [vmem:[#allocation3 + $0xe8] sm:$0xff] %v995
          %1028 = vst [vmem:[#allocation3 + $0xf0] sm:$0xff] %v996
          %1029 = vst [vmem:[#allocation3 + $0xf8] sm:$0xff] %v997
          %v1030 = vld [vmem:[#allocation2 + $0x9] sm:$0xff]
          %v1031 = vld [vmem:[#allocation2 + $0x11] sm:$0xff]
          %v1032 = vld [vmem:[#allocation2 + $0x29] sm:$0xff]
          %v1033 = vld [vmem:[#allocation2 + $0x31] sm:$0xff]
          %v1034 = vld [vmem:[#allocation2 + $0x49] sm:$0xff]
          %v1035 = vld [vmem:[#allocation2 + $0x51] sm:$0xff]
          %v1036 = vld [vmem:[#allocation2 + $0x69] sm:$0xff]
          %v1037 = vld [vmem:[#allocation2 + $0x71] sm:$0xff]
          %v1038 = vld [vmem:[#allocation2 + $0x89] sm:$0xff]
          %v1039 = vld [vmem:[#allocation2 + $0x91] sm:$0xff]
          %v1040 = vld [vmem:[#allocation2 + $0xa9] sm:$0xff]
          %v1041 = vld [vmem:[#allocation2 + $0xb1] sm:$0xff]
          %v1042 = vld [vmem:[#allocation2 + $0xc9] sm:$0xff]
          %v1043 = vld [vmem:[#allocation2 + $0xd1] sm:$0xff]
          %v1044 = vld [vmem:[#allocation2 + $0xe9] sm:$0xff]
          %v1045 = vld [vmem:[#allocation2 + $0xf1] sm:$0xff]
          %v1046 = vld [vmem:[#allocation2 + $0x109] sm:$0xff]
          %v1047 = vld [vmem:[#allocation2 + $0x111] sm:$0xff]
          %v1048 = vld [vmem:[#allocation2 + $0x129] sm:$0xff]
          %v1049 = vld [vmem:[#allocation2 + $0x131] sm:$0xff]
          %v1050 = vld [vmem:[#allocation2 + $0x149] sm:$0xff]
          %v1051 = vld [vmem:[#allocation2 + $0x151] sm:$0xff]
          %v1052 = vld [vmem:[#allocation2 + $0x169] sm:$0xff]
          %v1053 = vld [vmem:[#allocation2 + $0x171] sm:$0xff]
          %v1054 = vld [vmem:[#allocation2 + $0x189] sm:$0xff]
          %v1055 = vld [vmem:[#allocation2 + $0x191] sm:$0xff]
          %v1056 = vld [vmem:[#allocation2 + $0x1a9] sm:$0xff]
          %v1057 = vld [vmem:[#allocation2 + $0x1b1] sm:$0xff]
          %v1058 = vld [vmem:[#allocation2 + $0x1c9] sm:$0xff]
          %v1059 = vld [vmem:[#allocation2 + $0x1d1] sm:$0xff]
          %v1060 = vld [vmem:[#allocation2 + $0x1e9] sm:$0xff]
          %v1061 = vld [vmem:[#allocation2 + $0x1f1] sm:$0xff]
          %s1062 = scalar_lea.vmem [#allocation9], 256
          %v1063 = vld [vmem:[%s1062] sm:$0xff]
          %v1064 = vld [vmem:[%s1062 + $0x8] sm:$0xff]
          %v1065 = vld [vmem:[%s1062 + $0x10] sm:$0xff]
          %v1066 = vld [vmem:[%s1062 + $0x18] sm:$0xff]
          %v1067 = vld [vmem:[%s1062 + $0x20] sm:$0xff]
          %v1068 = vld [vmem:[%s1062 + $0x28] sm:$0xff]
          %v1069 = vld [vmem:[%s1062 + $0x30] sm:$0xff]
          %v1070 = vld [vmem:[%s1062 + $0x38] sm:$0xff]
          %v1071 = vld [vmem:[%s1062 + $0x40] sm:$0xff]
          %v1072 = vld [vmem:[%s1062 + $0x48] sm:$0xff]
          %v1073 = vld [vmem:[%s1062 + $0x50] sm:$0xff]
          %v1074 = vld [vmem:[%s1062 + $0x58] sm:$0xff]
          %v1075 = vld [vmem:[%s1062 + $0x60] sm:$0xff]
          %v1076 = vld [vmem:[%s1062 + $0x68] sm:$0xff]
          %v1077 = vld [vmem:[%s1062 + $0x70] sm:$0xff]
          %v1078 = vld [vmem:[%s1062 + $0x78] sm:$0xff]
          %1079 = vmatprep.subr.mxu0 0.0
          %1080 = vmatpush1.msra.mxu0 %v1063
          %1081 = vmatprep.subr.mxu0 0.0
          %1082 = vmatpush1.msra.mxu0 %v1064
          %1083 = vmatprep.subr.mxu0 0.0
          %1084 = vmatpush1.msra.mxu0 %v1065
          %1085 = vmatprep.subr.mxu0 0.0
          %1086 = vmatpush1.msra.mxu0 %v1066
          %1087 = vmatprep.subr.mxu0 0.0
          %1088 = vmatpush1.msra.mxu0 %v1067
          %1089 = vmatprep.subr.mxu0 0.0
          %1090 = vmatpush1.msra.mxu0 %v1068
          %1091 = vmatprep.subr.mxu0 0.0
          %1092 = vmatpush1.msra.mxu0 %v1069
          %1093 = vmatprep.subr.mxu0 0.0
          %1094 = vmatpush1.msra.mxu0 %v1070
          %1095 = vmatprep.subr.mxu0 0.0
          %1096 = vmatpush1.msra.mxu0 %v1071
          %1097 = vmatprep.subr.mxu0 0.0
          %1098 = vmatpush1.msra.mxu0 %v1072
          %1099 = vmatprep.subr.mxu0 0.0
          %1100 = vmatpush1.msra.mxu0 %v1073
          %1101 = vmatprep.subr.mxu0 0.0
          %1102 = vmatpush1.msra.mxu0 %v1074
          %1103 = vmatprep.subr.mxu0 0.0
          %1104 = vmatpush1.msra.mxu0 %v1075
          %1105 = vmatprep.subr.mxu0 0.0
          %1106 = vmatpush1.msra.mxu0 %v1076
          %1107 = vmatprep.subr.mxu0 0.0
          %1108 = vmatpush1.msra.mxu0 %v1077
          %1109 = vmatprep.subr.mxu0 0.0
          %1110 = vmatpush1.msra.mxu0 %v1078
          %1111 = vmatprep.subr.mxu0 0.0
          %1112 = vmatpush1.msra.mxu0 0.0
          %1113 = vmatprep.subr.mxu0 0.0
          %1114 = vmatpush1.msra.mxu0 0.0
          %1115 = vmatprep.subr.mxu0 0.0
          %1116 = vmatpush1.msra.mxu0 0.0
          %1117 = vmatprep.subr.mxu0 0.0
          %1118 = vmatpush1.msra.mxu0 0.0
          %1119 = vmatprep.subr.mxu0 0.0
          %1120 = vmatpush1.msra.mxu0 0.0
          %1121 = vmatprep.subr.mxu0 0.0
          %1122 = vmatpush1.msra.mxu0 0.0
          %1123 = vmatprep.subr.mxu0 0.0
          %1124 = vmatpush1.msra.mxu0 0.0
          %1125 = vmatprep.subr.mxu0 0.0
          %1126 = vmatpush1.msra.mxu0 0.0
          %1127 = vmatprep.subr.mxu0 0.0
          %1128 = vmatpush1.msra.mxu0 0.0
          %1129 = vmatprep.subr.mxu0 0.0
          %1130 = vmatpush1.msra.mxu0 0.0
          %1131 = vmatprep.subr.mxu0 0.0
          %1132 = vmatpush1.msra.mxu0 0.0
          %1133 = vmatprep.subr.mxu0 0.0
          %1134 = vmatpush1.msra.mxu0 0.0
          %1135 = vmatprep.subr.mxu0 0.0
          %1136 = vmatpush1.msra.mxu0 0.0
          %1137 = vmatprep.subr.mxu0 0.0
          %1138 = vmatpush1.msra.mxu0 0.0
          %1139 = vmatprep.subr.mxu0 0.0
          %1140 = vmatpush1.msra.mxu0 0.0
          %1141 = vmatprep.subr.mxu0 0.0
          %1142 = vmatpush1.msra.mxu0 0.0
          %1143 = vmatprep.mubr.f32.mxu0 0.0
          %1144 = vmatmul.mubr.f32.gmra.mrb[0].mxu0 %v1030
          %v1145 = vpop.f32.mrb[0].mxu0
          %v1146 = vadd.f32 0.0, %v1145
          %v1147 = vpop.f32.mrb[0].mxu0
          %1148 = vmatprep.mubr.f32.mxu0 0.0
          %1149 = vmatmul.mubr.f32.gmra.mrb[0].mxu0 %v1031
          %v1150 = vpop.f32.mrb[0].mxu0
          %v1151 = vadd.f32 0.0, %v1150
          %v1152 = vpop.f32.mrb[0].mxu0
          %1153 = vmatprep.mubr.f32.mxu0 0.0
          %1154 = vmatmul.mubr.f32.gmra.mrb[0].mxu0 %v1032
          %v1155 = vpop.f32.mrb[0].mxu0
          %v1156 = vadd.f32 0.0, %v1155
          %v1157 = vpop.f32.mrb[0].mxu0
          %1158 = vmatprep.mubr.f32.mxu0 0.0
          %1159 = vmatmul.mubr.f32.gmra.mrb[0].mxu0 %v1033
          %v1160 = vpop.f32.mrb[0].mxu0
          %v1161 = vadd.f32 0.0, %v1160
          %v1162 = vpop.f32.mrb[0].mxu0
          %1163 = vmatprep.mubr.f32.mxu0 0.0
          %1164 = vmatmul.mubr.f32.gmra.mrb[0].mxu0 %v1034
          %v1165 = vpop.f32.mrb[0].mxu0
          %v1166 = vadd.f32 0.0, %v1165
          %v1167 = vpop.f32.mrb[0].mxu0
          %1168 = vmatprep.mubr.f32.mxu0 0.0
          %1169 = vmatmul.mubr.f32.gmra.mrb[0].mxu0 %v1035
          %v1170 = vpop.f32.mrb[0].mxu0
          %v1171 = vadd.f32 0.0, %v1170
          %v1172 = vpop.f32.mrb[0].mxu0
          %1173 = vmatprep.mubr.f32.mxu0 0.0
          %1174 = vmatmul.mubr.f32.gmra.mrb[0].mxu0 %v1036
          %v1175 = vpop.f32.mrb[0].mxu0
          %v1176 = vadd.f32 0.0, %v1175
          %v1177 = vpop.f32.mrb[0].mxu0
          %1178 = vmatprep.mubr.f32.mxu0 0.0
          %1179 = vmatmul.mubr.f32.gmra.mrb[0].mxu0 %v1037
          %v1180 = vpop.f32.mrb[0].mxu0
          %v1181 = vadd.f32 0.0, %v1180
          %v1182 = vpop.f32.mrb[0].mxu0
          %1183 = vmatprep.mubr.f32.mxu0 0.0
          %1184 = vmatmul.mubr.f32.gmra.mrb[0].mxu0 %v1038
          %v1185 = vpop.f32.mrb[0].mxu0
          %v1186 = vadd.f32 0.0, %v1185
          %v1187 = vpop.f32.mrb[0].mxu0
          %1188 = vmatprep.mubr.f32.mxu0 0.0
          %1189 = vmatmul.mubr.f32.gmra.mrb[0].mxu0 %v1039
          %v1190 = vpop.f32.mrb[0].mxu0
          %v1191 = vadd.f32 0.0, %v1190
          %v1192 = vpop.f32.mrb[0].mxu0
          %1193 = vmatprep.mubr.f32.mxu0 0.0
          %1194 = vmatmul.mubr.f32.gmra.mrb[0].mxu0 %v1040
          %v1195 = vpop.f32.mrb[0].mxu0
          %v1196 = vadd.f32 0.0, %v1195
          %v1197 = vpop.f32.mrb[0].mxu0
          %1198 = vmatprep.mubr.f32.mxu0 0.0
          %1199 = vmatmul.mubr.f32.gmra.mrb[0].mxu0 %v1041
          %v1200 = vpop.f32.mrb[0].mxu0
          %v1201 = vadd.f32 0.0, %v1200
          %v1202 = vpop.f32.mrb[0].mxu0
          %1203 = vmatprep.mubr.f32.mxu0 0.0
          %1204 = vmatmul.mubr.f32.gmra.mrb[0].mxu0 %v1042
          %v1205 = vpop.f32.mrb[0].mxu0
          %v1206 = vadd.f32 0.0, %v1205
          %v1207 = vpop.f32.mrb[0].mxu0
          %1208 = vmatprep.mubr.f32.mxu0 0.0
          %1209 = vmatmul.mubr.f32.gmra.mrb[0].mxu0 %v1043
          %v1210 = vpop.f32.mrb[0].mxu0
          %v1211 = vadd.f32 0.0, %v1210
          %v1212 = vpop.f32.mrb[0].mxu0
          %1213 = vmatprep.mubr.f32.mxu0 0.0
          %1214 = vmatmul.mubr.f32.gmra.mrb[0].mxu0 %v1044
          %v1215 = vpop.f32.mrb[0].mxu0
          %v1216 = vadd.f32 0.0, %v1215
          %v1217 = vpop.f32.mrb[0].mxu0
          %1218 = vmatprep.mubr.f32.mxu0 0.0
          %1219 = vmatmul.mubr.f32.gmra.mrb[0].mxu0 %v1045
          %v1220 = vpop.f32.mrb[0].mxu0
          %v1221 = vadd.f32 0.0, %v1220
          %v1222 = vpop.f32.mrb[0].mxu0
          %1223 = vmatprep.mubr.f32.mxu0 0.0
          %1224 = vmatmul.mubr.f32.gmra.mrb[0].mxu0 %v1046
          %v1225 = vpop.f32.mrb[0].mxu0
          %v1226 = vadd.f32 0.0, %v1225
          %v1227 = vpop.f32.mrb[0].mxu0
          %1228 = vmatprep.mubr.f32.mxu0 0.0
          %1229 = vmatmul.mubr.f32.gmra.mrb[0].mxu0 %v1047
          %v1230 = vpop.f32.mrb[0].mxu0
          %v1231 = vadd.f32 0.0, %v1230
          %v1232 = vpop.f32.mrb[0].mxu0
          %1233 = vmatprep.mubr.f32.mxu0 0.0
          %1234 = vmatmul.mubr.f32.gmra.mrb[0].mxu0 %v1048
          %v1235 = vpop.f32.mrb[0].mxu0
          %v1236 = vadd.f32 0.0, %v1235
          %v1237 = vpop.f32.mrb[0].mxu0
          %1238 = vmatprep.mubr.f32.mxu0 0.0
          %1239 = vmatmul.mubr.f32.gmra.mrb[0].mxu0 %v1049
          %v1240 = vpop.f32.mrb[0].mxu0
          %v1241 = vadd.f32 0.0, %v1240
          %v1242 = vpop.f32.mrb[0].mxu0
          %1243 = vmatprep.mubr.f32.mxu0 0.0
          %1244 = vmatmul.mubr.f32.gmra.mrb[0].mxu0 %v1050
          %v1245 = vpop.f32.mrb[0].mxu0
          %v1246 = vadd.f32 0.0, %v1245
          %v1247 = vpop.f32.mrb[0].mxu0
          %1248 = vmatprep.mubr.f32.mxu0 0.0
          %1249 = vmatmul.mubr.f32.gmra.mrb[0].mxu0 %v1051
          %v1250 = vpop.f32.mrb[0].mxu0
          %v1251 = vadd.f32 0.0, %v1250
          %v1252 = vpop.f32.mrb[0].mxu0
          %1253 = vmatprep.mubr.f32.mxu0 0.0
          %1254 = vmatmul.mubr.f32.gmra.mrb[0].mxu0 %v1052
          %v1255 = vpop.f32.mrb[0].mxu0
          %v1256 = vadd.f32 0.0, %v1255
          %v1257 = vpop.f32.mrb[0].mxu0
          %1258 = vmatprep.mubr.f32.mxu0 0.0
          %1259 = vmatmul.mubr.f32.gmra.mrb[0].mxu0 %v1053
          %v1260 = vpop.f32.mrb[0].mxu0
          %v1261 = vadd.f32 0.0, %v1260
          %v1262 = vpop.f32.mrb[0].mxu0
          %1263 = vmatprep.mubr.f32.mxu0 0.0
          %1264 = vmatmul.mubr.f32.gmra.mrb[0].mxu0 %v1054
          %v1265 = vpop.f32.mrb[0].mxu0
          %v1266 = vadd.f32 0.0, %v1265
          %v1267 = vpop.f32.mrb[0].mxu0
          %1268 = vmatprep.mubr.f32.mxu0 0.0
          %1269 = vmatmul.mubr.f32.gmra.mrb[0].mxu0 %v1055
          %v1270 = vpop.f32.mrb[0].mxu0
          %v1271 = vadd.f32 0.0, %v1270
          %v1272 = vpop.f32.mrb[0].mxu0
          %1273 = vmatprep.mubr.f32.mxu0 0.0
          %1274 = vmatmul.mubr.f32.gmra.mrb[0].mxu0 %v1056
          %v1275 = vpop.f32.mrb[0].mxu0
          %v1276 = vadd.f32 0.0, %v1275
          %v1277 = vpop.f32.mrb[0].mxu0
          %1278 = vmatprep.mubr.f32.mxu0 0.0
          %1279 = vmatmul.mubr.f32.gmra.mrb[0].mxu0 %v1057
          %v1280 = vpop.f32.mrb[0].mxu0
          %v1281 = vadd.f32 0.0, %v1280
          %v1282 = vpop.f32.mrb[0].mxu0
          %1283 = vmatprep.mubr.f32.mxu0 0.0
          %1284 = vmatmul.mubr.f32.gmra.mrb[0].mxu0 %v1058
          %v1285 = vpop.f32.mrb[0].mxu0
          %v1286 = vadd.f32 0.0, %v1285
          %v1287 = vpop.f32.mrb[0].mxu0
          %1288 = vmatprep.mubr.f32.mxu0 0.0
          %1289 = vmatmul.mubr.f32.gmra.mrb[0].mxu0 %v1059
          %v1290 = vpop.f32.mrb[0].mxu0
          %v1291 = vadd.f32 0.0, %v1290
          %v1292 = vpop.f32.mrb[0].mxu0
          %1293 = vmatprep.mubr.f32.mxu0 0.0
          %1294 = vmatmul.mubr.f32.gmra.mrb[0].mxu0 %v1060
          %v1295 = vpop.f32.mrb[0].mxu0
          %v1296 = vadd.f32 0.0, %v1295
          %v1297 = vpop.f32.mrb[0].mxu0
          %1298 = vmatprep.mubr.f32.mxu0 0.0
          %1299 = vmatmul.mubr.f32.gmra.mrb[0].mxu0 %v1061
          %v1300 = vpop.f32.mrb[0].mxu0
          %v1301 = vadd.f32 0.0, %v1300
          %v1302 = vpop.f32.mrb[0].mxu0
          %1303 = vdwg.mxu0
          %v1304 = vld [vmem:[#allocation3] sm:$0xff]
          %v1305 = vld [vmem:[#allocation3 + $0x8] sm:$0xff]
          %v1306 = vld [vmem:[#allocation3 + $0x10] sm:$0xff]
          %v1307 = vld [vmem:[#allocation3 + $0x18] sm:$0xff]
          %v1308 = vld [vmem:[#allocation3 + $0x20] sm:$0xff]
          %v1309 = vld [vmem:[#allocation3 + $0x28] sm:$0xff]
          %v1310 = vld [vmem:[#allocation3 + $0x30] sm:$0xff]
          %v1311 = vld [vmem:[#allocation3 + $0x38] sm:$0xff]
          %v1312 = vld [vmem:[#allocation3 + $0x40] sm:$0xff]
          %v1313 = vld [vmem:[#allocation3 + $0x48] sm:$0xff]
          %v1314 = vld [vmem:[#allocation3 + $0x50] sm:$0xff]
          %v1315 = vld [vmem:[#allocation3 + $0x58] sm:$0xff]
          %v1316 = vld [vmem:[#allocation3 + $0x60] sm:$0xff]
          %v1317 = vld [vmem:[#allocation3 + $0x68] sm:$0xff]
          %v1318 = vld [vmem:[#allocation3 + $0x70] sm:$0xff]
          %v1319 = vld [vmem:[#allocation3 + $0x78] sm:$0xff]
          %v1320 = vld [vmem:[#allocation3 + $0x80] sm:$0xff]
          %v1321 = vld [vmem:[#allocation3 + $0x88] sm:$0xff]
          %v1322 = vld [vmem:[#allocation3 + $0x90] sm:$0xff]
          %v1323 = vld [vmem:[#allocation3 + $0x98] sm:$0xff]
          %v1324 = vld [vmem:[#allocation3 + $0xa0] sm:$0xff]
          %v1325 = vld [vmem:[#allocation3 + $0xa8] sm:$0xff]
          %v1326 = vld [vmem:[#allocation3 + $0xb0] sm:$0xff]
          %v1327 = vld [vmem:[#allocation3 + $0xb8] sm:$0xff]
          %v1328 = vld [vmem:[#allocation3 + $0xc0] sm:$0xff]
          %v1329 = vld [vmem:[#allocation3 + $0xc8] sm:$0xff]
          %v1330 = vld [vmem:[#allocation3 + $0xd0] sm:$0xff]
          %v1331 = vld [vmem:[#allocation3 + $0xd8] sm:$0xff]
          %v1332 = vld [vmem:[#allocation3 + $0xe0] sm:$0xff]
          %v1333 = vld [vmem:[#allocation3 + $0xe8] sm:$0xff]
          %v1334 = vld [vmem:[#allocation3 + $0xf0] sm:$0xff]
          %v1335 = vld [vmem:[#allocation3 + $0xf8] sm:$0xff]
          %v1336 = vadd.f32 %v1304, %v1146
          %v1337 = vadd.f32 %v1305, %v1151
          %v1338 = vadd.f32 %v1306, %v1156
          %v1339 = vadd.f32 %v1307, %v1161
          %v1340 = vadd.f32 %v1308, %v1166
          %v1341 = vadd.f32 %v1309, %v1171
          %v1342 = vadd.f32 %v1310, %v1176
          %v1343 = vadd.f32 %v1311, %v1181
          %v1344 = vadd.f32 %v1312, %v1186
          %v1345 = vadd.f32 %v1313, %v1191
          %v1346 = vadd.f32 %v1314, %v1196
          %v1347 = vadd.f32 %v1315, %v1201
          %v1348 = vadd.f32 %v1316, %v1206
          %v1349 = vadd.f32 %v1317, %v1211
          %v1350 = vadd.f32 %v1318, %v1216
          %v1351 = vadd.f32 %v1319, %v1221
          %v1352 = vadd.f32 %v1320, %v1226
          %v1353 = vadd.f32 %v1321, %v1231
          %v1354 = vadd.f32 %v1322, %v1236
          %v1355 = vadd.f32 %v1323, %v1241
          %v1356 = vadd.f32 %v1324, %v1246
          %v1357 = vadd.f32 %v1325, %v1251
          %v1358 = vadd.f32 %v1326, %v1256
          %v1359 = vadd.f32 %v1327, %v1261
          %v1360 = vadd.f32 %v1328, %v1266
          %v1361 = vadd.f32 %v1329, %v1271
          %v1362 = vadd.f32 %v1330, %v1276
          %v1363 = vadd.f32 %v1331, %v1281
          %v1364 = vadd.f32 %v1332, %v1286
          %v1365 = vadd.f32 %v1333, %v1291
          %v1366 = vadd.f32 %v1334, %v1296
          %v1367 = vadd.f32 %v1335, %v1301
          %1368 = vst [vmem:[#allocation3] sm:$0xff] %v1336
          %1369 = vst [vmem:[#allocation3 + $0x8] sm:$0xff] %v1337
          %1370 = vst [vmem:[#allocation3 + $0x10] sm:$0xff] %v1338
          %1371 = vst [vmem:[#allocation3 + $0x18] sm:$0xff] %v1339
          %1372 = vst [vmem:[#allocation3 + $0x20] sm:$0xff] %v1340
          %1373 = vst [vmem:[#allocation3 + $0x28] sm:$0xff] %v1341
          %1374 = vst [vmem:[#allocation3 + $0x30] sm:$0xff] %v1342
          %1375 = vst [vmem:[#allocation3 + $0x38] sm:$0xff] %v1343
          %1376 = vst [vmem:[#allocation3 + $0x40] sm:$0xff] %v1344
          %1377 = vst [vmem:[#allocation3 + $0x48] sm:$0xff] %v1345
          %1378 = vst [vmem:[#allocation3 + $0x50] sm:$0xff] %v1346
          %1379 = vst [vmem:[#allocation3 + $0x58] sm:$0xff] %v1347
          %1380 = vst [vmem:[#allocation3 + $0x60] sm:$0xff] %v1348
          %1381 = vst [vmem:[#allocation3 + $0x68] sm:$0xff] %v1349
          %1382 = vst [vmem:[#allocation3 + $0x70] sm:$0xff] %v1350
          %1383 = vst [vmem:[#allocation3 + $0x78] sm:$0xff] %v1351
          %1384 = vst [vmem:[#allocation3 + $0x80] sm:$0xff] %v1352
          %1385 = vst [vmem:[#allocation3 + $0x88] sm:$0xff] %v1353
          %1386 = vst [vmem:[#allocation3 + $0x90] sm:$0xff] %v1354
          %1387 = vst [vmem:[#allocation3 + $0x98] sm:$0xff] %v1355
          %1388 = vst [vmem:[#allocation3 + $0xa0] sm:$0xff] %v1356
          %1389 = vst [vmem:[#allocation3 + $0xa8] sm:$0xff] %v1357
          %1390 = vst [vmem:[#allocation3 + $0xb0] sm:$0xff] %v1358
          %1391 = vst [vmem:[#allocation3 + $0xb8] sm:$0xff] %v1359
          %1392 = vst [vmem:[#allocation3 + $0xc0] sm:$0xff] %v1360
          %1393 = vst [vmem:[#allocation3 + $0xc8] sm:$0xff] %v1361
          %1394 = vst [vmem:[#allocation3 + $0xd0] sm:$0xff] %v1362
          %1395 = vst [vmem:[#allocation3 + $0xd8] sm:$0xff] %v1363
          %1396 = vst [vmem:[#allocation3 + $0xe0] sm:$0xff] %v1364
          %1397 = vst [vmem:[#allocation3 + $0xe8] sm:$0xff] %v1365
          %1398 = vst [vmem:[#allocation3 + $0xf0] sm:$0xff] %v1366
          %1399 = vst [vmem:[#allocation3 + $0xf8] sm:$0xff] %v1367
          %v1400 = vld [vmem:[%s252 + $0x7] sm:$0xff]
          %v1401 = vld [vmem:[%s252 + $0xf] sm:$0xff]
          %v1402 = vld [vmem:[%s252 + $0x27] sm:$0xff]
          %v1403 = vld [vmem:[%s252 + $0x2f] sm:$0xff]
          %v1404 = vld [vmem:[%s252 + $0x47] sm:$0xff]
          %v1405 = vld [vmem:[%s252 + $0x4f] sm:$0xff]
          %v1406 = vld [vmem:[%s252 + $0x67] sm:$0xff]
          %v1407 = vld [vmem:[%s252 + $0x6f] sm:$0xff]
          %v1408 = vld [vmem:[%s252 + $0x87] sm:$0xff]
          %v1409 = vld [vmem:[%s252 + $0x8f] sm:$0xff]
          %v1410 = vld [vmem:[%s252 + $0xa7] sm:$0xff]
          %v1411 = vld [vmem:[%s252 + $0xaf] sm:$0xff]
          %v1412 = vld [vmem:[%s252 + $0xc7] sm:$0xff]
          %v1413 = vld [vmem:[%s252 + $0xcf] sm:$0xff]
          %v1414 = vld [vmem:[%s252 + $0xe7] sm:$0xff]
          %v1415 = vld [vmem:[%s252 + $0xef] sm:$0xff]
          %v1416 = vld [vmem:[%s252 + $0x107] sm:$0xff]
          %v1417 = vld [vmem:[%s252 + $0x10f] sm:$0xff]
          %v1418 = vld [vmem:[%s252 + $0x127] sm:$0xff]
          %v1419 = vld [vmem:[%s252 + $0x12f] sm:$0xff]
          %v1420 = vld [vmem:[%s252 + $0x147] sm:$0xff]
          %v1421 = vld [vmem:[%s252 + $0x14f] sm:$0xff]
          %v1422 = vld [vmem:[%s252 + $0x167] sm:$0xff]
          %v1423 = vld [vmem:[%s252 + $0x16f] sm:$0xff]
          %v1424 = vld [vmem:[%s252 + $0x187] sm:$0xff]
          %v1425 = vld [vmem:[%s252 + $0x18f] sm:$0xff]
          %v1426 = vld [vmem:[%s252 + $0x1a7] sm:$0xff]
          %v1427 = vld [vmem:[%s252 + $0x1af] sm:$0xff]
          %v1428 = vld [vmem:[%s252 + $0x1c7] sm:$0xff]
          %v1429 = vld [vmem:[%s252 + $0x1cf] sm:$0xff]
          %v1430 = vld [vmem:[%s252 + $0x1e7] sm:$0xff]
          %v1431 = vld [vmem:[%s252 + $0x1ef] sm:$0xff]
          %s1432 = scalar_lea.vmem [#allocation9], 384
          %v1433 = vld [vmem:[%s1432] sm:$0xff]
          %v1434 = vld [vmem:[%s1432 + $0x8] sm:$0xff]
          %v1435 = vld [vmem:[%s1432 + $0x10] sm:$0xff]
          %v1436 = vld [vmem:[%s1432 + $0x18] sm:$0xff]
          %v1437 = vld [vmem:[%s1432 + $0x20] sm:$0xff]
          %v1438 = vld [vmem:[%s1432 + $0x28] sm:$0xff]
          %v1439 = vld [vmem:[%s1432 + $0x30] sm:$0xff]
          %v1440 = vld [vmem:[%s1432 + $0x38] sm:$0xff]
          %v1441 = vld [vmem:[%s1432 + $0x40] sm:$0xff]
          %v1442 = vld [vmem:[%s1432 + $0x48] sm:$0xff]
          %v1443 = vld [vmem:[%s1432 + $0x50] sm:$0xff]
          %v1444 = vld [vmem:[%s1432 + $0x58] sm:$0xff]
          %v1445 = vld [vmem:[%s1432 + $0x60] sm:$0xff]
          %v1446 = vld [vmem:[%s1432 + $0x68] sm:$0xff]
          %v1447 = vld [vmem:[%s1432 + $0x70] sm:$0xff]
          %v1448 = vld [vmem:[%s1432 + $0x78] sm:$0xff]
          %1449 = vmatprep.subr.mxu0 0.0
          %1450 = vmatpush1.msra.mxu0 %v1433
          %1451 = vmatprep.subr.mxu0 0.0
          %1452 = vmatpush1.msra.mxu0 %v1434
          %1453 = vmatprep.subr.mxu0 0.0
          %1454 = vmatpush1.msra.mxu0 %v1435
          %1455 = vmatprep.subr.mxu0 0.0
          %1456 = vmatpush1.msra.mxu0 %v1436
          %1457 = vmatprep.subr.mxu0 0.0
          %1458 = vmatpush1.msra.mxu0 %v1437
          %1459 = vmatprep.subr.mxu0 0.0
          %1460 = vmatpush1.msra.mxu0 %v1438
          %1461 = vmatprep.subr.mxu0 0.0
          %1462 = vmatpush1.msra.mxu0 %v1439
          %1463 = vmatprep.subr.mxu0 0.0
          %1464 = vmatpush1.msra.mxu0 %v1440
          %1465 = vmatprep.subr.mxu0 0.0
          %1466 = vmatpush1.msra.mxu0 %v1441
          %1467 = vmatprep.subr.mxu0 0.0
          %1468 = vmatpush1.msra.mxu0 %v1442
          %1469 = vmatprep.subr.mxu0 0.0
          %1470 = vmatpush1.msra.mxu0 %v1443
          %1471 = vmatprep.subr.mxu0 0.0
          %1472 = vmatpush1.msra.mxu0 %v1444
          %1473 = vmatprep.subr.mxu0 0.0
          %1474 = vmatpush1.msra.mxu0 %v1445
          %1475 = vmatprep.subr.mxu0 0.0
          %1476 = vmatpush1.msra.mxu0 %v1446
          %1477 = vmatprep.subr.mxu0 0.0
          %1478 = vmatpush1.msra.mxu0 %v1447
          %1479 = vmatprep.subr.mxu0 0.0
          %1480 = vmatpush1.msra.mxu0 %v1448
          %1481 = vmatprep.subr.mxu0 0.0
          %1482 = vmatpush1.msra.mxu0 0.0
          %1483 = vmatprep.subr.mxu0 0.0
          %1484 = vmatpush1.msra.mxu0 0.0
          %1485 = vmatprep.subr.mxu0 0.0
          %1486 = vmatpush1.msra.mxu0 0.0
          %1487 = vmatprep.subr.mxu0 0.0
          %1488 = vmatpush1.msra.mxu0 0.0
          %1489 = vmatprep.subr.mxu0 0.0
          %1490 = vmatpush1.msra.mxu0 0.0
          %1491 = vmatprep.subr.mxu0 0.0
          %1492 = vmatpush1.msra.mxu0 0.0
          %1493 = vmatprep.subr.mxu0 0.0
          %1494 = vmatpush1.msra.mxu0 0.0
          %1495 = vmatprep.subr.mxu0 0.0
          %1496 = vmatpush1.msra.mxu0 0.0
          %1497 = vmatprep.subr.mxu0 0.0
          %1498 = vmatpush1.msra.mxu0 0.0
          %1499 = vmatprep.subr.mxu0 0.0
          %1500 = vmatpush1.msra.mxu0 0.0
          %1501 = vmatprep.subr.mxu0 0.0
          %1502 = vmatpush1.msra.mxu0 0.0
          %1503 = vmatprep.subr.mxu0 0.0
          %1504 = vmatpush1.msra.mxu0 0.0
          %1505 = vmatprep.subr.mxu0 0.0
          %1506 = vmatpush1.msra.mxu0 0.0
          %1507 = vmatprep.subr.mxu0 0.0
          %1508 = vmatpush1.msra.mxu0 0.0
          %1509 = vmatprep.subr.mxu0 0.0
          %1510 = vmatpush1.msra.mxu0 0.0
          %1511 = vmatprep.subr.mxu0 0.0
          %1512 = vmatpush1.msra.mxu0 0.0
          %1513 = vmatprep.mubr.f32.mxu0 0.0
          %1514 = vmatmul.mubr.f32.gmra.mrb[0].mxu0 %v1400
          %v1515 = vpop.f32.mrb[0].mxu0
          %v1516 = vadd.f32 0.0, %v1515
          %v1517 = vpop.f32.mrb[0].mxu0
          %1518 = vmatprep.mubr.f32.mxu0 0.0
          %1519 = vmatmul.mubr.f32.gmra.mrb[0].mxu0 %v1401
          %v1520 = vpop.f32.mrb[0].mxu0
          %v1521 = vadd.f32 0.0, %v1520
          %v1522 = vpop.f32.mrb[0].mxu0
          %1523 = vmatprep.mubr.f32.mxu0 0.0
          %1524 = vmatmul.mubr.f32.gmra.mrb[0].mxu0 %v1402
          %v1525 = vpop.f32.mrb[0].mxu0
          %v1526 = vadd.f32 0.0, %v1525
          %v1527 = vpop.f32.mrb[0].mxu0
          %1528 = vmatprep.mubr.f32.mxu0 0.0
          %1529 = vmatmul.mubr.f32.gmra.mrb[0].mxu0 %v1403
          %v1530 = vpop.f32.mrb[0].mxu0
          %v1531 = vadd.f32 0.0, %v1530
          %v1532 = vpop.f32.mrb[0].mxu0
          %1533 = vmatprep.mubr.f32.mxu0 0.0
          %1534 = vmatmul.mubr.f32.gmra.mrb[0].mxu0 %v1404
          %v1535 = vpop.f32.mrb[0].mxu0
          %v1536 = vadd.f32 0.0, %v1535
          %v1537 = vpop.f32.mrb[0].mxu0
          %1538 = vmatprep.mubr.f32.mxu0 0.0
          %1539 = vmatmul.mubr.f32.gmra.mrb[0].mxu0 %v1405
          %v1540 = vpop.f32.mrb[0].mxu0
          %v1541 = vadd.f32 0.0, %v1540
          %v1542 = vpop.f32.mrb[0].mxu0
          %1543 = vmatprep.mubr.f32.mxu0 0.0
          %1544 = vmatmul.mubr.f32.gmra.mrb[0].mxu0 %v1406
          %v1545 = vpop.f32.mrb[0].mxu0
          %v1546 = vadd.f32 0.0, %v1545
          %v1547 = vpop.f32.mrb[0].mxu0
          %1548 = vmatprep.mubr.f32.mxu0 0.0
          %1549 = vmatmul.mubr.f32.gmra.mrb[0].mxu0 %v1407
          %v1550 = vpop.f32.mrb[0].mxu0
          %v1551 = vadd.f32 0.0, %v1550
          %v1552 = vpop.f32.mrb[0].mxu0
          %1553 = vmatprep.mubr.f32.mxu0 0.0
          %1554 = vmatmul.mubr.f32.gmra.mrb[0].mxu0 %v1408
          %v1555 = vpop.f32.mrb[0].mxu0
          %v1556 = vadd.f32 0.0, %v1555
          %v1557 = vpop.f32.mrb[0].mxu0
          %1558 = vmatprep.mubr.f32.mxu0 0.0
          %1559 = vmatmul.mubr.f32.gmra.mrb[0].mxu0 %v1409
          %v1560 = vpop.f32.mrb[0].mxu0
          %v1561 = vadd.f32 0.0, %v1560
          %v1562 = vpop.f32.mrb[0].mxu0
          %1563 = vmatprep.mubr.f32.mxu0 0.0
          %1564 = vmatmul.mubr.f32.gmra.mrb[0].mxu0 %v1410
          %v1565 = vpop.f32.mrb[0].mxu0
          %v1566 = vadd.f32 0.0, %v1565
          %v1567 = vpop.f32.mrb[0].mxu0
          %1568 = vmatprep.mubr.f32.mxu0 0.0
          %1569 = vmatmul.mubr.f32.gmra.mrb[0].mxu0 %v1411
          %v1570 = vpop.f32.mrb[0].mxu0
          %v1571 = vadd.f32 0.0, %v1570
          %v1572 = vpop.f32.mrb[0].mxu0
          %1573 = vmatprep.mubr.f32.mxu0 0.0
          %1574 = vmatmul.mubr.f32.gmra.mrb[0].mxu0 %v1412
          %v1575 = vpop.f32.mrb[0].mxu0
          %v1576 = vadd.f32 0.0, %v1575
          %v1577 = vpop.f32.mrb[0].mxu0
          %1578 = vmatprep.mubr.f32.mxu0 0.0
          %1579 = vmatmul.mubr.f32.gmra.mrb[0].mxu0 %v1413
          %v1580 = vpop.f32.mrb[0].mxu0
          %v1581 = vadd.f32 0.0, %v1580
          %v1582 = vpop.f32.mrb[0].mxu0
          %1583 = vmatprep.mubr.f32.mxu0 0.0
          %1584 = vmatmul.mubr.f32.gmra.mrb[0].mxu0 %v1414
          %v1585 = vpop.f32.mrb[0].mxu0
          %v1586 = vadd.f32 0.0, %v1585
          %v1587 = vpop.f32.mrb[0].mxu0
          %1588 = vmatprep.mubr.f32.mxu0 0.0
          %1589 = vmatmul.mubr.f32.gmra.mrb[0].mxu0 %v1415
          %v1590 = vpop.f32.mrb[0].mxu0
          %v1591 = vadd.f32 0.0, %v1590
          %v1592 = vpop.f32.mrb[0].mxu0
          %1593 = vmatprep.mubr.f32.mxu0 0.0
          %1594 = vmatmul.mubr.f32.gmra.mrb[0].mxu0 %v1416
          %v1595 = vpop.f32.mrb[0].mxu0
          %v1596 = vadd.f32 0.0, %v1595
          %v1597 = vpop.f32.mrb[0].mxu0
          %1598 = vmatprep.mubr.f32.mxu0 0.0
          %1599 = vmatmul.mubr.f32.gmra.mrb[0].mxu0 %v1417
          %v1600 = vpop.f32.mrb[0].mxu0
          %v1601 = vadd.f32 0.0, %v1600
          %v1602 = vpop.f32.mrb[0].mxu0
          %1603 = vmatprep.mubr.f32.mxu0 0.0
          %1604 = vmatmul.mubr.f32.gmra.mrb[0].mxu0 %v1418
          %v1605 = vpop.f32.mrb[0].mxu0
          %v1606 = vadd.f32 0.0, %v1605
          %v1607 = vpop.f32.mrb[0].mxu0
          %1608 = vmatprep.mubr.f32.mxu0 0.0
          %1609 = vmatmul.mubr.f32.gmra.mrb[0].mxu0 %v1419
          %v1610 = vpop.f32.mrb[0].mxu0
          %v1611 = vadd.f32 0.0, %v1610
          %v1612 = vpop.f32.mrb[0].mxu0
          %1613 = vmatprep.mubr.f32.mxu0 0.0
          %1614 = vmatmul.mubr.f32.gmra.mrb[0].mxu0 %v1420
          %v1615 = vpop.f32.mrb[0].mxu0
          %v1616 = vadd.f32 0.0, %v1615
          %v1617 = vpop.f32.mrb[0].mxu0
          %1618 = vmatprep.mubr.f32.mxu0 0.0
          %1619 = vmatmul.mubr.f32.gmra.mrb[0].mxu0 %v1421
          %v1620 = vpop.f32.mrb[0].mxu0
          %v1621 = vadd.f32 0.0, %v1620
          %v1622 = vpop.f32.mrb[0].mxu0
          %1623 = vmatprep.mubr.f32.mxu0 0.0
          %1624 = vmatmul.mubr.f32.gmra.mrb[0].mxu0 %v1422
          %v1625 = vpop.f32.mrb[0].mxu0
          %v1626 = vadd.f32 0.0, %v1625
          %v1627 = vpop.f32.mrb[0].mxu0
          %1628 = vmatprep.mubr.f32.mxu0 0.0
          %1629 = vmatmul.mubr.f32.gmra.mrb[0].mxu0 %v1423
          %v1630 = vpop.f32.mrb[0].mxu0
          %v1631 = vadd.f32 0.0, %v1630
          %v1632 = vpop.f32.mrb[0].mxu0
          %1633 = vmatprep.mubr.f32.mxu0 0.0
          %1634 = vmatmul.mubr.f32.gmra.mrb[0].mxu0 %v1424
          %v1635 = vpop.f32.mrb[0].mxu0
          %v1636 = vadd.f32 0.0, %v1635
          %v1637 = vpop.f32.mrb[0].mxu0
          %1638 = vmatprep.mubr.f32.mxu0 0.0
          %1639 = vmatmul.mubr.f32.gmra.mrb[0].mxu0 %v1425
          %v1640 = vpop.f32.mrb[0].mxu0
          %v1641 = vadd.f32 0.0, %v1640
          %v1642 = vpop.f32.mrb[0].mxu0
          %1643 = vmatprep.mubr.f32.mxu0 0.0
          %1644 = vmatmul.mubr.f32.gmra.mrb[0].mxu0 %v1426
          %v1645 = vpop.f32.mrb[0].mxu0
          %v1646 = vadd.f32 0.0, %v1645
          %v1647 = vpop.f32.mrb[0].mxu0
          %1648 = vmatprep.mubr.f32.mxu0 0.0
          %1649 = vmatmul.mubr.f32.gmra.mrb[0].mxu0 %v1427
          %v1650 = vpop.f32.mrb[0].mxu0
          %v1651 = vadd.f32 0.0, %v1650
          %v1652 = vpop.f32.mrb[0].mxu0
          %1653 = vmatprep.mubr.f32.mxu0 0.0
          %1654 = vmatmul.mubr.f32.gmra.mrb[0].mxu0 %v1428
          %v1655 = vpop.f32.mrb[0].mxu0
          %v1656 = vadd.f32 0.0, %v1655
          %v1657 = vpop.f32.mrb[0].mxu0
          %1658 = vmatprep.mubr.f32.mxu0 0.0
          %1659 = vmatmul.mubr.f32.gmra.mrb[0].mxu0 %v1429
          %v1660 = vpop.f32.mrb[0].mxu0
          %v1661 = vadd.f32 0.0, %v1660
          %v1662 = vpop.f32.mrb[0].mxu0
          %1663 = vmatprep.mubr.f32.mxu0 0.0
          %1664 = vmatmul.mubr.f32.gmra.mrb[0].mxu0 %v1430
          %v1665 = vpop.f32.mrb[0].mxu0
          %v1666 = vadd.f32 0.0, %v1665
          %v1667 = vpop.f32.mrb[0].mxu0
          %1668 = vmatprep.mubr.f32.mxu0 0.0
          %1669 = vmatmul.mubr.f32.gmra.mrb[0].mxu0 %v1431
          %v1670 = vpop.f32.mrb[0].mxu0
          %v1671 = vadd.f32 0.0, %v1670
          %v1672 = vpop.f32.mrb[0].mxu0
          %1673 = vdwg.mxu0
          %v1674 = vld [vmem:[#allocation3] sm:$0xff]
          %v1675 = vld [vmem:[#allocation3 + $0x8] sm:$0xff]
          %v1676 = vld [vmem:[#allocation3 + $0x10] sm:$0xff]
          %v1677 = vld [vmem:[#allocation3 + $0x18] sm:$0xff]
          %v1678 = vld [vmem:[#allocation3 + $0x20] sm:$0xff]
          %v1679 = vld [vmem:[#allocation3 + $0x28] sm:$0xff]
          %v1680 = vld [vmem:[#allocation3 + $0x30] sm:$0xff]
          %v1681 = vld [vmem:[#allocation3 + $0x38] sm:$0xff]
          %v1682 = vld [vmem:[#allocation3 + $0x40] sm:$0xff]
          %v1683 = vld [vmem:[#allocation3 + $0x48] sm:$0xff]
          %v1684 = vld [vmem:[#allocation3 + $0x50] sm:$0xff]
          %v1685 = vld [vmem:[#allocation3 + $0x58] sm:$0xff]
          %v1686 = vld [vmem:[#allocation3 + $0x60] sm:$0xff]
          %v1687 = vld [vmem:[#allocation3 + $0x68] sm:$0xff]
          %v1688 = vld [vmem:[#allocation3 + $0x70] sm:$0xff]
          %v1689 = vld [vmem:[#allocation3 + $0x78] sm:$0xff]
          %v1690 = vld [vmem:[#allocation3 + $0x80] sm:$0xff]
          %v1691 = vld [vmem:[#allocation3 + $0x88] sm:$0xff]
          %v1692 = vld [vmem:[#allocation3 + $0x90] sm:$0xff]
          %v1693 = vld [vmem:[#allocation3 + $0x98] sm:$0xff]
          %v1694 = vld [vmem:[#allocation3 + $0xa0] sm:$0xff]
          %v1695 = vld [vmem:[#allocation3 + $0xa8] sm:$0xff]
          %v1696 = vld [vmem:[#allocation3 + $0xb0] sm:$0xff]
          %v1697 = vld [vmem:[#allocation3 + $0xb8] sm:$0xff]
          %v1698 = vld [vmem:[#allocation3 + $0xc0] sm:$0xff]
          %v1699 = vld [vmem:[#allocation3 + $0xc8] sm:$0xff]
          %v1700 = vld [vmem:[#allocation3 + $0xd0] sm:$0xff]
          %v1701 = vld [vmem:[#allocation3 + $0xd8] sm:$0xff]
          %v1702 = vld [vmem:[#allocation3 + $0xe0] sm:$0xff]
          %v1703 = vld [vmem:[#allocation3 + $0xe8] sm:$0xff]
          %v1704 = vld [vmem:[#allocation3 + $0xf0] sm:$0xff]
          %v1705 = vld [vmem:[#allocation3 + $0xf8] sm:$0xff]
          %v1706 = vadd.f32 %v1674, %v1516
          %v1707 = vadd.f32 %v1675, %v1521
          %v1708 = vadd.f32 %v1676, %v1526
          %v1709 = vadd.f32 %v1677, %v1531
          %v1710 = vadd.f32 %v1678, %v1536
          %v1711 = vadd.f32 %v1679, %v1541
          %v1712 = vadd.f32 %v1680, %v1546
          %v1713 = vadd.f32 %v1681, %v1551
          %v1714 = vadd.f32 %v1682, %v1556
          %v1715 = vadd.f32 %v1683, %v1561
          %v1716 = vadd.f32 %v1684, %v1566
          %v1717 = vadd.f32 %v1685, %v1571
          %v1718 = vadd.f32 %v1686, %v1576
          %v1719 = vadd.f32 %v1687, %v1581
          %v1720 = vadd.f32 %v1688, %v1586
          %v1721 = vadd.f32 %v1689, %v1591
          %v1722 = vadd.f32 %v1690, %v1596
          %v1723 = vadd.f32 %v1691, %v1601
          %v1724 = vadd.f32 %v1692, %v1606
          %v1725 = vadd.f32 %v1693, %v1611
          %v1726 = vadd.f32 %v1694, %v1616
          %v1727 = vadd.f32 %v1695, %v1621
          %v1728 = vadd.f32 %v1696, %v1626
          %v1729 = vadd.f32 %v1697, %v1631
          %v1730 = vadd.f32 %v1698, %v1636
          %v1731 = vadd.f32 %v1699, %v1641
          %v1732 = vadd.f32 %v1700, %v1646
          %v1733 = vadd.f32 %v1701, %v1651
          %v1734 = vadd.f32 %v1702, %v1656
          %v1735 = vadd.f32 %v1703, %v1661
          %v1736 = vadd.f32 %v1704, %v1666
          %v1737 = vadd.f32 %v1705, %v1671
          %1738 = vst [vmem:[#allocation3] sm:$0xff] %v1706
          %1739 = vst [vmem:[#allocation3 + $0x8] sm:$0xff] %v1707
          %1740 = vst [vmem:[#allocation3 + $0x10] sm:$0xff] %v1708
          %1741 = vst [vmem:[#allocation3 + $0x18] sm:$0xff] %v1709
          %1742 = vst [vmem:[#allocation3 + $0x20] sm:$0xff] %v1710
          %1743 = vst [vmem:[#allocation3 + $0x28] sm:$0xff] %v1711
          %1744 = vst [vmem:[#allocation3 + $0x30] sm:$0xff] %v1712
          %1745 = vst [vmem:[#allocation3 + $0x38] sm:$0xff] %v1713
          %1746 = vst [vmem:[#allocation3 + $0x40] sm:$0xff] %v1714
          %1747 = vst [vmem:[#allocation3 + $0x48] sm:$0xff] %v1715
          %1748 = vst [vmem:[#allocation3 + $0x50] sm:$0xff] %v1716
          %1749 = vst [vmem:[#allocation3 + $0x58] sm:$0xff] %v1717
          %1750 = vst [vmem:[#allocation3 + $0x60] sm:$0xff] %v1718
          %1751 = vst [vmem:[#allocation3 + $0x68] sm:$0xff] %v1719
          %1752 = vst [vmem:[#allocation3 + $0x70] sm:$0xff] %v1720
          %1753 = vst [vmem:[#allocation3 + $0x78] sm:$0xff] %v1721
          %1754 = vst [vmem:[#allocation3 + $0x80] sm:$0xff] %v1722
          %1755 = vst [vmem:[#allocation3 + $0x88] sm:$0xff] %v1723
          %1756 = vst [vmem:[#allocation3 + $0x90] sm:$0xff] %v1724
          %1757 = vst [vmem:[#allocation3 + $0x98] sm:$0xff] %v1725
          %1758 = vst [vmem:[#allocation3 + $0xa0] sm:$0xff] %v1726
          %1759 = vst [vmem:[#allocation3 + $0xa8] sm:$0xff] %v1727
          %1760 = vst [vmem:[#allocation3 + $0xb0] sm:$0xff] %v1728
          %1761 = vst [vmem:[#allocation3 + $0xb8] sm:$0xff] %v1729
          %1762 = vst [vmem:[#allocation3 + $0xc0] sm:$0xff] %v1730
          %1763 = vst [vmem:[#allocation3 + $0xc8] sm:$0xff] %v1731
          %1764 = vst [vmem:[#allocation3 + $0xd0] sm:$0xff] %v1732
          %1765 = vst [vmem:[#allocation3 + $0xd8] sm:$0xff] %v1733
          %1766 = vst [vmem:[#allocation3 + $0xe0] sm:$0xff] %v1734
          %1767 = vst [vmem:[#allocation3 + $0xe8] sm:$0xff] %v1735
          %1768 = vst [vmem:[#allocation3 + $0xf0] sm:$0xff] %v1736
          %1769 = vst [vmem:[#allocation3 + $0xf8] sm:$0xff] %v1737
          %v1770 = vld [vmem:[%s252 + $0x8] sm:$0xff]
          %v1771 = vld [vmem:[%s252 + $0x10] sm:$0xff]
          %v1772 = vld [vmem:[%s252 + $0x28] sm:$0xff]
          %v1773 = vld [vmem:[%s252 + $0x30] sm:$0xff]
          %v1774 = vld [vmem:[%s252 + $0x48] sm:$0xff]
          %v1775 = vld [vmem:[%s252 + $0x50] sm:$0xff]
          %v1776 = vld [vmem:[%s252 + $0x68] sm:$0xff]
          %v1777 = vld [vmem:[%s252 + $0x70] sm:$0xff]
          %v1778 = vld [vmem:[%s252 + $0x88] sm:$0xff]
          %v1779 = vld [vmem:[%s252 + $0x90] sm:$0xff]
          %v1780 = vld [vmem:[%s252 + $0xa8] sm:$0xff]
          %v1781 = vld [vmem:[%s252 + $0xb0] sm:$0xff]
          %v1782 = vld [vmem:[%s252 + $0xc8] sm:$0xff]
          %v1783 = vld [vmem:[%s252 + $0xd0] sm:$0xff]
          %v1784 = vld [vmem:[%s252 + $0xe8] sm:$0xff]
          %v1785 = vld [vmem:[%s252 + $0xf0] sm:$0xff]
          %v1786 = vld [vmem:[%s252 + $0x108] sm:$0xff]
          %v1787 = vld [vmem:[%s252 + $0x110] sm:$0xff]
          %v1788 = vld [vmem:[%s252 + $0x128] sm:$0xff]
          %v1789 = vld [vmem:[%s252 + $0x130] sm:$0xff]
          %v1790 = vld [vmem:[%s252 + $0x148] sm:$0xff]
          %v1791 = vld [vmem:[%s252 + $0x150] sm:$0xff]
          %v1792 = vld [vmem:[%s252 + $0x168] sm:$0xff]
          %v1793 = vld [vmem:[%s252 + $0x170] sm:$0xff]
          %v1794 = vld [vmem:[%s252 + $0x188] sm:$0xff]
          %v1795 = vld [vmem:[%s252 + $0x190] sm:$0xff]
          %v1796 = vld [vmem:[%s252 + $0x1a8] sm:$0xff]
          %v1797 = vld [vmem:[%s252 + $0x1b0] sm:$0xff]
          %v1798 = vld [vmem:[%s252 + $0x1c8] sm:$0xff]
          %v1799 = vld [vmem:[%s252 + $0x1d0] sm:$0xff]
          %v1800 = vld [vmem:[%s252 + $0x1e8] sm:$0xff]
          %v1801 = vld [vmem:[%s252 + $0x1f0] sm:$0xff]
          %s1802 = scalar_lea.vmem [#allocation9], 512
          %v1803 = vld [vmem:[%s1802] sm:$0xff]
          %v1804 = vld [vmem:[%s1802 + $0x8] sm:$0xff]
          %v1805 = vld [vmem:[%s1802 + $0x10] sm:$0xff]
          %v1806 = vld [vmem:[%s1802 + $0x18] sm:$0xff]
          %v1807 = vld [vmem:[%s1802 + $0x20] sm:$0xff]
          %v1808 = vld [vmem:[%s1802 + $0x28] sm:$0xff]
          %v1809 = vld [vmem:[%s1802 + $0x30] sm:$0xff]
          %v1810 = vld [vmem:[%s1802 + $0x38] sm:$0xff]
          %v1811 = vld [vmem:[%s1802 + $0x40] sm:$0xff]
          %v1812 = vld [vmem:[%s1802 + $0x48] sm:$0xff]
          %v1813 = vld [vmem:[%s1802 + $0x50] sm:$0xff]
          %v1814 = vld [vmem:[%s1802 + $0x58] sm:$0xff]
          %v1815 = vld [vmem:[%s1802 + $0x60] sm:$0xff]
          %v1816 = vld [vmem:[%s1802 + $0x68] sm:$0xff]
          %v1817 = vld [vmem:[%s1802 + $0x70] sm:$0xff]
          %v1818 = vld [vmem:[%s1802 + $0x78] sm:$0xff]
          %1819 = vmatprep.subr.mxu0 0.0
          %1820 = vmatpush1.msra.mxu0 %v1803
          %1821 = vmatprep.subr.mxu0 0.0
          %1822 = vmatpush1.msra.mxu0 %v1804
          %1823 = vmatprep.subr.mxu0 0.0
          %1824 = vmatpush1.msra.mxu0 %v1805
          %1825 = vmatprep.subr.mxu0 0.0
          %1826 = vmatpush1.msra.mxu0 %v1806
          %1827 = vmatprep.subr.mxu0 0.0
          %1828 = vmatpush1.msra.mxu0 %v1807
          %1829 = vmatprep.subr.mxu0 0.0
          %1830 = vmatpush1.msra.mxu0 %v1808
          %1831 = vmatprep.subr.mxu0 0.0
          %1832 = vmatpush1.msra.mxu0 %v1809
          %1833 = vmatprep.subr.mxu0 0.0
          %1834 = vmatpush1.msra.mxu0 %v1810
          %1835 = vmatprep.subr.mxu0 0.0
          %1836 = vmatpush1.msra.mxu0 %v1811
          %1837 = vmatprep.subr.mxu0 0.0
          %1838 = vmatpush1.msra.mxu0 %v1812
          %1839 = vmatprep.subr.mxu0 0.0
          %1840 = vmatpush1.msra.mxu0 %v1813
          %1841 = vmatprep.subr.mxu0 0.0
          %1842 = vmatpush1.msra.mxu0 %v1814
          %1843 = vmatprep.subr.mxu0 0.0
          %1844 = vmatpush1.msra.mxu0 %v1815
          %1845 = vmatprep.subr.mxu0 0.0
          %1846 = vmatpush1.msra.mxu0 %v1816
          %1847 = vmatprep.subr.mxu0 0.0
          %1848 = vmatpush1.msra.mxu0 %v1817
          %1849 = vmatprep.subr.mxu0 0.0
          %1850 = vmatpush1.msra.mxu0 %v1818
          %1851 = vmatprep.subr.mxu0 0.0
          %1852 = vmatpush1.msra.mxu0 0.0
          %1853 = vmatprep.subr.mxu0 0.0
          %1854 = vmatpush1.msra.mxu0 0.0
          %1855 = vmatprep.subr.mxu0 0.0
          %1856 = vmatpush1.msra.mxu0 0.0
          %1857 = vmatprep.subr.mxu0 0.0
          %1858 = vmatpush1.msra.mxu0 0.0
          %1859 = vmatprep.subr.mxu0 0.0
          %1860 = vmatpush1.msra.mxu0 0.0
          %1861 = vmatprep.subr.mxu0 0.0
          %1862 = vmatpush1.msra.mxu0 0.0
          %1863 = vmatprep.subr.mxu0 0.0
          %1864 = vmatpush1.msra.mxu0 0.0
          %1865 = vmatprep.subr.mxu0 0.0
          %1866 = vmatpush1.msra.mxu0 0.0
          %1867 = vmatprep.subr.mxu0 0.0
          %1868 = vmatpush1.msra.mxu0 0.0
          %1869 = vmatprep.subr.mxu0 0.0
          %1870 = vmatpush1.msra.mxu0 0.0
          %1871 = vmatprep.subr.mxu0 0.0
          %1872 = vmatpush1.msra.mxu0 0.0
          %1873 = vmatprep.subr.mxu0 0.0
          %1874 = vmatpush1.msra.mxu0 0.0
          %1875 = vmatprep.subr.mxu0 0.0
          %1876 = vmatpush1.msra.mxu0 0.0
          %1877 = vmatprep.subr.mxu0 0.0
          %1878 = vmatpush1.msra.mxu0 0.0
          %1879 = vmatprep.subr.mxu0 0.0
          %1880 = vmatpush1.msra.mxu0 0.0
          %1881 = vmatprep.subr.mxu0 0.0
          %1882 = vmatpush1.msra.mxu0 0.0
          %1883 = vmatprep.mubr.f32.mxu0 0.0
          %1884 = vmatmul.mubr.f32.gmra.mrb[0].mxu0 %v1770
          %v1885 = vpop.f32.mrb[0].mxu0
          %v1886 = vadd.f32 0.0, %v1885
          %v1887 = vpop.f32.mrb[0].mxu0
          %1888 = vmatprep.mubr.f32.mxu0 0.0
          %1889 = vmatmul.mubr.f32.gmra.mrb[0].mxu0 %v1771
          %v1890 = vpop.f32.mrb[0].mxu0
          %v1891 = vadd.f32 0.0, %v1890
          %v1892 = vpop.f32.mrb[0].mxu0
          %1893 = vmatprep.mubr.f32.mxu0 0.0
          %1894 = vmatmul.mubr.f32.gmra.mrb[0].mxu0 %v1772
          %v1895 = vpop.f32.mrb[0].mxu0
          %v1896 = vadd.f32 0.0, %v1895
          %v1897 = vpop.f32.mrb[0].mxu0
          %1898 = vmatprep.mubr.f32.mxu0 0.0
          %1899 = vmatmul.mubr.f32.gmra.mrb[0].mxu0 %v1773
          %v1900 = vpop.f32.mrb[0].mxu0
          %v1901 = vadd.f32 0.0, %v1900
          %v1902 = vpop.f32.mrb[0].mxu0
          %1903 = vmatprep.mubr.f32.mxu0 0.0
          %1904 = vmatmul.mubr.f32.gmra.mrb[0].mxu0 %v1774
          %v1905 = vpop.f32.mrb[0].mxu0
          %v1906 = vadd.f32 0.0, %v1905
          %v1907 = vpop.f32.mrb[0].mxu0
          %1908 = vmatprep.mubr.f32.mxu0 0.0
          %1909 = vmatmul.mubr.f32.gmra.mrb[0].mxu0 %v1775
          %v1910 = vpop.f32.mrb[0].mxu0
          %v1911 = vadd.f32 0.0, %v1910
          %v1912 = vpop.f32.mrb[0].mxu0
          %1913 = vmatprep.mubr.f32.mxu0 0.0
          %1914 = vmatmul.mubr.f32.gmra.mrb[0].mxu0 %v1776
          %v1915 = vpop.f32.mrb[0].mxu0
          %v1916 = vadd.f32 0.0, %v1915
          %v1917 = vpop.f32.mrb[0].mxu0
          %1918 = vmatprep.mubr.f32.mxu0 0.0
          %1919 = vmatmul.mubr.f32.gmra.mrb[0].mxu0 %v1777
          %v1920 = vpop.f32.mrb[0].mxu0
          %v1921 = vadd.f32 0.0, %v1920
          %v1922 = vpop.f32.mrb[0].mxu0
          %1923 = vmatprep.mubr.f32.mxu0 0.0
          %1924 = vmatmul.mubr.f32.gmra.mrb[0].mxu0 %v1778
          %v1925 = vpop.f32.mrb[0].mxu0
          %v1926 = vadd.f32 0.0, %v1925
          %v1927 = vpop.f32.mrb[0].mxu0
          %1928 = vmatprep.mubr.f32.mxu0 0.0
          %1929 = vmatmul.mubr.f32.gmra.mrb[0].mxu0 %v1779
          %v1930 = vpop.f32.mrb[0].mxu0
          %v1931 = vadd.f32 0.0, %v1930
          %v1932 = vpop.f32.mrb[0].mxu0
          %1933 = vmatprep.mubr.f32.mxu0 0.0
          %1934 = vmatmul.mubr.f32.gmra.mrb[0].mxu0 %v1780
          %v1935 = vpop.f32.mrb[0].mxu0
          %v1936 = vadd.f32 0.0, %v1935
          %v1937 = vpop.f32.mrb[0].mxu0
          %1938 = vmatprep.mubr.f32.mxu0 0.0
          %1939 = vmatmul.mubr.f32.gmra.mrb[0].mxu0 %v1781
          %v1940 = vpop.f32.mrb[0].mxu0
          %v1941 = vadd.f32 0.0, %v1940
          %v1942 = vpop.f32.mrb[0].mxu0
          %1943 = vmatprep.mubr.f32.mxu0 0.0
          %1944 = vmatmul.mubr.f32.gmra.mrb[0].mxu0 %v1782
          %v1945 = vpop.f32.mrb[0].mxu0
          %v1946 = vadd.f32 0.0, %v1945
          %v1947 = vpop.f32.mrb[0].mxu0
          %1948 = vmatprep.mubr.f32.mxu0 0.0
          %1949 = vmatmul.mubr.f32.gmra.mrb[0].mxu0 %v1783
          %v1950 = vpop.f32.mrb[0].mxu0
          %v1951 = vadd.f32 0.0, %v1950
          %v1952 = vpop.f32.mrb[0].mxu0
          %1953 = vmatprep.mubr.f32.mxu0 0.0
          %1954 = vmatmul.mubr.f32.gmra.mrb[0].mxu0 %v1784
          %v1955 = vpop.f32.mrb[0].mxu0
          %v1956 = vadd.f32 0.0, %v1955
          %v1957 = vpop.f32.mrb[0].mxu0
          %1958 = vmatprep.mubr.f32.mxu0 0.0
          %1959 = vmatmul.mubr.f32.gmra.mrb[0].mxu0 %v1785
          %v1960 = vpop.f32.mrb[0].mxu0
          %v1961 = vadd.f32 0.0, %v1960
          %v1962 = vpop.f32.mrb[0].mxu0
          %1963 = vmatprep.mubr.f32.mxu0 0.0
          %1964 = vmatmul.mubr.f32.gmra.mrb[0].mxu0 %v1786
          %v1965 = vpop.f32.mrb[0].mxu0
          %v1966 = vadd.f32 0.0, %v1965
          %v1967 = vpop.f32.mrb[0].mxu0
          %1968 = vmatprep.mubr.f32.mxu0 0.0
          %1969 = vmatmul.mubr.f32.gmra.mrb[0].mxu0 %v1787
          %v1970 = vpop.f32.mrb[0].mxu0
          %v1971 = vadd.f32 0.0, %v1970
          %v1972 = vpop.f32.mrb[0].mxu0
          %1973 = vmatprep.mubr.f32.mxu0 0.0
          %1974 = vmatmul.mubr.f32.gmra.mrb[0].mxu0 %v1788
          %v1975 = vpop.f32.mrb[0].mxu0
          %v1976 = vadd.f32 0.0, %v1975
          %v1977 = vpop.f32.mrb[0].mxu0
          %1978 = vmatprep.mubr.f32.mxu0 0.0
          %1979 = vmatmul.mubr.f32.gmra.mrb[0].mxu0 %v1789
          %v1980 = vpop.f32.mrb[0].mxu0
          %v1981 = vadd.f32 0.0, %v1980
          %v1982 = vpop.f32.mrb[0].mxu0
          %1983 = vmatprep.mubr.f32.mxu0 0.0
          %1984 = vmatmul.mubr.f32.gmra.mrb[0].mxu0 %v1790
          %v1985 = vpop.f32.mrb[0].mxu0
          %v1986 = vadd.f32 0.0, %v1985
          %v1987 = vpop.f32.mrb[0].mxu0
          %1988 = vmatprep.mubr.f32.mxu0 0.0
          %1989 = vmatmul.mubr.f32.gmra.mrb[0].mxu0 %v1791
          %v1990 = vpop.f32.mrb[0].mxu0
          %v1991 = vadd.f32 0.0, %v1990
          %v1992 = vpop.f32.mrb[0].mxu0
          %1993 = vmatprep.mubr.f32.mxu0 0.0
          %1994 = vmatmul.mubr.f32.gmra.mrb[0].mxu0 %v1792
          %v1995 = vpop.f32.mrb[0].mxu0
          %v1996 = vadd.f32 0.0, %v1995
          %v1997 = vpop.f32.mrb[0].mxu0
          %1998 = vmatprep.mubr.f32.mxu0 0.0
          %1999 = vmatmul.mubr.f32.gmra.mrb[0].mxu0 %v1793
          %v2000 = vpop.f32.mrb[0].mxu0
          %v2001 = vadd.f32 0.0, %v2000
          %v2002 = vpop.f32.mrb[0].mxu0
          %2003 = vmatprep.mubr.f32.mxu0 0.0
          %2004 = vmatmul.mubr.f32.gmra.mrb[0].mxu0 %v1794
          %v2005 = vpop.f32.mrb[0].mxu0
          %v2006 = vadd.f32 0.0, %v2005
          %v2007 = vpop.f32.mrb[0].mxu0
          %2008 = vmatprep.mubr.f32.mxu0 0.0
          %2009 = vmatmul.mubr.f32.gmra.mrb[0].mxu0 %v1795
          %v2010 = vpop.f32.mrb[0].mxu0
          %v2011 = vadd.f32 0.0, %v2010
          %v2012 = vpop.f32.mrb[0].mxu0
          %2013 = vmatprep.mubr.f32.mxu0 0.0
          %2014 = vmatmul.mubr.f32.gmra.mrb[0].mxu0 %v1796
          %v2015 = vpop.f32.mrb[0].mxu0
          %v2016 = vadd.f32 0.0, %v2015
          %v2017 = vpop.f32.mrb[0].mxu0
          %2018 = vmatprep.mubr.f32.mxu0 0.0
          %2019 = vmatmul.mubr.f32.gmra.mrb[0].mxu0 %v1797
          %v2020 = vpop.f32.mrb[0].mxu0
          %v2021 = vadd.f32 0.0, %v2020
          %v2022 = vpop.f32.mrb[0].mxu0
          %2023 = vmatprep.mubr.f32.mxu0 0.0
          %2024 = vmatmul.mubr.f32.gmra.mrb[0].mxu0 %v1798
          %v2025 = vpop.f32.mrb[0].mxu0
          %v2026 = vadd.f32 0.0, %v2025
          %v2027 = vpop.f32.mrb[0].mxu0
          %2028 = vmatprep.mubr.f32.mxu0 0.0
          %2029 = vmatmul.mubr.f32.gmra.mrb[0].mxu0 %v1799
          %v2030 = vpop.f32.mrb[0].mxu0
          %v2031 = vadd.f32 0.0, %v2030
          %v2032 = vpop.f32.mrb[0].mxu0
          %2033 = vmatprep.mubr.f32.mxu0 0.0
          %2034 = vmatmul.mubr.f32.gmra.mrb[0].mxu0 %v1800
          %v2035 = vpop.f32.mrb[0].mxu0
          %v2036 = vadd.f32 0.0, %v2035
          %v2037 = vpop.f32.mrb[0].mxu0
          %2038 = vmatprep.mubr.f32.mxu0 0.0
          %2039 = vmatmul.mubr.f32.gmra.mrb[0].mxu0 %v1801
          %v2040 = vpop.f32.mrb[0].mxu0
          %v2041 = vadd.f32 0.0, %v2040
          %v2042 = vpop.f32.mrb[0].mxu0
          %2043 = vdwg.mxu0
          %v2044 = vld [vmem:[#allocation3] sm:$0xff]
          %v2045 = vld [vmem:[#allocation3 + $0x8] sm:$0xff]
          %v2046 = vld [vmem:[#allocation3 + $0x10] sm:$0xff]
          %v2047 = vld [vmem:[#allocation3 + $0x18] sm:$0xff]
          %v2048 = vld [vmem:[#allocation3 + $0x20] sm:$0xff]
          %v2049 = vld [vmem:[#allocation3 + $0x28] sm:$0xff]
          %v2050 = vld [vmem:[#allocation3 + $0x30] sm:$0xff]
          %v2051 = vld [vmem:[#allocation3 + $0x38] sm:$0xff]
          %v2052 = vld [vmem:[#allocation3 + $0x40] sm:$0xff]
          %v2053 = vld [vmem:[#allocation3 + $0x48] sm:$0xff]
          %v2054 = vld [vmem:[#allocation3 + $0x50] sm:$0xff]
          %v2055 = vld [vmem:[#allocation3 + $0x58] sm:$0xff]
          %v2056 = vld [vmem:[#allocation3 + $0x60] sm:$0xff]
          %v2057 = vld [vmem:[#allocation3 + $0x68] sm:$0xff]
          %v2058 = vld [vmem:[#allocation3 + $0x70] sm:$0xff]
          %v2059 = vld [vmem:[#allocation3 + $0x78] sm:$0xff]
          %v2060 = vld [vmem:[#allocation3 + $0x80] sm:$0xff]
          %v2061 = vld [vmem:[#allocation3 + $0x88] sm:$0xff]
          %v2062 = vld [vmem:[#allocation3 + $0x90] sm:$0xff]
          %v2063 = vld [vmem:[#allocation3 + $0x98] sm:$0xff]
          %v2064 = vld [vmem:[#allocation3 + $0xa0] sm:$0xff]
          %v2065 = vld [vmem:[#allocation3 + $0xa8] sm:$0xff]
          %v2066 = vld [vmem:[#allocation3 + $0xb0] sm:$0xff]
          %v2067 = vld [vmem:[#allocation3 + $0xb8] sm:$0xff]
          %v2068 = vld [vmem:[#allocation3 + $0xc0] sm:$0xff]
          %v2069 = vld [vmem:[#allocation3 + $0xc8] sm:$0xff]
          %v2070 = vld [vmem:[#allocation3 + $0xd0] sm:$0xff]
          %v2071 = vld [vmem:[#allocation3 + $0xd8] sm:$0xff]
          %v2072 = vld [vmem:[#allocation3 + $0xe0] sm:$0xff]
          %v2073 = vld [vmem:[#allocation3 + $0xe8] sm:$0xff]
          %v2074 = vld [vmem:[#allocation3 + $0xf0] sm:$0xff]
          %v2075 = vld [vmem:[#allocation3 + $0xf8] sm:$0xff]
          %v2076 = vadd.f32 %v2044, %v1886
          %v2077 = vadd.f32 %v2045, %v1891
          %v2078 = vadd.f32 %v2046, %v1896
          %v2079 = vadd.f32 %v2047, %v1901
          %v2080 = vadd.f32 %v2048, %v1906
          %v2081 = vadd.f32 %v2049, %v1911
          %v2082 = vadd.f32 %v2050, %v1916
          %v2083 = vadd.f32 %v2051, %v1921
          %v2084 = vadd.f32 %v2052, %v1926
          %v2085 = vadd.f32 %v2053, %v1931
          %v2086 = vadd.f32 %v2054, %v1936
          %v2087 = vadd.f32 %v2055, %v1941
          %v2088 = vadd.f32 %v2056, %v1946
          %v2089 = vadd.f32 %v2057, %v1951
          %v2090 = vadd.f32 %v2058, %v1956
          %v2091 = vadd.f32 %v2059, %v1961
          %v2092 = vadd.f32 %v2060, %v1966
          %v2093 = vadd.f32 %v2061, %v1971
          %v2094 = vadd.f32 %v2062, %v1976
          %v2095 = vadd.f32 %v2063, %v1981
          %v2096 = vadd.f32 %v2064, %v1986
          %v2097 = vadd.f32 %v2065, %v1991
          %v2098 = vadd.f32 %v2066, %v1996
          %v2099 = vadd.f32 %v2067, %v2001
          %v2100 = vadd.f32 %v2068, %v2006
          %v2101 = vadd.f32 %v2069, %v2011
          %v2102 = vadd.f32 %v2070, %v2016
          %v2103 = vadd.f32 %v2071, %v2021
          %v2104 = vadd.f32 %v2072, %v2026
          %v2105 = vadd.f32 %v2073, %v2031
          %v2106 = vadd.f32 %v2074, %v2036
          %v2107 = vadd.f32 %v2075, %v2041
          %2108 = vst [vmem:[#allocation3] sm:$0xff] %v2076
          %2109 = vst [vmem:[#allocation3 + $0x8] sm:$0xff] %v2077
          %2110 = vst [vmem:[#allocation3 + $0x10] sm:$0xff] %v2078
          %2111 = vst [vmem:[#allocation3 + $0x18] sm:$0xff] %v2079
          %2112 = vst [vmem:[#allocation3 + $0x20] sm:$0xff] %v2080
          %2113 = vst [vmem:[#allocation3 + $0x28] sm:$0xff] %v2081
          %2114 = vst [vmem:[#allocation3 + $0x30] sm:$0xff] %v2082
          %2115 = vst [vmem:[#allocation3 + $0x38] sm:$0xff] %v2083
          %2116 = vst [vmem:[#allocation3 + $0x40] sm:$0xff] %v2084
          %2117 = vst [vmem:[#allocation3 + $0x48] sm:$0xff] %v2085
          %2118 = vst [vmem:[#allocation3 + $0x50] sm:$0xff] %v2086
          %2119 = vst [vmem:[#allocation3 + $0x58] sm:$0xff] %v2087
          %2120 = vst [vmem:[#allocation3 + $0x60] sm:$0xff] %v2088
          %2121 = vst [vmem:[#allocation3 + $0x68] sm:$0xff] %v2089
          %2122 = vst [vmem:[#allocation3 + $0x70] sm:$0xff] %v2090
          %2123 = vst [vmem:[#allocation3 + $0x78] sm:$0xff] %v2091
          %2124 = vst [vmem:[#allocation3 + $0x80] sm:$0xff] %v2092
          %2125 = vst [vmem:[#allocation3 + $0x88] sm:$0xff] %v2093
          %2126 = vst [vmem:[#allocation3 + $0x90] sm:$0xff] %v2094
          %2127 = vst [vmem:[#allocation3 + $0x98] sm:$0xff] %v2095
          %2128 = vst [vmem:[#allocation3 + $0xa0] sm:$0xff] %v2096
          %2129 = vst [vmem:[#allocation3 + $0xa8] sm:$0xff] %v2097
          %2130 = vst [vmem:[#allocation3 + $0xb0] sm:$0xff] %v2098
          %2131 = vst [vmem:[#allocation3 + $0xb8] sm:$0xff] %v2099
          %2132 = vst [vmem:[#allocation3 + $0xc0] sm:$0xff] %v2100
          %2133 = vst [vmem:[#allocation3 + $0xc8] sm:$0xff] %v2101
          %2134 = vst [vmem:[#allocation3 + $0xd0] sm:$0xff] %v2102
          %2135 = vst [vmem:[#allocation3 + $0xd8] sm:$0xff] %v2103
          %2136 = vst [vmem:[#allocation3 + $0xe0] sm:$0xff] %v2104
          %2137 = vst [vmem:[#allocation3 + $0xe8] sm:$0xff] %v2105
          %2138 = vst [vmem:[#allocation3 + $0xf0] sm:$0xff] %v2106
          %2139 = vst [vmem:[#allocation3 + $0xf8] sm:$0xff] %v2107
          %v2140 = vld [vmem:[%s252 + $0x9] sm:$0xff]
          %v2141 = vld [vmem:[%s252 + $0x11] sm:$0xff]
          %v2142 = vld [vmem:[%s252 + $0x29] sm:$0xff]
          %v2143 = vld [vmem:[%s252 + $0x31] sm:$0xff]
          %v2144 = vld [vmem:[%s252 + $0x49] sm:$0xff]
          %v2145 = vld [vmem:[%s252 + $0x51] sm:$0xff]
          %v2146 = vld [vmem:[%s252 + $0x69] sm:$0xff]
          %v2147 = vld [vmem:[%s252 + $0x71] sm:$0xff]
          %v2148 = vld [vmem:[%s252 + $0x89] sm:$0xff]
          %v2149 = vld [vmem:[%s252 + $0x91] sm:$0xff]
          %v2150 = vld [vmem:[%s252 + $0xa9] sm:$0xff]
          %v2151 = vld [vmem:[%s252 + $0xb1] sm:$0xff]
          %v2152 = vld [vmem:[%s252 + $0xc9] sm:$0xff]
          %v2153 = vld [vmem:[%s252 + $0xd1] sm:$0xff]
          %v2154 = vld [vmem:[%s252 + $0xe9] sm:$0xff]
          %v2155 = vld [vmem:[%s252 + $0xf1] sm:$0xff]
          %v2156 = vld [vmem:[%s252 + $0x109] sm:$0xff]
          %v2157 = vld [vmem:[%s252 + $0x111] sm:$0xff]
          %v2158 = vld [vmem:[%s252 + $0x129] sm:$0xff]
          %v2159 = vld [vmem:[%s252 + $0x131] sm:$0xff]
          %v2160 = vld [vmem:[%s252 + $0x149] sm:$0xff]
          %v2161 = vld [vmem:[%s252 + $0x151] sm:$0xff]
          %v2162 = vld [vmem:[%s252 + $0x169] sm:$0xff]
          %v2163 = vld [vmem:[%s252 + $0x171] sm:$0xff]
          %v2164 = vld [vmem:[%s252 + $0x189] sm:$0xff]
          %v2165 = vld [vmem:[%s252 + $0x191] sm:$0xff]
          %v2166 = vld [vmem:[%s252 + $0x1a9] sm:$0xff]
          %v2167 = vld [vmem:[%s252 + $0x1b1] sm:$0xff]
          %v2168 = vld [vmem:[%s252 + $0x1c9] sm:$0xff]
          %v2169 = vld [vmem:[%s252 + $0x1d1] sm:$0xff]
          %v2170 = vld [vmem:[%s252 + $0x1e9] sm:$0xff]
          %v2171 = vld [vmem:[%s252 + $0x1f1] sm:$0xff]
          %s2172 = scalar_lea.vmem [#allocation9], 640
          %v2173 = vld [vmem:[%s2172] sm:$0xff]
          %v2174 = vld [vmem:[%s2172 + $0x8] sm:$0xff]
          %v2175 = vld [vmem:[%s2172 + $0x10] sm:$0xff]
          %v2176 = vld [vmem:[%s2172 + $0x18] sm:$0xff]
          %v2177 = vld [vmem:[%s2172 + $0x20] sm:$0xff]
          %v2178 = vld [vmem:[%s2172 + $0x28] sm:$0xff]
          %v2179 = vld [vmem:[%s2172 + $0x30] sm:$0xff]
          %v2180 = vld [vmem:[%s2172 + $0x38] sm:$0xff]
          %v2181 = vld [vmem:[%s2172 + $0x40] sm:$0xff]
          %v2182 = vld [vmem:[%s2172 + $0x48] sm:$0xff]
          %v2183 = vld [vmem:[%s2172 + $0x50] sm:$0xff]
          %v2184 = vld [vmem:[%s2172 + $0x58] sm:$0xff]
          %v2185 = vld [vmem:[%s2172 + $0x60] sm:$0xff]
          %v2186 = vld [vmem:[%s2172 + $0x68] sm:$0xff]
          %v2187 = vld [vmem:[%s2172 + $0x70] sm:$0xff]
          %v2188 = vld [vmem:[%s2172 + $0x78] sm:$0xff]
          %2189 = vmatprep.subr.mxu0 0.0
          %2190 = vmatpush1.msra.mxu0 %v2173
          %2191 = vmatprep.subr.mxu0 0.0
          %2192 = vmatpush1.msra.mxu0 %v2174
          %2193 = vmatprep.subr.mxu0 0.0
          %2194 = vmatpush1.msra.mxu0 %v2175
          %2195 = vmatprep.subr.mxu0 0.0
          %2196 = vmatpush1.msra.mxu0 %v2176
          %2197 = vmatprep.subr.mxu0 0.0
          %2198 = vmatpush1.msra.mxu0 %v2177
          %2199 = vmatprep.subr.mxu0 0.0
          %2200 = vmatpush1.msra.mxu0 %v2178
          %2201 = vmatprep.subr.mxu0 0.0
          %2202 = vmatpush1.msra.mxu0 %v2179
          %2203 = vmatprep.subr.mxu0 0.0
          %2204 = vmatpush1.msra.mxu0 %v2180
          %2205 = vmatprep.subr.mxu0 0.0
          %2206 = vmatpush1.msra.mxu0 %v2181
          %2207 = vmatprep.subr.mxu0 0.0
          %2208 = vmatpush1.msra.mxu0 %v2182
          %2209 = vmatprep.subr.mxu0 0.0
          %2210 = vmatpush1.msra.mxu0 %v2183
          %2211 = vmatprep.subr.mxu0 0.0
          %2212 = vmatpush1.msra.mxu0 %v2184
          %2213 = vmatprep.subr.mxu0 0.0
          %2214 = vmatpush1.msra.mxu0 %v2185
          %2215 = vmatprep.subr.mxu0 0.0
          %2216 = vmatpush1.msra.mxu0 %v2186
          %2217 = vmatprep.subr.mxu0 0.0
          %2218 = vmatpush1.msra.mxu0 %v2187
          %2219 = vmatprep.subr.mxu0 0.0
          %2220 = vmatpush1.msra.mxu0 %v2188
          %2221 = vmatprep.subr.mxu0 0.0
          %2222 = vmatpush1.msra.mxu0 0.0
          %2223 = vmatprep.subr.mxu0 0.0
          %2224 = vmatpush1.msra.mxu0 0.0
          %2225 = vmatprep.subr.mxu0 0.0
          %2226 = vmatpush1.msra.mxu0 0.0
          %2227 = vmatprep.subr.mxu0 0.0
          %2228 = vmatpush1.msra.mxu0 0.0
          %2229 = vmatprep.subr.mxu0 0.0
          %2230 = vmatpush1.msra.mxu0 0.0
          %2231 = vmatprep.subr.mxu0 0.0
          %2232 = vmatpush1.msra.mxu0 0.0
          %2233 = vmatprep.subr.mxu0 0.0
          %2234 = vmatpush1.msra.mxu0 0.0
          %2235 = vmatprep.subr.mxu0 0.0
          %2236 = vmatpush1.msra.mxu0 0.0
          %2237 = vmatprep.subr.mxu0 0.0
          %2238 = vmatpush1.msra.mxu0 0.0
          %2239 = vmatprep.subr.mxu0 0.0
          %2240 = vmatpush1.msra.mxu0 0.0
          %2241 = vmatprep.subr.mxu0 0.0
          %2242 = vmatpush1.msra.mxu0 0.0
          %2243 = vmatprep.subr.mxu0 0.0
          %2244 = vmatpush1.msra.mxu0 0.0
          %2245 = vmatprep.subr.mxu0 0.0
          %2246 = vmatpush1.msra.mxu0 0.0
          %2247 = vmatprep.subr.mxu0 0.0
          %2248 = vmatpush1.msra.mxu0 0.0
          %2249 = vmatprep.subr.mxu0 0.0
          %2250 = vmatpush1.msra.mxu0 0.0
          %2251 = vmatprep.subr.mxu0 0.0
          %2252 = vmatpush1.msra.mxu0 0.0
          %2253 = vmatprep.mubr.f32.mxu0 0.0
          %2254 = vmatmul.mubr.f32.gmra.mrb[0].mxu0 %v2140
          %v2255 = vpop.f32.mrb[0].mxu0
          %v2256 = vadd.f32 0.0, %v2255
          %v2257 = vpop.f32.mrb[0].mxu0
          %2258 = vmatprep.mubr.f32.mxu0 0.0
          %2259 = vmatmul.mubr.f32.gmra.mrb[0].mxu0 %v2141
          %v2260 = vpop.f32.mrb[0].mxu0
          %v2261 = vadd.f32 0.0, %v2260
          %v2262 = vpop.f32.mrb[0].mxu0
          %2263 = vmatprep.mubr.f32.mxu0 0.0
          %2264 = vmatmul.mubr.f32.gmra.mrb[0].mxu0 %v2142
          %v2265 = vpop.f32.mrb[0].mxu0
          %v2266 = vadd.f32 0.0, %v2265
          %v2267 = vpop.f32.mrb[0].mxu0
          %2268 = vmatprep.mubr.f32.mxu0 0.0
          %2269 = vmatmul.mubr.f32.gmra.mrb[0].mxu0 %v2143
          %v2270 = vpop.f32.mrb[0].mxu0
          %v2271 = vadd.f32 0.0, %v2270
          %v2272 = vpop.f32.mrb[0].mxu0
          %2273 = vmatprep.mubr.f32.mxu0 0.0
          %2274 = vmatmul.mubr.f32.gmra.mrb[0].mxu0 %v2144
          %v2275 = vpop.f32.mrb[0].mxu0
          %v2276 = vadd.f32 0.0, %v2275
          %v2277 = vpop.f32.mrb[0].mxu0
          %2278 = vmatprep.mubr.f32.mxu0 0.0
          %2279 = vmatmul.mubr.f32.gmra.mrb[0].mxu0 %v2145
          %v2280 = vpop.f32.mrb[0].mxu0
          %v2281 = vadd.f32 0.0, %v2280
          %v2282 = vpop.f32.mrb[0].mxu0
          %2283 = vmatprep.mubr.f32.mxu0 0.0
          %2284 = vmatmul.mubr.f32.gmra.mrb[0].mxu0 %v2146
          %v2285 = vpop.f32.mrb[0].mxu0
          %v2286 = vadd.f32 0.0, %v2285
          %v2287 = vpop.f32.mrb[0].mxu0
          %2288 = vmatprep.mubr.f32.mxu0 0.0
          %2289 = vmatmul.mubr.f32.gmra.mrb[0].mxu0 %v2147
          %v2290 = vpop.f32.mrb[0].mxu0
          %v2291 = vadd.f32 0.0, %v2290
          %v2292 = vpop.f32.mrb[0].mxu0
          %2293 = vmatprep.mubr.f32.mxu0 0.0
          %2294 = vmatmul.mubr.f32.gmra.mrb[0].mxu0 %v2148
          %v2295 = vpop.f32.mrb[0].mxu0
          %v2296 = vadd.f32 0.0, %v2295
          %v2297 = vpop.f32.mrb[0].mxu0
          %2298 = vmatprep.mubr.f32.mxu0 0.0
          %2299 = vmatmul.mubr.f32.gmra.mrb[0].mxu0 %v2149
          %v2300 = vpop.f32.mrb[0].mxu0
          %v2301 = vadd.f32 0.0, %v2300
          %v2302 = vpop.f32.mrb[0].mxu0
          %2303 = vmatprep.mubr.f32.mxu0 0.0
          %2304 = vmatmul.mubr.f32.gmra.mrb[0].mxu0 %v2150
          %v2305 = vpop.f32.mrb[0].mxu0
          %v2306 = vadd.f32 0.0, %v2305
          %v2307 = vpop.f32.mrb[0].mxu0
          %2308 = vmatprep.mubr.f32.mxu0 0.0
          %2309 = vmatmul.mubr.f32.gmra.mrb[0].mxu0 %v2151
          %v2310 = vpop.f32.mrb[0].mxu0
          %v2311 = vadd.f32 0.0, %v2310
          %v2312 = vpop.f32.mrb[0].mxu0
          %2313 = vmatprep.mubr.f32.mxu0 0.0
          %2314 = vmatmul.mubr.f32.gmra.mrb[0].mxu0 %v2152
          %v2315 = vpop.f32.mrb[0].mxu0
          %v2316 = vadd.f32 0.0, %v2315
          %v2317 = vpop.f32.mrb[0].mxu0
          %2318 = vmatprep.mubr.f32.mxu0 0.0
          %2319 = vmatmul.mubr.f32.gmra.mrb[0].mxu0 %v2153
          %v2320 = vpop.f32.mrb[0].mxu0
          %v2321 = vadd.f32 0.0, %v2320
          %v2322 = vpop.f32.mrb[0].mxu0
          %2323 = vmatprep.mubr.f32.mxu0 0.0
          %2324 = vmatmul.mubr.f32.gmra.mrb[0].mxu0 %v2154
          %v2325 = vpop.f32.mrb[0].mxu0
          %v2326 = vadd.f32 0.0, %v2325
          %v2327 = vpop.f32.mrb[0].mxu0
          %2328 = vmatprep.mubr.f32.mxu0 0.0
          %2329 = vmatmul.mubr.f32.gmra.mrb[0].mxu0 %v2155
          %v2330 = vpop.f32.mrb[0].mxu0
          %v2331 = vadd.f32 0.0, %v2330
          %v2332 = vpop.f32.mrb[0].mxu0
          %2333 = vmatprep.mubr.f32.mxu0 0.0
          %2334 = vmatmul.mubr.f32.gmra.mrb[0].mxu0 %v2156
          %v2335 = vpop.f32.mrb[0].mxu0
          %v2336 = vadd.f32 0.0, %v2335
          %v2337 = vpop.f32.mrb[0].mxu0
          %2338 = vmatprep.mubr.f32.mxu0 0.0
          %2339 = vmatmul.mubr.f32.gmra.mrb[0].mxu0 %v2157
          %v2340 = vpop.f32.mrb[0].mxu0
          %v2341 = vadd.f32 0.0, %v2340
          %v2342 = vpop.f32.mrb[0].mxu0
          %2343 = vmatprep.mubr.f32.mxu0 0.0
          %2344 = vmatmul.mubr.f32.gmra.mrb[0].mxu0 %v2158
          %v2345 = vpop.f32.mrb[0].mxu0
          %v2346 = vadd.f32 0.0, %v2345
          %v2347 = vpop.f32.mrb[0].mxu0
          %2348 = vmatprep.mubr.f32.mxu0 0.0
          %2349 = vmatmul.mubr.f32.gmra.mrb[0].mxu0 %v2159
          %v2350 = vpop.f32.mrb[0].mxu0
          %v2351 = vadd.f32 0.0, %v2350
          %v2352 = vpop.f32.mrb[0].mxu0
          %2353 = vmatprep.mubr.f32.mxu0 0.0
          %2354 = vmatmul.mubr.f32.gmra.mrb[0].mxu0 %v2160
          %v2355 = vpop.f32.mrb[0].mxu0
          %v2356 = vadd.f32 0.0, %v2355
          %v2357 = vpop.f32.mrb[0].mxu0
          %2358 = vmatprep.mubr.f32.mxu0 0.0
          %2359 = vmatmul.mubr.f32.gmra.mrb[0].mxu0 %v2161
          %v2360 = vpop.f32.mrb[0].mxu0
          %v2361 = vadd.f32 0.0, %v2360
          %v2362 = vpop.f32.mrb[0].mxu0
          %2363 = vmatprep.mubr.f32.mxu0 0.0
          %2364 = vmatmul.mubr.f32.gmra.mrb[0].mxu0 %v2162
          %v2365 = vpop.f32.mrb[0].mxu0
          %v2366 = vadd.f32 0.0, %v2365
          %v2367 = vpop.f32.mrb[0].mxu0
          %2368 = vmatprep.mubr.f32.mxu0 0.0
          %2369 = vmatmul.mubr.f32.gmra.mrb[0].mxu0 %v2163
          %v2370 = vpop.f32.mrb[0].mxu0
          %v2371 = vadd.f32 0.0, %v2370
          %v2372 = vpop.f32.mrb[0].mxu0
          %2373 = vmatprep.mubr.f32.mxu0 0.0
          %2374 = vmatmul.mubr.f32.gmra.mrb[0].mxu0 %v2164
          %v2375 = vpop.f32.mrb[0].mxu0
          %v2376 = vadd.f32 0.0, %v2375
          %v2377 = vpop.f32.mrb[0].mxu0
          %2378 = vmatprep.mubr.f32.mxu0 0.0
          %2379 = vmatmul.mubr.f32.gmra.mrb[0].mxu0 %v2165
          %v2380 = vpop.f32.mrb[0].mxu0
          %v2381 = vadd.f32 0.0, %v2380
          %v2382 = vpop.f32.mrb[0].mxu0
          %2383 = vmatprep.mubr.f32.mxu0 0.0
          %2384 = vmatmul.mubr.f32.gmra.mrb[0].mxu0 %v2166
          %v2385 = vpop.f32.mrb[0].mxu0
          %v2386 = vadd.f32 0.0, %v2385
          %v2387 = vpop.f32.mrb[0].mxu0
          %2388 = vmatprep.mubr.f32.mxu0 0.0
          %2389 = vmatmul.mubr.f32.gmra.mrb[0].mxu0 %v2167
          %v2390 = vpop.f32.mrb[0].mxu0
          %v2391 = vadd.f32 0.0, %v2390
          %v2392 = vpop.f32.mrb[0].mxu0
          %2393 = vmatprep.mubr.f32.mxu0 0.0
          %2394 = vmatmul.mubr.f32.gmra.mrb[0].mxu0 %v2168
          %v2395 = vpop.f32.mrb[0].mxu0
          %v2396 = vadd.f32 0.0, %v2395
          %v2397 = vpop.f32.mrb[0].mxu0
          %2398 = vmatprep.mubr.f32.mxu0 0.0
          %2399 = vmatmul.mubr.f32.gmra.mrb[0].mxu0 %v2169
          %v2400 = vpop.f32.mrb[0].mxu0
          %v2401 = vadd.f32 0.0, %v2400
          %v2402 = vpop.f32.mrb[0].mxu0
          %2403 = vmatprep.mubr.f32.mxu0 0.0
          %2404 = vmatmul.mubr.f32.gmra.mrb[0].mxu0 %v2170
          %v2405 = vpop.f32.mrb[0].mxu0
          %v2406 = vadd.f32 0.0, %v2405
          %v2407 = vpop.f32.mrb[0].mxu0
          %2408 = vmatprep.mubr.f32.mxu0 0.0
          %2409 = vmatmul.mubr.f32.gmra.mrb[0].mxu0 %v2171
          %v2410 = vpop.f32.mrb[0].mxu0
          %v2411 = vadd.f32 0.0, %v2410
          %v2412 = vpop.f32.mrb[0].mxu0
          %2413 = vdwg.mxu0
          %v2414 = vld [vmem:[#allocation3] sm:$0xff]
          %v2415 = vld [vmem:[#allocation3 + $0x8] sm:$0xff]
          %v2416 = vld [vmem:[#allocation3 + $0x10] sm:$0xff]
          %v2417 = vld [vmem:[#allocation3 + $0x18] sm:$0xff]
          %v2418 = vld [vmem:[#allocation3 + $0x20] sm:$0xff]
          %v2419 = vld [vmem:[#allocation3 + $0x28] sm:$0xff]
          %v2420 = vld [vmem:[#allocation3 + $0x30] sm:$0xff]
          %v2421 = vld [vmem:[#allocation3 + $0x38] sm:$0xff]
          %v2422 = vld [vmem:[#allocation3 + $0x40] sm:$0xff]
          %v2423 = vld [vmem:[#allocation3 + $0x48] sm:$0xff]
          %v2424 = vld [vmem:[#allocation3 + $0x50] sm:$0xff]
          %v2425 = vld [vmem:[#allocation3 + $0x58] sm:$0xff]
          %v2426 = vld [vmem:[#allocation3 + $0x60] sm:$0xff]
          %v2427 = vld [vmem:[#allocation3 + $0x68] sm:$0xff]
          %v2428 = vld [vmem:[#allocation3 + $0x70] sm:$0xff]
          %v2429 = vld [vmem:[#allocation3 + $0x78] sm:$0xff]
          %v2430 = vld [vmem:[#allocation3 + $0x80] sm:$0xff]
          %v2431 = vld [vmem:[#allocation3 + $0x88] sm:$0xff]
          %v2432 = vld [vmem:[#allocation3 + $0x90] sm:$0xff]
          %v2433 = vld [vmem:[#allocation3 + $0x98] sm:$0xff]
          %v2434 = vld [vmem:[#allocation3 + $0xa0] sm:$0xff]
          %v2435 = vld [vmem:[#allocation3 + $0xa8] sm:$0xff]
          %v2436 = vld [vmem:[#allocation3 + $0xb0] sm:$0xff]
          %v2437 = vld [vmem:[#allocation3 + $0xb8] sm:$0xff]
          %v2438 = vld [vmem:[#allocation3 + $0xc0] sm:$0xff]
          %v2439 = vld [vmem:[#allocation3 + $0xc8] sm:$0xff]
          %v2440 = vld [vmem:[#allocation3 + $0xd0] sm:$0xff]
          %v2441 = vld [vmem:[#allocation3 + $0xd8] sm:$0xff]
          %v2442 = vld [vmem:[#allocation3 + $0xe0] sm:$0xff]
          %v2443 = vld [vmem:[#allocation3 + $0xe8] sm:$0xff]
          %v2444 = vld [vmem:[#allocation3 + $0xf0] sm:$0xff]
          %v2445 = vld [vmem:[#allocation3 + $0xf8] sm:$0xff]
          %v2446 = vadd.f32 %v2414, %v2256
          %v2447 = vadd.f32 %v2415, %v2261
          %v2448 = vadd.f32 %v2416, %v2266
          %v2449 = vadd.f32 %v2417, %v2271
          %v2450 = vadd.f32 %v2418, %v2276
          %v2451 = vadd.f32 %v2419, %v2281
          %v2452 = vadd.f32 %v2420, %v2286
          %v2453 = vadd.f32 %v2421, %v2291
          %v2454 = vadd.f32 %v2422, %v2296
          %v2455 = vadd.f32 %v2423, %v2301
          %v2456 = vadd.f32 %v2424, %v2306
          %v2457 = vadd.f32 %v2425, %v2311
          %v2458 = vadd.f32 %v2426, %v2316
          %v2459 = vadd.f32 %v2427, %v2321
          %v2460 = vadd.f32 %v2428, %v2326
          %v2461 = vadd.f32 %v2429, %v2331
          %v2462 = vadd.f32 %v2430, %v2336
          %v2463 = vadd.f32 %v2431, %v2341
          %v2464 = vadd.f32 %v2432, %v2346
          %v2465 = vadd.f32 %v2433, %v2351
          %v2466 = vadd.f32 %v2434, %v2356
          %v2467 = vadd.f32 %v2435, %v2361
          %v2468 = vadd.f32 %v2436, %v2366
          %v2469 = vadd.f32 %v2437, %v2371
          %v2470 = vadd.f32 %v2438, %v2376
          %v2471 = vadd.f32 %v2439, %v2381
          %v2472 = vadd.f32 %v2440, %v2386
          %v2473 = vadd.f32 %v2441, %v2391
          %v2474 = vadd.f32 %v2442, %v2396
          %v2475 = vadd.f32 %v2443, %v2401
          %v2476 = vadd.f32 %v2444, %v2406
          %v2477 = vadd.f32 %v2445, %v2411
          %2478 = vst [vmem:[#allocation3] sm:$0xff] %v2446
          %2479 = vst [vmem:[#allocation3 + $0x8] sm:$0xff] %v2447
          %2480 = vst [vmem:[#allocation3 + $0x10] sm:$0xff] %v2448
          %2481 = vst [vmem:[#allocation3 + $0x18] sm:$0xff] %v2449
          %2482 = vst [vmem:[#allocation3 + $0x20] sm:$0xff] %v2450
          %2483 = vst [vmem:[#allocation3 + $0x28] sm:$0xff] %v2451
          %2484 = vst [vmem:[#allocation3 + $0x30] sm:$0xff] %v2452
          %2485 = vst [vmem:[#allocation3 + $0x38] sm:$0xff] %v2453
          %2486 = vst [vmem:[#allocation3 + $0x40] sm:$0xff] %v2454
          %2487 = vst [vmem:[#allocation3 + $0x48] sm:$0xff] %v2455
          %2488 = vst [vmem:[#allocation3 + $0x50] sm:$0xff] %v2456
          %2489 = vst [vmem:[#allocation3 + $0x58] sm:$0xff] %v2457
          %2490 = vst [vmem:[#allocation3 + $0x60] sm:$0xff] %v2458
          %2491 = vst [vmem:[#allocation3 + $0x68] sm:$0xff] %v2459
          %2492 = vst [vmem:[#allocation3 + $0x70] sm:$0xff] %v2460
          %2493 = vst [vmem:[#allocation3 + $0x78] sm:$0xff] %v2461
          %2494 = vst [vmem:[#allocation3 + $0x80] sm:$0xff] %v2462
          %2495 = vst [vmem:[#allocation3 + $0x88] sm:$0xff] %v2463
          %2496 = vst [vmem:[#allocation3 + $0x90] sm:$0xff] %v2464
          %2497 = vst [vmem:[#allocation3 + $0x98] sm:$0xff] %v2465
          %2498 = vst [vmem:[#allocation3 + $0xa0] sm:$0xff] %v2466
          %2499 = vst [vmem:[#allocation3 + $0xa8] sm:$0xff] %v2467
          %2500 = vst [vmem:[#allocation3 + $0xb0] sm:$0xff] %v2468
          %2501 = vst [vmem:[#allocation3 + $0xb8] sm:$0xff] %v2469
          %2502 = vst [vmem:[#allocation3 + $0xc0] sm:$0xff] %v2470
          %2503 = vst [vmem:[#allocation3 + $0xc8] sm:$0xff] %v2471
          %2504 = vst [vmem:[#allocation3 + $0xd0] sm:$0xff] %v2472
          %2505 = vst [vmem:[#allocation3 + $0xd8] sm:$0xff] %v2473
          %2506 = vst [vmem:[#allocation3 + $0xe0] sm:$0xff] %v2474
          %2507 = vst [vmem:[#allocation3 + $0xe8] sm:$0xff] %v2475
          %2508 = vst [vmem:[#allocation3 + $0xf0] sm:$0xff] %v2476
          %2509 = vst [vmem:[#allocation3 + $0xf8] sm:$0xff] %v2477
          %s2510 = scalar_lea.vmem [#allocation2], 64
          %v2511 = vld [vmem:[%s2510 + $0x7] sm:$0xff]
          %v2512 = vld [vmem:[%s2510 + $0xf] sm:$0xff]
          %v2513 = vld [vmem:[%s2510 + $0x27] sm:$0xff]
          %v2514 = vld [vmem:[%s2510 + $0x2f] sm:$0xff]
          %v2515 = vld [vmem:[%s2510 + $0x47] sm:$0xff]
          %v2516 = vld [vmem:[%s2510 + $0x4f] sm:$0xff]
          %v2517 = vld [vmem:[%s2510 + $0x67] sm:$0xff]
          %v2518 = vld [vmem:[%s2510 + $0x6f] sm:$0xff]
          %v2519 = vld [vmem:[%s2510 + $0x87] sm:$0xff]
          %v2520 = vld [vmem:[%s2510 + $0x8f] sm:$0xff]
          %v2521 = vld [vmem:[%s2510 + $0xa7] sm:$0xff]
          %v2522 = vld [vmem:[%s2510 + $0xaf] sm:$0xff]
          %v2523 = vld [vmem:[%s2510 + $0xc7] sm:$0xff]
          %v2524 = vld [vmem:[%s2510 + $0xcf] sm:$0xff]
          %v2525 = vld [vmem:[%s2510 + $0xe7] sm:$0xff]
          %v2526 = vld [vmem:[%s2510 + $0xef] sm:$0xff]
          %v2527 = vld [vmem:[%s2510 + $0x107] sm:$0xff]
          %v2528 = vld [vmem:[%s2510 + $0x10f] sm:$0xff]
          %v2529 = vld [vmem:[%s2510 + $0x127] sm:$0xff]
          %v2530 = vld [vmem:[%s2510 + $0x12f] sm:$0xff]
          %v2531 = vld [vmem:[%s2510 + $0x147] sm:$0xff]
          %v2532 = vld [vmem:[%s2510 + $0x14f] sm:$0xff]
          %v2533 = vld [vmem:[%s2510 + $0x167] sm:$0xff]
          %v2534 = vld [vmem:[%s2510 + $0x16f] sm:$0xff]
          %v2535 = vld [vmem:[%s2510 + $0x187] sm:$0xff]
          %v2536 = vld [vmem:[%s2510 + $0x18f] sm:$0xff]
          %v2537 = vld [vmem:[%s2510 + $0x1a7] sm:$0xff]
          %v2538 = vld [vmem:[%s2510 + $0x1af] sm:$0xff]
          %v2539 = vld [vmem:[%s2510 + $0x1c7] sm:$0xff]
          %v2540 = vld [vmem:[%s2510 + $0x1cf] sm:$0xff]
          %v2541 = vld [vmem:[%s2510 + $0x1e7] sm:$0xff]
          %v2542 = vld [vmem:[%s2510 + $0x1ef] sm:$0xff]
          %s2543 = scalar_lea.vmem [#allocation9], 768
          %v2544 = vld [vmem:[%s2543] sm:$0xff]
          %v2545 = vld [vmem:[%s2543 + $0x8] sm:$0xff]
          %v2546 = vld [vmem:[%s2543 + $0x10] sm:$0xff]
          %v2547 = vld [vmem:[%s2543 + $0x18] sm:$0xff]
          %v2548 = vld [vmem:[%s2543 + $0x20] sm:$0xff]
          %v2549 = vld [vmem:[%s2543 + $0x28] sm:$0xff]
          %v2550 = vld [vmem:[%s2543 + $0x30] sm:$0xff]
          %v2551 = vld [vmem:[%s2543 + $0x38] sm:$0xff]
          %v2552 = vld [vmem:[%s2543 + $0x40] sm:$0xff]
          %v2553 = vld [vmem:[%s2543 + $0x48] sm:$0xff]
          %v2554 = vld [vmem:[%s2543 + $0x50] sm:$0xff]
          %v2555 = vld [vmem:[%s2543 + $0x58] sm:$0xff]
          %v2556 = vld [vmem:[%s2543 + $0x60] sm:$0xff]
          %v2557 = vld [vmem:[%s2543 + $0x68] sm:$0xff]
          %v2558 = vld [vmem:[%s2543 + $0x70] sm:$0xff]
          %v2559 = vld [vmem:[%s2543 + $0x78] sm:$0xff]
          %2560 = vmatprep.subr.mxu0 0.0
          %2561 = vmatpush1.msra.mxu0 %v2544
          %2562 = vmatprep.subr.mxu0 0.0
          %2563 = vmatpush1.msra.mxu0 %v2545
          %2564 = vmatprep.subr.mxu0 0.0
          %2565 = vmatpush1.msra.mxu0 %v2546
          %2566 = vmatprep.subr.mxu0 0.0
          %2567 = vmatpush1.msra.mxu0 %v2547
          %2568 = vmatprep.subr.mxu0 0.0
          %2569 = vmatpush1.msra.mxu0 %v2548
          %2570 = vmatprep.subr.mxu0 0.0
          %2571 = vmatpush1.msra.mxu0 %v2549
          %2572 = vmatprep.subr.mxu0 0.0
          %2573 = vmatpush1.msra.mxu0 %v2550
          %2574 = vmatprep.subr.mxu0 0.0
          %2575 = vmatpush1.msra.mxu0 %v2551
          %2576 = vmatprep.subr.mxu0 0.0
          %2577 = vmatpush1.msra.mxu0 %v2552
          %2578 = vmatprep.subr.mxu0 0.0
          %2579 = vmatpush1.msra.mxu0 %v2553
          %2580 = vmatprep.subr.mxu0 0.0
          %2581 = vmatpush1.msra.mxu0 %v2554
          %2582 = vmatprep.subr.mxu0 0.0
          %2583 = vmatpush1.msra.mxu0 %v2555
          %2584 = vmatprep.subr.mxu0 0.0
          %2585 = vmatpush1.msra.mxu0 %v2556
          %2586 = vmatprep.subr.mxu0 0.0
          %2587 = vmatpush1.msra.mxu0 %v2557
          %2588 = vmatprep.subr.mxu0 0.0
          %2589 = vmatpush1.msra.mxu0 %v2558
          %2590 = vmatprep.subr.mxu0 0.0
          %2591 = vmatpush1.msra.mxu0 %v2559
          %2592 = vmatprep.subr.mxu0 0.0
          %2593 = vmatpush1.msra.mxu0 0.0
          %2594 = vmatprep.subr.mxu0 0.0
          %2595 = vmatpush1.msra.mxu0 0.0
          %2596 = vmatprep.subr.mxu0 0.0
          %2597 = vmatpush1.msra.mxu0 0.0
          %2598 = vmatprep.subr.mxu0 0.0
          %2599 = vmatpush1.msra.mxu0 0.0
          %2600 = vmatprep.subr.mxu0 0.0
          %2601 = vmatpush1.msra.mxu0 0.0
          %2602 = vmatprep.subr.mxu0 0.0
          %2603 = vmatpush1.msra.mxu0 0.0
          %2604 = vmatprep.subr.mxu0 0.0
          %2605 = vmatpush1.msra.mxu0 0.0
          %2606 = vmatprep.subr.mxu0 0.0
          %2607 = vmatpush1.msra.mxu0 0.0
          %2608 = vmatprep.subr.mxu0 0.0
          %2609 = vmatpush1.msra.mxu0 0.0
          %2610 = vmatprep.subr.mxu0 0.0
          %2611 = vmatpush1.msra.mxu0 0.0
          %2612 = vmatprep.subr.mxu0 0.0
          %2613 = vmatpush1.msra.mxu0 0.0
          %2614 = vmatprep.subr.mxu0 0.0
          %2615 = vmatpush1.msra.mxu0 0.0
          %2616 = vmatprep.subr.mxu0 0.0
          %2617 = vmatpush1.msra.mxu0 0.0
          %2618 = vmatprep.subr.mxu0 0.0
          %2619 = vmatpush1.msra.mxu0 0.0
          %2620 = vmatprep.subr.mxu0 0.0
          %2621 = vmatpush1.msra.mxu0 0.0
          %2622 = vmatprep.subr.mxu0 0.0
          %2623 = vmatpush1.msra.mxu0 0.0
          %2624 = vmatprep.mubr.f32.mxu0 0.0
          %2625 = vmatmul.mubr.f32.gmra.mrb[0].mxu0 %v2511
          %v2626 = vpop.f32.mrb[0].mxu0
          %v2627 = vadd.f32 0.0, %v2626
          %v2628 = vpop.f32.mrb[0].mxu0
          %2629 = vmatprep.mubr.f32.mxu0 0.0
          %2630 = vmatmul.mubr.f32.gmra.mrb[0].mxu0 %v2512
          %v2631 = vpop.f32.mrb[0].mxu0
          %v2632 = vadd.f32 0.0, %v2631
          %v2633 = vpop.f32.mrb[0].mxu0
          %2634 = vmatprep.mubr.f32.mxu0 0.0
          %2635 = vmatmul.mubr.f32.gmra.mrb[0].mxu0 %v2513
          %v2636 = vpop.f32.mrb[0].mxu0
          %v2637 = vadd.f32 0.0, %v2636
          %v2638 = vpop.f32.mrb[0].mxu0
          %2639 = vmatprep.mubr.f32.mxu0 0.0
          %2640 = vmatmul.mubr.f32.gmra.mrb[0].mxu0 %v2514
          %v2641 = vpop.f32.mrb[0].mxu0
          %v2642 = vadd.f32 0.0, %v2641
          %v2643 = vpop.f32.mrb[0].mxu0
          %2644 = vmatprep.mubr.f32.mxu0 0.0
          %2645 = vmatmul.mubr.f32.gmra.mrb[0].mxu0 %v2515
          %v2646 = vpop.f32.mrb[0].mxu0
          %v2647 = vadd.f32 0.0, %v2646
          %v2648 = vpop.f32.mrb[0].mxu0
          %2649 = vmatprep.mubr.f32.mxu0 0.0
          %2650 = vmatmul.mubr.f32.gmra.mrb[0].mxu0 %v2516
          %v2651 = vpop.f32.mrb[0].mxu0
          %v2652 = vadd.f32 0.0, %v2651
          %v2653 = vpop.f32.mrb[0].mxu0
          %2654 = vmatprep.mubr.f32.mxu0 0.0
          %2655 = vmatmul.mubr.f32.gmra.mrb[0].mxu0 %v2517
          %v2656 = vpop.f32.mrb[0].mxu0
          %v2657 = vadd.f32 0.0, %v2656
          %v2658 = vpop.f32.mrb[0].mxu0
          %2659 = vmatprep.mubr.f32.mxu0 0.0
          %2660 = vmatmul.mubr.f32.gmra.mrb[0].mxu0 %v2518
          %v2661 = vpop.f32.mrb[0].mxu0
          %v2662 = vadd.f32 0.0, %v2661
          %v2663 = vpop.f32.mrb[0].mxu0
          %2664 = vmatprep.mubr.f32.mxu0 0.0
          %2665 = vmatmul.mubr.f32.gmra.mrb[0].mxu0 %v2519
          %v2666 = vpop.f32.mrb[0].mxu0
          %v2667 = vadd.f32 0.0, %v2666
          %v2668 = vpop.f32.mrb[0].mxu0
          %2669 = vmatprep.mubr.f32.mxu0 0.0
          %2670 = vmatmul.mubr.f32.gmra.mrb[0].mxu0 %v2520
          %v2671 = vpop.f32.mrb[0].mxu0
          %v2672 = vadd.f32 0.0, %v2671
          %v2673 = vpop.f32.mrb[0].mxu0
          %2674 = vmatprep.mubr.f32.mxu0 0.0
          %2675 = vmatmul.mubr.f32.gmra.mrb[0].mxu0 %v2521
          %v2676 = vpop.f32.mrb[0].mxu0
          %v2677 = vadd.f32 0.0, %v2676
          %v2678 = vpop.f32.mrb[0].mxu0
          %2679 = vmatprep.mubr.f32.mxu0 0.0
          %2680 = vmatmul.mubr.f32.gmra.mrb[0].mxu0 %v2522
          %v2681 = vpop.f32.mrb[0].mxu0
          %v2682 = vadd.f32 0.0, %v2681
          %v2683 = vpop.f32.mrb[0].mxu0
          %2684 = vmatprep.mubr.f32.mxu0 0.0
          %2685 = vmatmul.mubr.f32.gmra.mrb[0].mxu0 %v2523
          %v2686 = vpop.f32.mrb[0].mxu0
          %v2687 = vadd.f32 0.0, %v2686
          %v2688 = vpop.f32.mrb[0].mxu0
          %2689 = vmatprep.mubr.f32.mxu0 0.0
          %2690 = vmatmul.mubr.f32.gmra.mrb[0].mxu0 %v2524
          %v2691 = vpop.f32.mrb[0].mxu0
          %v2692 = vadd.f32 0.0, %v2691
          %v2693 = vpop.f32.mrb[0].mxu0
          %2694 = vmatprep.mubr.f32.mxu0 0.0
          %2695 = vmatmul.mubr.f32.gmra.mrb[0].mxu0 %v2525
          %v2696 = vpop.f32.mrb[0].mxu0
          %v2697 = vadd.f32 0.0, %v2696
          %v2698 = vpop.f32.mrb[0].mxu0
          %2699 = vmatprep.mubr.f32.mxu0 0.0
          %2700 = vmatmul.mubr.f32.gmra.mrb[0].mxu0 %v2526
          %v2701 = vpop.f32.mrb[0].mxu0
          %v2702 = vadd.f32 0.0, %v2701
          %v2703 = vpop.f32.mrb[0].mxu0
          %2704 = vmatprep.mubr.f32.mxu0 0.0
          %2705 = vmatmul.mubr.f32.gmra.mrb[0].mxu0 %v2527
          %v2706 = vpop.f32.mrb[0].mxu0
          %v2707 = vadd.f32 0.0, %v2706
          %v2708 = vpop.f32.mrb[0].mxu0
          %2709 = vmatprep.mubr.f32.mxu0 0.0
          %2710 = vmatmul.mubr.f32.gmra.mrb[0].mxu0 %v2528
          %v2711 = vpop.f32.mrb[0].mxu0
          %v2712 = vadd.f32 0.0, %v2711
          %v2713 = vpop.f32.mrb[0].mxu0
          %2714 = vmatprep.mubr.f32.mxu0 0.0
          %2715 = vmatmul.mubr.f32.gmra.mrb[0].mxu0 %v2529
          %v2716 = vpop.f32.mrb[0].mxu0
          %v2717 = vadd.f32 0.0, %v2716
          %v2718 = vpop.f32.mrb[0].mxu0
          %2719 = vmatprep.mubr.f32.mxu0 0.0
          %2720 = vmatmul.mubr.f32.gmra.mrb[0].mxu0 %v2530
          %v2721 = vpop.f32.mrb[0].mxu0
          %v2722 = vadd.f32 0.0, %v2721
          %v2723 = vpop.f32.mrb[0].mxu0
          %2724 = vmatprep.mubr.f32.mxu0 0.0
          %2725 = vmatmul.mubr.f32.gmra.mrb[0].mxu0 %v2531
          %v2726 = vpop.f32.mrb[0].mxu0
          %v2727 = vadd.f32 0.0, %v2726
          %v2728 = vpop.f32.mrb[0].mxu0
          %2729 = vmatprep.mubr.f32.mxu0 0.0
          %2730 = vmatmul.mubr.f32.gmra.mrb[0].mxu0 %v2532
          %v2731 = vpop.f32.mrb[0].mxu0
          %v2732 = vadd.f32 0.0, %v2731
          %v2733 = vpop.f32.mrb[0].mxu0
          %2734 = vmatprep.mubr.f32.mxu0 0.0
          %2735 = vmatmul.mubr.f32.gmra.mrb[0].mxu0 %v2533
          %v2736 = vpop.f32.mrb[0].mxu0
          %v2737 = vadd.f32 0.0, %v2736
          %v2738 = vpop.f32.mrb[0].mxu0
          %2739 = vmatprep.mubr.f32.mxu0 0.0
          %2740 = vmatmul.mubr.f32.gmra.mrb[0].mxu0 %v2534
          %v2741 = vpop.f32.mrb[0].mxu0
          %v2742 = vadd.f32 0.0, %v2741
          %v2743 = vpop.f32.mrb[0].mxu0
          %2744 = vmatprep.mubr.f32.mxu0 0.0
          %2745 = vmatmul.mubr.f32.gmra.mrb[0].mxu0 %v2535
          %v2746 = vpop.f32.mrb[0].mxu0
          %v2747 = vadd.f32 0.0, %v2746
          %v2748 = vpop.f32.mrb[0].mxu0
          %2749 = vmatprep.mubr.f32.mxu0 0.0
          %2750 = vmatmul.mubr.f32.gmra.mrb[0].mxu0 %v2536
          %v2751 = vpop.f32.mrb[0].mxu0
          %v2752 = vadd.f32 0.0, %v2751
          %v2753 = vpop.f32.mrb[0].mxu0
          %2754 = vmatprep.mubr.f32.mxu0 0.0
          %2755 = vmatmul.mubr.f32.gmra.mrb[0].mxu0 %v2537
          %v2756 = vpop.f32.mrb[0].mxu0
          %v2757 = vadd.f32 0.0, %v2756
          %v2758 = vpop.f32.mrb[0].mxu0
          %2759 = vmatprep.mubr.f32.mxu0 0.0
          %2760 = vmatmul.mubr.f32.gmra.mrb[0].mxu0 %v2538
          %v2761 = vpop.f32.mrb[0].mxu0
          %v2762 = vadd.f32 0.0, %v2761
          %v2763 = vpop.f32.mrb[0].mxu0
          %2764 = vmatprep.mubr.f32.mxu0 0.0
          %2765 = vmatmul.mubr.f32.gmra.mrb[0].mxu0 %v2539
          %v2766 = vpop.f32.mrb[0].mxu0
          %v2767 = vadd.f32 0.0, %v2766
          %v2768 = vpop.f32.mrb[0].mxu0
          %2769 = vmatprep.mubr.f32.mxu0 0.0
          %2770 = vmatmul.mubr.f32.gmra.mrb[0].mxu0 %v2540
          %v2771 = vpop.f32.mrb[0].mxu0
          %v2772 = vadd.f32 0.0, %v2771
          %v2773 = vpop.f32.mrb[0].mxu0
          %2774 = vmatprep.mubr.f32.mxu0 0.0
          %2775 = vmatmul.mubr.f32.gmra.mrb[0].mxu0 %v2541
          %v2776 = vpop.f32.mrb[0].mxu0
          %v2777 = vadd.f32 0.0, %v2776
          %v2778 = vpop.f32.mrb[0].mxu0
          %2779 = vmatprep.mubr.f32.mxu0 0.0
          %2780 = vmatmul.mubr.f32.gmra.mrb[0].mxu0 %v2542
          %v2781 = vpop.f32.mrb[0].mxu0
          %v2782 = vadd.f32 0.0, %v2781
          %v2783 = vpop.f32.mrb[0].mxu0
          %2784 = vdwg.mxu0
          %v2785 = vld [vmem:[#allocation3] sm:$0xff]
          %v2786 = vld [vmem:[#allocation3 + $0x8] sm:$0xff]
          %v2787 = vld [vmem:[#allocation3 + $0x10] sm:$0xff]
          %v2788 = vld [vmem:[#allocation3 + $0x18] sm:$0xff]
          %v2789 = vld [vmem:[#allocation3 + $0x20] sm:$0xff]
          %v2790 = vld [vmem:[#allocation3 + $0x28] sm:$0xff]
          %v2791 = vld [vmem:[#allocation3 + $0x30] sm:$0xff]
          %v2792 = vld [vmem:[#allocation3 + $0x38] sm:$0xff]
          %v2793 = vld [vmem:[#allocation3 + $0x40] sm:$0xff]
          %v2794 = vld [vmem:[#allocation3 + $0x48] sm:$0xff]
          %v2795 = vld [vmem:[#allocation3 + $0x50] sm:$0xff]
          %v2796 = vld [vmem:[#allocation3 + $0x58] sm:$0xff]
          %v2797 = vld [vmem:[#allocation3 + $0x60] sm:$0xff]
          %v2798 = vld [vmem:[#allocation3 + $0x68] sm:$0xff]
          %v2799 = vld [vmem:[#allocation3 + $0x70] sm:$0xff]
          %v2800 = vld [vmem:[#allocation3 + $0x78] sm:$0xff]
          %v2801 = vld [vmem:[#allocation3 + $0x80] sm:$0xff]
          %v2802 = vld [vmem:[#allocation3 + $0x88] sm:$0xff]
          %v2803 = vld [vmem:[#allocation3 + $0x90] sm:$0xff]
          %v2804 = vld [vmem:[#allocation3 + $0x98] sm:$0xff]
          %v2805 = vld [vmem:[#allocation3 + $0xa0] sm:$0xff]
          %v2806 = vld [vmem:[#allocation3 + $0xa8] sm:$0xff]
          %v2807 = vld [vmem:[#allocation3 + $0xb0] sm:$0xff]
          %v2808 = vld [vmem:[#allocation3 + $0xb8] sm:$0xff]
          %v2809 = vld [vmem:[#allocation3 + $0xc0] sm:$0xff]
          %v2810 = vld [vmem:[#allocation3 + $0xc8] sm:$0xff]
          %v2811 = vld [vmem:[#allocation3 + $0xd0] sm:$0xff]
          %v2812 = vld [vmem:[#allocation3 + $0xd8] sm:$0xff]
          %v2813 = vld [vmem:[#allocation3 + $0xe0] sm:$0xff]
          %v2814 = vld [vmem:[#allocation3 + $0xe8] sm:$0xff]
          %v2815 = vld [vmem:[#allocation3 + $0xf0] sm:$0xff]
          %v2816 = vld [vmem:[#allocation3 + $0xf8] sm:$0xff]
          %v2817 = vadd.f32 %v2785, %v2627
          %v2818 = vadd.f32 %v2786, %v2632
          %v2819 = vadd.f32 %v2787, %v2637
          %v2820 = vadd.f32 %v2788, %v2642
          %v2821 = vadd.f32 %v2789, %v2647
          %v2822 = vadd.f32 %v2790, %v2652
          %v2823 = vadd.f32 %v2791, %v2657
          %v2824 = vadd.f32 %v2792, %v2662
          %v2825 = vadd.f32 %v2793, %v2667
          %v2826 = vadd.f32 %v2794, %v2672
          %v2827 = vadd.f32 %v2795, %v2677
          %v2828 = vadd.f32 %v2796, %v2682
          %v2829 = vadd.f32 %v2797, %v2687
          %v2830 = vadd.f32 %v2798, %v2692
          %v2831 = vadd.f32 %v2799, %v2697
          %v2832 = vadd.f32 %v2800, %v2702
          %v2833 = vadd.f32 %v2801, %v2707
          %v2834 = vadd.f32 %v2802, %v2712
          %v2835 = vadd.f32 %v2803, %v2717
          %v2836 = vadd.f32 %v2804, %v2722
          %v2837 = vadd.f32 %v2805, %v2727
          %v2838 = vadd.f32 %v2806, %v2732
          %v2839 = vadd.f32 %v2807, %v2737
          %v2840 = vadd.f32 %v2808, %v2742
          %v2841 = vadd.f32 %v2809, %v2747
          %v2842 = vadd.f32 %v2810, %v2752
          %v2843 = vadd.f32 %v2811, %v2757
          %v2844 = vadd.f32 %v2812, %v2762
          %v2845 = vadd.f32 %v2813, %v2767
          %v2846 = vadd.f32 %v2814, %v2772
          %v2847 = vadd.f32 %v2815, %v2777
          %v2848 = vadd.f32 %v2816, %v2782
          %2849 = vst [vmem:[#allocation3] sm:$0xff] %v2817
          %2850 = vst [vmem:[#allocation3 + $0x8] sm:$0xff] %v2818
          %2851 = vst [vmem:[#allocation3 + $0x10] sm:$0xff] %v2819
          %2852 = vst [vmem:[#allocation3 + $0x18] sm:$0xff] %v2820
          %2853 = vst [vmem:[#allocation3 + $0x20] sm:$0xff] %v2821
          %2854 = vst [vmem:[#allocation3 + $0x28] sm:$0xff] %v2822
          %2855 = vst [vmem:[#allocation3 + $0x30] sm:$0xff] %v2823
          %2856 = vst [vmem:[#allocation3 + $0x38] sm:$0xff] %v2824
          %2857 = vst [vmem:[#allocation3 + $0x40] sm:$0xff] %v2825
          %2858 = vst [vmem:[#allocation3 + $0x48] sm:$0xff] %v2826
          %2859 = vst [vmem:[#allocation3 + $0x50] sm:$0xff] %v2827
          %2860 = vst [vmem:[#allocation3 + $0x58] sm:$0xff] %v2828
          %2861 = vst [vmem:[#allocation3 + $0x60] sm:$0xff] %v2829
          %2862 = vst [vmem:[#allocation3 + $0x68] sm:$0xff] %v2830
          %2863 = vst [vmem:[#allocation3 + $0x70] sm:$0xff] %v2831
          %2864 = vst [vmem:[#allocation3 + $0x78] sm:$0xff] %v2832
          %2865 = vst [vmem:[#allocation3 + $0x80] sm:$0xff] %v2833
          %2866 = vst [vmem:[#allocation3 + $0x88] sm:$0xff] %v2834
          %2867 = vst [vmem:[#allocation3 + $0x90] sm:$0xff] %v2835
          %2868 = vst [vmem:[#allocation3 + $0x98] sm:$0xff] %v2836
          %2869 = vst [vmem:[#allocation3 + $0xa0] sm:$0xff] %v2837
          %2870 = vst [vmem:[#allocation3 + $0xa8] sm:$0xff] %v2838
          %2871 = vst [vmem:[#allocation3 + $0xb0] sm:$0xff] %v2839
          %2872 = vst [vmem:[#allocation3 + $0xb8] sm:$0xff] %v2840
          %2873 = vst [vmem:[#allocation3 + $0xc0] sm:$0xff] %v2841
          %2874 = vst [vmem:[#allocation3 + $0xc8] sm:$0xff] %v2842
          %2875 = vst [vmem:[#allocation3 + $0xd0] sm:$0xff] %v2843
          %2876 = vst [vmem:[#allocation3 + $0xd8] sm:$0xff] %v2844
          %2877 = vst [vmem:[#allocation3 + $0xe0] sm:$0xff] %v2845
          %2878 = vst [vmem:[#allocation3 + $0xe8] sm:$0xff] %v2846
          %2879 = vst [vmem:[#allocation3 + $0xf0] sm:$0xff] %v2847
          %2880 = vst [vmem:[#allocation3 + $0xf8] sm:$0xff] %v2848
          %v2881 = vld [vmem:[%s2510 + $0x8] sm:$0xff]
          %v2882 = vld [vmem:[%s2510 + $0x10] sm:$0xff]
          %v2883 = vld [vmem:[%s2510 + $0x28] sm:$0xff]
          %v2884 = vld [vmem:[%s2510 + $0x30] sm:$0xff]
          %v2885 = vld [vmem:[%s2510 + $0x48] sm:$0xff]
          %v2886 = vld [vmem:[%s2510 + $0x50] sm:$0xff]
          %v2887 = vld [vmem:[%s2510 + $0x68] sm:$0xff]
          %v2888 = vld [vmem:[%s2510 + $0x70] sm:$0xff]
          %v2889 = vld [vmem:[%s2510 + $0x88] sm:$0xff]
          %v2890 = vld [vmem:[%s2510 + $0x90] sm:$0xff]
          %v2891 = vld [vmem:[%s2510 + $0xa8] sm:$0xff]
          %v2892 = vld [vmem:[%s2510 + $0xb0] sm:$0xff]
          %v2893 = vld [vmem:[%s2510 + $0xc8] sm:$0xff]
          %v2894 = vld [vmem:[%s2510 + $0xd0] sm:$0xff]
          %v2895 = vld [vmem:[%s2510 + $0xe8] sm:$0xff]
          %v2896 = vld [vmem:[%s2510 + $0xf0] sm:$0xff]
          %v2897 = vld [vmem:[%s2510 + $0x108] sm:$0xff]
          %v2898 = vld [vmem:[%s2510 + $0x110] sm:$0xff]
          %v2899 = vld [vmem:[%s2510 + $0x128] sm:$0xff]
          %v2900 = vld [vmem:[%s2510 + $0x130] sm:$0xff]
          %v2901 = vld [vmem:[%s2510 + $0x148] sm:$0xff]
          %v2902 = vld [vmem:[%s2510 + $0x150] sm:$0xff]
          %v2903 = vld [vmem:[%s2510 + $0x168] sm:$0xff]
          %v2904 = vld [vmem:[%s2510 + $0x170] sm:$0xff]
          %v2905 = vld [vmem:[%s2510 + $0x188] sm:$0xff]
          %v2906 = vld [vmem:[%s2510 + $0x190] sm:$0xff]
          %v2907 = vld [vmem:[%s2510 + $0x1a8] sm:$0xff]
          %v2908 = vld [vmem:[%s2510 + $0x1b0] sm:$0xff]
          %v2909 = vld [vmem:[%s2510 + $0x1c8] sm:$0xff]
          %v2910 = vld [vmem:[%s2510 + $0x1d0] sm:$0xff]
          %v2911 = vld [vmem:[%s2510 + $0x1e8] sm:$0xff]
          %v2912 = vld [vmem:[%s2510 + $0x1f0] sm:$0xff]
          %s2913 = scalar_lea.vmem [#allocation9], 896
          %v2914 = vld [vmem:[%s2913] sm:$0xff]
          %v2915 = vld [vmem:[%s2913 + $0x8] sm:$0xff]
          %v2916 = vld [vmem:[%s2913 + $0x10] sm:$0xff]
          %v2917 = vld [vmem:[%s2913 + $0x18] sm:$0xff]
          %v2918 = vld [vmem:[%s2913 + $0x20] sm:$0xff]
          %v2919 = vld [vmem:[%s2913 + $0x28] sm:$0xff]
          %v2920 = vld [vmem:[%s2913 + $0x30] sm:$0xff]
          %v2921 = vld [vmem:[%s2913 + $0x38] sm:$0xff]
          %v2922 = vld [vmem:[%s2913 + $0x40] sm:$0xff]
          %v2923 = vld [vmem:[%s2913 + $0x48] sm:$0xff]
          %v2924 = vld [vmem:[%s2913 + $0x50] sm:$0xff]
          %v2925 = vld [vmem:[%s2913 + $0x58] sm:$0xff]
          %v2926 = vld [vmem:[%s2913 + $0x60] sm:$0xff]
          %v2927 = vld [vmem:[%s2913 + $0x68] sm:$0xff]
          %v2928 = vld [vmem:[%s2913 + $0x70] sm:$0xff]
          %v2929 = vld [vmem:[%s2913 + $0x78] sm:$0xff]
          %2930 = vmatprep.subr.mxu0 0.0
          %2931 = vmatpush1.msra.mxu0 %v2914
          %2932 = vmatprep.subr.mxu0 0.0
          %2933 = vmatpush1.msra.mxu0 %v2915
          %2934 = vmatprep.subr.mxu0 0.0
          %2935 = vmatpush1.msra.mxu0 %v2916
          %2936 = vmatprep.subr.mxu0 0.0
          %2937 = vmatpush1.msra.mxu0 %v2917
          %2938 = vmatprep.subr.mxu0 0.0
          %2939 = vmatpush1.msra.mxu0 %v2918
          %2940 = vmatprep.subr.mxu0 0.0
          %2941 = vmatpush1.msra.mxu0 %v2919
          %2942 = vmatprep.subr.mxu0 0.0
          %2943 = vmatpush1.msra.mxu0 %v2920
          %2944 = vmatprep.subr.mxu0 0.0
          %2945 = vmatpush1.msra.mxu0 %v2921
          %2946 = vmatprep.subr.mxu0 0.0
          %2947 = vmatpush1.msra.mxu0 %v2922
          %2948 = vmatprep.subr.mxu0 0.0
          %2949 = vmatpush1.msra.mxu0 %v2923
          %2950 = vmatprep.subr.mxu0 0.0
          %2951 = vmatpush1.msra.mxu0 %v2924
          %2952 = vmatprep.subr.mxu0 0.0
          %2953 = vmatpush1.msra.mxu0 %v2925
          %2954 = vmatprep.subr.mxu0 0.0
          %2955 = vmatpush1.msra.mxu0 %v2926
          %2956 = vmatprep.subr.mxu0 0.0
          %2957 = vmatpush1.msra.mxu0 %v2927
          %2958 = vmatprep.subr.mxu0 0.0
          %2959 = vmatpush1.msra.mxu0 %v2928
          %2960 = vmatprep.subr.mxu0 0.0
          %2961 = vmatpush1.msra.mxu0 %v2929
          %2962 = vmatprep.subr.mxu0 0.0
          %2963 = vmatpush1.msra.mxu0 0.0
          %2964 = vmatprep.subr.mxu0 0.0
          %2965 = vmatpush1.msra.mxu0 0.0
          %2966 = vmatprep.subr.mxu0 0.0
          %2967 = vmatpush1.msra.mxu0 0.0
          %2968 = vmatprep.subr.mxu0 0.0
          %2969 = vmatpush1.msra.mxu0 0.0
          %2970 = vmatprep.subr.mxu0 0.0
          %2971 = vmatpush1.msra.mxu0 0.0
          %2972 = vmatprep.subr.mxu0 0.0
          %2973 = vmatpush1.msra.mxu0 0.0
          %2974 = vmatprep.subr.mxu0 0.0
          %2975 = vmatpush1.msra.mxu0 0.0
          %2976 = vmatprep.subr.mxu0 0.0
          %2977 = vmatpush1.msra.mxu0 0.0
          %2978 = vmatprep.subr.mxu0 0.0
          %2979 = vmatpush1.msra.mxu0 0.0
          %2980 = vmatprep.subr.mxu0 0.0
          %2981 = vmatpush1.msra.mxu0 0.0
          %2982 = vmatprep.subr.mxu0 0.0
          %2983 = vmatpush1.msra.mxu0 0.0
          %2984 = vmatprep.subr.mxu0 0.0
          %2985 = vmatpush1.msra.mxu0 0.0
          %2986 = vmatprep.subr.mxu0 0.0
          %2987 = vmatpush1.msra.mxu0 0.0
          %2988 = vmatprep.subr.mxu0 0.0
          %2989 = vmatpush1.msra.mxu0 0.0
          %2990 = vmatprep.subr.mxu0 0.0
          %2991 = vmatpush1.msra.mxu0 0.0
          %2992 = vmatprep.subr.mxu0 0.0
          %2993 = vmatpush1.msra.mxu0 0.0
          %2994 = vmatprep.mubr.f32.mxu0 0.0
          %2995 = vmatmul.mubr.f32.gmra.mrb[0].mxu0 %v2881
          %v2996 = vpop.f32.mrb[0].mxu0
          %v2997 = vadd.f32 0.0, %v2996
          %v2998 = vpop.f32.mrb[0].mxu0
          %2999 = vmatprep.mubr.f32.mxu0 0.0
          %3000 = vmatmul.mubr.f32.gmra.mrb[0].mxu0 %v2882
          %v3001 = vpop.f32.mrb[0].mxu0
          %v3002 = vadd.f32 0.0, %v3001
          %v3003 = vpop.f32.mrb[0].mxu0
          %3004 = vmatprep.mubr.f32.mxu0 0.0
          %3005 = vmatmul.mubr.f32.gmra.mrb[0].mxu0 %v2883
          %v3006 = vpop.f32.mrb[0].mxu0
          %v3007 = vadd.f32 0.0, %v3006
          %v3008 = vpop.f32.mrb[0].mxu0
          %3009 = vmatprep.mubr.f32.mxu0 0.0
          %3010 = vmatmul.mubr.f32.gmra.mrb[0].mxu0 %v2884
          %v3011 = vpop.f32.mrb[0].mxu0
          %v3012 = vadd.f32 0.0, %v3011
          %v3013 = vpop.f32.mrb[0].mxu0
          %3014 = vmatprep.mubr.f32.mxu0 0.0
          %3015 = vmatmul.mubr.f32.gmra.mrb[0].mxu0 %v2885
          %v3016 = vpop.f32.mrb[0].mxu0
          %v3017 = vadd.f32 0.0, %v3016
          %v3018 = vpop.f32.mrb[0].mxu0
          %3019 = vmatprep.mubr.f32.mxu0 0.0
          %3020 = vmatmul.mubr.f32.gmra.mrb[0].mxu0 %v2886
          %v3021 = vpop.f32.mrb[0].mxu0
          %v3022 = vadd.f32 0.0, %v3021
          %v3023 = vpop.f32.mrb[0].mxu0
          %3024 = vmatprep.mubr.f32.mxu0 0.0
          %3025 = vmatmul.mubr.f32.gmra.mrb[0].mxu0 %v2887
          %v3026 = vpop.f32.mrb[0].mxu0
          %v3027 = vadd.f32 0.0, %v3026
          %v3028 = vpop.f32.mrb[0].mxu0
          %3029 = vmatprep.mubr.f32.mxu0 0.0
          %3030 = vmatmul.mubr.f32.gmra.mrb[0].mxu0 %v2888
          %v3031 = vpop.f32.mrb[0].mxu0
          %v3032 = vadd.f32 0.0, %v3031
          %v3033 = vpop.f32.mrb[0].mxu0
          %3034 = vmatprep.mubr.f32.mxu0 0.0
          %3035 = vmatmul.mubr.f32.gmra.mrb[0].mxu0 %v2889
          %v3036 = vpop.f32.mrb[0].mxu0
          %v3037 = vadd.f32 0.0, %v3036
          %v3038 = vpop.f32.mrb[0].mxu0
          %3039 = vmatprep.mubr.f32.mxu0 0.0
          %3040 = vmatmul.mubr.f32.gmra.mrb[0].mxu0 %v2890
          %v3041 = vpop.f32.mrb[0].mxu0
          %v3042 = vadd.f32 0.0, %v3041
          %v3043 = vpop.f32.mrb[0].mxu0
          %3044 = vmatprep.mubr.f32.mxu0 0.0
          %3045 = vmatmul.mubr.f32.gmra.mrb[0].mxu0 %v2891
          %v3046 = vpop.f32.mrb[0].mxu0
          %v3047 = vadd.f32 0.0, %v3046
          %v3048 = vpop.f32.mrb[0].mxu0
          %3049 = vmatprep.mubr.f32.mxu0 0.0
          %3050 = vmatmul.mubr.f32.gmra.mrb[0].mxu0 %v2892
          %v3051 = vpop.f32.mrb[0].mxu0
          %v3052 = vadd.f32 0.0, %v3051
          %v3053 = vpop.f32.mrb[0].mxu0
          %3054 = vmatprep.mubr.f32.mxu0 0.0
          %3055 = vmatmul.mubr.f32.gmra.mrb[0].mxu0 %v2893
          %v3056 = vpop.f32.mrb[0].mxu0
          %v3057 = vadd.f32 0.0, %v3056
          %v3058 = vpop.f32.mrb[0].mxu0
          %3059 = vmatprep.mubr.f32.mxu0 0.0
          %3060 = vmatmul.mubr.f32.gmra.mrb[0].mxu0 %v2894
          %v3061 = vpop.f32.mrb[0].mxu0
          %v3062 = vadd.f32 0.0, %v3061
          %v3063 = vpop.f32.mrb[0].mxu0
          %3064 = vmatprep.mubr.f32.mxu0 0.0
          %3065 = vmatmul.mubr.f32.gmra.mrb[0].mxu0 %v2895
          %v3066 = vpop.f32.mrb[0].mxu0
          %v3067 = vadd.f32 0.0, %v3066
          %v3068 = vpop.f32.mrb[0].mxu0
          %3069 = vmatprep.mubr.f32.mxu0 0.0
          %3070 = vmatmul.mubr.f32.gmra.mrb[0].mxu0 %v2896
          %v3071 = vpop.f32.mrb[0].mxu0
          %v3072 = vadd.f32 0.0, %v3071
          %v3073 = vpop.f32.mrb[0].mxu0
          %3074 = vmatprep.mubr.f32.mxu0 0.0
          %3075 = vmatmul.mubr.f32.gmra.mrb[0].mxu0 %v2897
          %v3076 = vpop.f32.mrb[0].mxu0
          %v3077 = vadd.f32 0.0, %v3076
          %v3078 = vpop.f32.mrb[0].mxu0
          %3079 = vmatprep.mubr.f32.mxu0 0.0
          %3080 = vmatmul.mubr.f32.gmra.mrb[0].mxu0 %v2898
          %v3081 = vpop.f32.mrb[0].mxu0
          %v3082 = vadd.f32 0.0, %v3081
          %v3083 = vpop.f32.mrb[0].mxu0
          %3084 = vmatprep.mubr.f32.mxu0 0.0
          %3085 = vmatmul.mubr.f32.gmra.mrb[0].mxu0 %v2899
          %v3086 = vpop.f32.mrb[0].mxu0
          %v3087 = vadd.f32 0.0, %v3086
          %v3088 = vpop.f32.mrb[0].mxu0
          %3089 = vmatprep.mubr.f32.mxu0 0.0
          %3090 = vmatmul.mubr.f32.gmra.mrb[0].mxu0 %v2900
          %v3091 = vpop.f32.mrb[0].mxu0
          %v3092 = vadd.f32 0.0, %v3091
          %v3093 = vpop.f32.mrb[0].mxu0
          %3094 = vmatprep.mubr.f32.mxu0 0.0
          %3095 = vmatmul.mubr.f32.gmra.mrb[0].mxu0 %v2901
          %v3096 = vpop.f32.mrb[0].mxu0
          %v3097 = vadd.f32 0.0, %v3096
          %v3098 = vpop.f32.mrb[0].mxu0
          %3099 = vmatprep.mubr.f32.mxu0 0.0
          %3100 = vmatmul.mubr.f32.gmra.mrb[0].mxu0 %v2902
          %v3101 = vpop.f32.mrb[0].mxu0
          %v3102 = vadd.f32 0.0, %v3101
          %v3103 = vpop.f32.mrb[0].mxu0
          %3104 = vmatprep.mubr.f32.mxu0 0.0
          %3105 = vmatmul.mubr.f32.gmra.mrb[0].mxu0 %v2903
          %v3106 = vpop.f32.mrb[0].mxu0
          %v3107 = vadd.f32 0.0, %v3106
          %v3108 = vpop.f32.mrb[0].mxu0
          %3109 = vmatprep.mubr.f32.mxu0 0.0
          %3110 = vmatmul.mubr.f32.gmra.mrb[0].mxu0 %v2904
          %v3111 = vpop.f32.mrb[0].mxu0
          %v3112 = vadd.f32 0.0, %v3111
          %v3113 = vpop.f32.mrb[0].mxu0
          %3114 = vmatprep.mubr.f32.mxu0 0.0
          %3115 = vmatmul.mubr.f32.gmra.mrb[0].mxu0 %v2905
          %v3116 = vpop.f32.mrb[0].mxu0
          %v3117 = vadd.f32 0.0, %v3116
          %v3118 = vpop.f32.mrb[0].mxu0
          %3119 = vmatprep.mubr.f32.mxu0 0.0
          %3120 = vmatmul.mubr.f32.gmra.mrb[0].mxu0 %v2906
          %v3121 = vpop.f32.mrb[0].mxu0
          %v3122 = vadd.f32 0.0, %v3121
          %v3123 = vpop.f32.mrb[0].mxu0
          %3124 = vmatprep.mubr.f32.mxu0 0.0
          %3125 = vmatmul.mubr.f32.gmra.mrb[0].mxu0 %v2907
          %v3126 = vpop.f32.mrb[0].mxu0
          %v3127 = vadd.f32 0.0, %v3126
          %v3128 = vpop.f32.mrb[0].mxu0
          %3129 = vmatprep.mubr.f32.mxu0 0.0
          %3130 = vmatmul.mubr.f32.gmra.mrb[0].mxu0 %v2908
          %v3131 = vpop.f32.mrb[0].mxu0
          %v3132 = vadd.f32 0.0, %v3131
          %v3133 = vpop.f32.mrb[0].mxu0
          %3134 = vmatprep.mubr.f32.mxu0 0.0
          %3135 = vmatmul.mubr.f32.gmra.mrb[0].mxu0 %v2909
          %v3136 = vpop.f32.mrb[0].mxu0
          %v3137 = vadd.f32 0.0, %v3136
          %v3138 = vpop.f32.mrb[0].mxu0
          %3139 = vmatprep.mubr.f32.mxu0 0.0
          %3140 = vmatmul.mubr.f32.gmra.mrb[0].mxu0 %v2910
          %v3141 = vpop.f32.mrb[0].mxu0
          %v3142 = vadd.f32 0.0, %v3141
          %v3143 = vpop.f32.mrb[0].mxu0
          %3144 = vmatprep.mubr.f32.mxu0 0.0
          %3145 = vmatmul.mubr.f32.gmra.mrb[0].mxu0 %v2911
          %v3146 = vpop.f32.mrb[0].mxu0
          %v3147 = vadd.f32 0.0, %v3146
          %v3148 = vpop.f32.mrb[0].mxu0
          %3149 = vmatprep.mubr.f32.mxu0 0.0
          %3150 = vmatmul.mubr.f32.gmra.mrb[0].mxu0 %v2912
          %v3151 = vpop.f32.mrb[0].mxu0
          %v3152 = vadd.f32 0.0, %v3151
          %v3153 = vpop.f32.mrb[0].mxu0
          %3154 = vdwg.mxu0
          %v3155 = vld [vmem:[#allocation3] sm:$0xff]
          %v3156 = vld [vmem:[#allocation3 + $0x8] sm:$0xff]
          %v3157 = vld [vmem:[#allocation3 + $0x10] sm:$0xff]
          %v3158 = vld [vmem:[#allocation3 + $0x18] sm:$0xff]
          %v3159 = vld [vmem:[#allocation3 + $0x20] sm:$0xff]
          %v3160 = vld [vmem:[#allocation3 + $0x28] sm:$0xff]
          %v3161 = vld [vmem:[#allocation3 + $0x30] sm:$0xff]
          %v3162 = vld [vmem:[#allocation3 + $0x38] sm:$0xff]
          %v3163 = vld [vmem:[#allocation3 + $0x40] sm:$0xff]
          %v3164 = vld [vmem:[#allocation3 + $0x48] sm:$0xff]
          %v3165 = vld [vmem:[#allocation3 + $0x50] sm:$0xff]
          %v3166 = vld [vmem:[#allocation3 + $0x58] sm:$0xff]
          %v3167 = vld [vmem:[#allocation3 + $0x60] sm:$0xff]
          %v3168 = vld [vmem:[#allocation3 + $0x68] sm:$0xff]
          %v3169 = vld [vmem:[#allocation3 + $0x70] sm:$0xff]
          %v3170 = vld [vmem:[#allocation3 + $0x78] sm:$0xff]
          %v3171 = vld [vmem:[#allocation3 + $0x80] sm:$0xff]
          %v3172 = vld [vmem:[#allocation3 + $0x88] sm:$0xff]
          %v3173 = vld [vmem:[#allocation3 + $0x90] sm:$0xff]
          %v3174 = vld [vmem:[#allocation3 + $0x98] sm:$0xff]
          %v3175 = vld [vmem:[#allocation3 + $0xa0] sm:$0xff]
          %v3176 = vld [vmem:[#allocation3 + $0xa8] sm:$0xff]
          %v3177 = vld [vmem:[#allocation3 + $0xb0] sm:$0xff]
          %v3178 = vld [vmem:[#allocation3 + $0xb8] sm:$0xff]
          %v3179 = vld [vmem:[#allocation3 + $0xc0] sm:$0xff]
          %v3180 = vld [vmem:[#allocation3 + $0xc8] sm:$0xff]
          %v3181 = vld [vmem:[#allocation3 + $0xd0] sm:$0xff]
          %v3182 = vld [vmem:[#allocation3 + $0xd8] sm:$0xff]
          %v3183 = vld [vmem:[#allocation3 + $0xe0] sm:$0xff]
          %v3184 = vld [vmem:[#allocation3 + $0xe8] sm:$0xff]
          %v3185 = vld [vmem:[#allocation3 + $0xf0] sm:$0xff]
          %v3186 = vld [vmem:[#allocation3 + $0xf8] sm:$0xff]
          %v3187 = vadd.f32 %v3155, %v2997
          %v3188 = vadd.f32 %v3156, %v3002
          %v3189 = vadd.f32 %v3157, %v3007
          %v3190 = vadd.f32 %v3158, %v3012
          %v3191 = vadd.f32 %v3159, %v3017
          %v3192 = vadd.f32 %v3160, %v3022
          %v3193 = vadd.f32 %v3161, %v3027
          %v3194 = vadd.f32 %v3162, %v3032
          %v3195 = vadd.f32 %v3163, %v3037
          %v3196 = vadd.f32 %v3164, %v3042
          %v3197 = vadd.f32 %v3165, %v3047
          %v3198 = vadd.f32 %v3166, %v3052
          %v3199 = vadd.f32 %v3167, %v3057
          %v3200 = vadd.f32 %v3168, %v3062
          %v3201 = vadd.f32 %v3169, %v3067
          %v3202 = vadd.f32 %v3170, %v3072
          %v3203 = vadd.f32 %v3171, %v3077
          %v3204 = vadd.f32 %v3172, %v3082
          %v3205 = vadd.f32 %v3173, %v3087
          %v3206 = vadd.f32 %v3174, %v3092
          %v3207 = vadd.f32 %v3175, %v3097
          %v3208 = vadd.f32 %v3176, %v3102
          %v3209 = vadd.f32 %v3177, %v3107
          %v3210 = vadd.f32 %v3178, %v3112
          %v3211 = vadd.f32 %v3179, %v3117
          %v3212 = vadd.f32 %v3180, %v3122
          %v3213 = vadd.f32 %v3181, %v3127
          %v3214 = vadd.f32 %v3182, %v3132
          %v3215 = vadd.f32 %v3183, %v3137
          %v3216 = vadd.f32 %v3184, %v3142
          %v3217 = vadd.f32 %v3185, %v3147
          %v3218 = vadd.f32 %v3186, %v3152
          %3219 = vst [vmem:[#allocation3] sm:$0xff] %v3187
          %3220 = vst [vmem:[#allocation3 + $0x8] sm:$0xff] %v3188
          %3221 = vst [vmem:[#allocation3 + $0x10] sm:$0xff] %v3189
          %3222 = vst [vmem:[#allocation3 + $0x18] sm:$0xff] %v3190
          %3223 = vst [vmem:[#allocation3 + $0x20] sm:$0xff] %v3191
          %3224 = vst [vmem:[#allocation3 + $0x28] sm:$0xff] %v3192
          %3225 = vst [vmem:[#allocation3 + $0x30] sm:$0xff] %v3193
          %3226 = vst [vmem:[#allocation3 + $0x38] sm:$0xff] %v3194
          %3227 = vst [vmem:[#allocation3 + $0x40] sm:$0xff] %v3195
          %3228 = vst [vmem:[#allocation3 + $0x48] sm:$0xff] %v3196
          %3229 = vst [vmem:[#allocation3 + $0x50] sm:$0xff] %v3197
          %3230 = vst [vmem:[#allocation3 + $0x58] sm:$0xff] %v3198
          %3231 = vst [vmem:[#allocation3 + $0x60] sm:$0xff] %v3199
          %3232 = vst [vmem:[#allocation3 + $0x68] sm:$0xff] %v3200
          %3233 = vst [vmem:[#allocation3 + $0x70] sm:$0xff] %v3201
          %3234 = vst [vmem:[#allocation3 + $0x78] sm:$0xff] %v3202
          %3235 = vst [vmem:[#allocation3 + $0x80] sm:$0xff] %v3203
          %3236 = vst [vmem:[#allocation3 + $0x88] sm:$0xff] %v3204
          %3237 = vst [vmem:[#allocation3 + $0x90] sm:$0xff] %v3205
          %3238 = vst [vmem:[#allocation3 + $0x98] sm:$0xff] %v3206
          %3239 = vst [vmem:[#allocation3 + $0xa0] sm:$0xff] %v3207
          %3240 = vst [vmem:[#allocation3 + $0xa8] sm:$0xff] %v3208
          %3241 = vst [vmem:[#allocation3 + $0xb0] sm:$0xff] %v3209
          %3242 = vst [vmem:[#allocation3 + $0xb8] sm:$0xff] %v3210
          %3243 = vst [vmem:[#allocation3 + $0xc0] sm:$0xff] %v3211
          %3244 = vst [vmem:[#allocation3 + $0xc8] sm:$0xff] %v3212
          %3245 = vst [vmem:[#allocation3 + $0xd0] sm:$0xff] %v3213
          %3246 = vst [vmem:[#allocation3 + $0xd8] sm:$0xff] %v3214
          %3247 = vst [vmem:[#allocation3 + $0xe0] sm:$0xff] %v3215
          %3248 = vst [vmem:[#allocation3 + $0xe8] sm:$0xff] %v3216
          %3249 = vst [vmem:[#allocation3 + $0xf0] sm:$0xff] %v3217
          %3250 = vst [vmem:[#allocation3 + $0xf8] sm:$0xff] %v3218
          %v3251 = vld [vmem:[%s2510 + $0x9] sm:$0xff]
          %v3252 = vld [vmem:[%s2510 + $0x11] sm:$0xff]
          %v3253 = vld [vmem:[%s2510 + $0x29] sm:$0xff]
          %v3254 = vld [vmem:[%s2510 + $0x31] sm:$0xff]
          %v3255 = vld [vmem:[%s2510 + $0x49] sm:$0xff]
          %v3256 = vld [vmem:[%s2510 + $0x51] sm:$0xff]
          %v3257 = vld [vmem:[%s2510 + $0x69] sm:$0xff]
          %v3258 = vld [vmem:[%s2510 + $0x71] sm:$0xff]
          %v3259 = vld [vmem:[%s2510 + $0x89] sm:$0xff]
          %v3260 = vld [vmem:[%s2510 + $0x91] sm:$0xff]
          %v3261 = vld [vmem:[%s2510 + $0xa9] sm:$0xff]
          %v3262 = vld [vmem:[%s2510 + $0xb1] sm:$0xff]
          %v3263 = vld [vmem:[%s2510 + $0xc9] sm:$0xff]
          %v3264 = vld [vmem:[%s2510 + $0xd1] sm:$0xff]
          %v3265 = vld [vmem:[%s2510 + $0xe9] sm:$0xff]
          %v3266 = vld [vmem:[%s2510 + $0xf1] sm:$0xff]
          %v3267 = vld [vmem:[%s2510 + $0x109] sm:$0xff]
          %v3268 = vld [vmem:[%s2510 + $0x111] sm:$0xff]
          %v3269 = vld [vmem:[%s2510 + $0x129] sm:$0xff]
          %v3270 = vld [vmem:[%s2510 + $0x131] sm:$0xff]
          %v3271 = vld [vmem:[%s2510 + $0x149] sm:$0xff]
          %v3272 = vld [vmem:[%s2510 + $0x151] sm:$0xff]
          %v3273 = vld [vmem:[%s2510 + $0x169] sm:$0xff]
          %v3274 = vld [vmem:[%s2510 + $0x171] sm:$0xff]
          %v3275 = vld [vmem:[%s2510 + $0x189] sm:$0xff]
          %v3276 = vld [vmem:[%s2510 + $0x191] sm:$0xff]
          %v3277 = vld [vmem:[%s2510 + $0x1a9] sm:$0xff]
          %v3278 = vld [vmem:[%s2510 + $0x1b1] sm:$0xff]
          %v3279 = vld [vmem:[%s2510 + $0x1c9] sm:$0xff]
          %v3280 = vld [vmem:[%s2510 + $0x1d1] sm:$0xff]
          %v3281 = vld [vmem:[%s2510 + $0x1e9] sm:$0xff]
          %v3282 = vld [vmem:[%s2510 + $0x1f1] sm:$0xff]
          %s3283 = scalar_lea.vmem [#allocation9], 1024
          %v3284 = vld [vmem:[%s3283] sm:$0xff]
          %v3285 = vld [vmem:[%s3283 + $0x8] sm:$0xff]
          %v3286 = vld [vmem:[%s3283 + $0x10] sm:$0xff]
          %v3287 = vld [vmem:[%s3283 + $0x18] sm:$0xff]
          %v3288 = vld [vmem:[%s3283 + $0x20] sm:$0xff]
          %v3289 = vld [vmem:[%s3283 + $0x28] sm:$0xff]
          %v3290 = vld [vmem:[%s3283 + $0x30] sm:$0xff]
          %v3291 = vld [vmem:[%s3283 + $0x38] sm:$0xff]
          %v3292 = vld [vmem:[%s3283 + $0x40] sm:$0xff]
          %v3293 = vld [vmem:[%s3283 + $0x48] sm:$0xff]
          %v3294 = vld [vmem:[%s3283 + $0x50] sm:$0xff]
          %v3295 = vld [vmem:[%s3283 + $0x58] sm:$0xff]
          %v3296 = vld [vmem:[%s3283 + $0x60] sm:$0xff]
          %v3297 = vld [vmem:[%s3283 + $0x68] sm:$0xff]
          %v3298 = vld [vmem:[%s3283 + $0x70] sm:$0xff]
          %v3299 = vld [vmem:[%s3283 + $0x78] sm:$0xff]
          %3300 = vmatprep.subr.mxu0 0.0
          %3301 = vmatpush1.msra.mxu0 %v3284
          %3302 = vmatprep.subr.mxu0 0.0
          %3303 = vmatpush1.msra.mxu0 %v3285
          %3304 = vmatprep.subr.mxu0 0.0
          %3305 = vmatpush1.msra.mxu0 %v3286
          %3306 = vmatprep.subr.mxu0 0.0
          %3307 = vmatpush1.msra.mxu0 %v3287
          %3308 = vmatprep.subr.mxu0 0.0
          %3309 = vmatpush1.msra.mxu0 %v3288
          %3310 = vmatprep.subr.mxu0 0.0
          %3311 = vmatpush1.msra.mxu0 %v3289
          %3312 = vmatprep.subr.mxu0 0.0
          %3313 = vmatpush1.msra.mxu0 %v3290
          %3314 = vmatprep.subr.mxu0 0.0
          %3315 = vmatpush1.msra.mxu0 %v3291
          %3316 = vmatprep.subr.mxu0 0.0
          %3317 = vmatpush1.msra.mxu0 %v3292
          %3318 = vmatprep.subr.mxu0 0.0
          %3319 = vmatpush1.msra.mxu0 %v3293
          %3320 = vmatprep.subr.mxu0 0.0
          %3321 = vmatpush1.msra.mxu0 %v3294
          %3322 = vmatprep.subr.mxu0 0.0
          %3323 = vmatpush1.msra.mxu0 %v3295
          %3324 = vmatprep.subr.mxu0 0.0
          %3325 = vmatpush1.msra.mxu0 %v3296
          %3326 = vmatprep.subr.mxu0 0.0
          %3327 = vmatpush1.msra.mxu0 %v3297
          %3328 = vmatprep.subr.mxu0 0.0
          %3329 = vmatpush1.msra.mxu0 %v3298
          %3330 = vmatprep.subr.mxu0 0.0
          %3331 = vmatpush1.msra.mxu0 %v3299
          %3332 = vmatprep.subr.mxu0 0.0
          %3333 = vmatpush1.msra.mxu0 0.0
          %3334 = vmatprep.subr.mxu0 0.0
          %3335 = vmatpush1.msra.mxu0 0.0
          %3336 = vmatprep.subr.mxu0 0.0
          %3337 = vmatpush1.msra.mxu0 0.0
          %3338 = vmatprep.subr.mxu0 0.0
          %3339 = vmatpush1.msra.mxu0 0.0
          %3340 = vmatprep.subr.mxu0 0.0
          %3341 = vmatpush1.msra.mxu0 0.0
          %3342 = vmatprep.subr.mxu0 0.0
          %3343 = vmatpush1.msra.mxu0 0.0
          %3344 = vmatprep.subr.mxu0 0.0
          %3345 = vmatpush1.msra.mxu0 0.0
          %3346 = vmatprep.subr.mxu0 0.0
          %3347 = vmatpush1.msra.mxu0 0.0
          %3348 = vmatprep.subr.mxu0 0.0
          %3349 = vmatpush1.msra.mxu0 0.0
          %3350 = vmatprep.subr.mxu0 0.0
          %3351 = vmatpush1.msra.mxu0 0.0
          %3352 = vmatprep.subr.mxu0 0.0
          %3353 = vmatpush1.msra.mxu0 0.0
          %3354 = vmatprep.subr.mxu0 0.0
          %3355 = vmatpush1.msra.mxu0 0.0
          %3356 = vmatprep.subr.mxu0 0.0
          %3357 = vmatpush1.msra.mxu0 0.0
          %3358 = vmatprep.subr.mxu0 0.0
          %3359 = vmatpush1.msra.mxu0 0.0
          %3360 = vmatprep.subr.mxu0 0.0
          %3361 = vmatpush1.msra.mxu0 0.0
          %3362 = vmatprep.subr.mxu0 0.0
          %3363 = vmatpush1.msra.mxu0 0.0
          %3364 = vmatprep.mubr.f32.mxu0 0.0
          %3365 = vmatmul.mubr.f32.gmra.mrb[0].mxu0 %v3251
          %v3366 = vpop.f32.mrb[0].mxu0
          %v3367 = vadd.f32 0.0, %v3366
          %v3368 = vpop.f32.mrb[0].mxu0
          %3369 = vmatprep.mubr.f32.mxu0 0.0
          %3370 = vmatmul.mubr.f32.gmra.mrb[0].mxu0 %v3252
          %v3371 = vpop.f32.mrb[0].mxu0
          %v3372 = vadd.f32 0.0, %v3371
          %v3373 = vpop.f32.mrb[0].mxu0
          %3374 = vmatprep.mubr.f32.mxu0 0.0
          %3375 = vmatmul.mubr.f32.gmra.mrb[0].mxu0 %v3253
          %v3376 = vpop.f32.mrb[0].mxu0
          %v3377 = vadd.f32 0.0, %v3376
          %v3378 = vpop.f32.mrb[0].mxu0
          %3379 = vmatprep.mubr.f32.mxu0 0.0
          %3380 = vmatmul.mubr.f32.gmra.mrb[0].mxu0 %v3254
          %v3381 = vpop.f32.mrb[0].mxu0
          %v3382 = vadd.f32 0.0, %v3381
          %v3383 = vpop.f32.mrb[0].mxu0
          %3384 = vmatprep.mubr.f32.mxu0 0.0
          %3385 = vmatmul.mubr.f32.gmra.mrb[0].mxu0 %v3255
          %v3386 = vpop.f32.mrb[0].mxu0
          %v3387 = vadd.f32 0.0, %v3386
          %v3388 = vpop.f32.mrb[0].mxu0
          %3389 = vmatprep.mubr.f32.mxu0 0.0
          %3390 = vmatmul.mubr.f32.gmra.mrb[0].mxu0 %v3256
          %v3391 = vpop.f32.mrb[0].mxu0
          %v3392 = vadd.f32 0.0, %v3391
          %v3393 = vpop.f32.mrb[0].mxu0
          %3394 = vmatprep.mubr.f32.mxu0 0.0
          %3395 = vmatmul.mubr.f32.gmra.mrb[0].mxu0 %v3257
          %v3396 = vpop.f32.mrb[0].mxu0
          %v3397 = vadd.f32 0.0, %v3396
          %v3398 = vpop.f32.mrb[0].mxu0
          %3399 = vmatprep.mubr.f32.mxu0 0.0
          %3400 = vmatmul.mubr.f32.gmra.mrb[0].mxu0 %v3258
          %v3401 = vpop.f32.mrb[0].mxu0
          %v3402 = vadd.f32 0.0, %v3401
          %v3403 = vpop.f32.mrb[0].mxu0
          %3404 = vmatprep.mubr.f32.mxu0 0.0
          %3405 = vmatmul.mubr.f32.gmra.mrb[0].mxu0 %v3259
          %v3406 = vpop.f32.mrb[0].mxu0
          %v3407 = vadd.f32 0.0, %v3406
          %v3408 = vpop.f32.mrb[0].mxu0
          %3409 = vmatprep.mubr.f32.mxu0 0.0
          %3410 = vmatmul.mubr.f32.gmra.mrb[0].mxu0 %v3260
          %v3411 = vpop.f32.mrb[0].mxu0
          %v3412 = vadd.f32 0.0, %v3411
          %v3413 = vpop.f32.mrb[0].mxu0
          %3414 = vmatprep.mubr.f32.mxu0 0.0
          %3415 = vmatmul.mubr.f32.gmra.mrb[0].mxu0 %v3261
          %v3416 = vpop.f32.mrb[0].mxu0
          %v3417 = vadd.f32 0.0, %v3416
          %v3418 = vpop.f32.mrb[0].mxu0
          %3419 = vmatprep.mubr.f32.mxu0 0.0
          %3420 = vmatmul.mubr.f32.gmra.mrb[0].mxu0 %v3262
          %v3421 = vpop.f32.mrb[0].mxu0
          %v3422 = vadd.f32 0.0, %v3421
          %v3423 = vpop.f32.mrb[0].mxu0
          %3424 = vmatprep.mubr.f32.mxu0 0.0
          %3425 = vmatmul.mubr.f32.gmra.mrb[0].mxu0 %v3263
          %v3426 = vpop.f32.mrb[0].mxu0
          %v3427 = vadd.f32 0.0, %v3426
          %v3428 = vpop.f32.mrb[0].mxu0
          %3429 = vmatprep.mubr.f32.mxu0 0.0
          %3430 = vmatmul.mubr.f32.gmra.mrb[0].mxu0 %v3264
          %v3431 = vpop.f32.mrb[0].mxu0
          %v3432 = vadd.f32 0.0, %v3431
          %v3433 = vpop.f32.mrb[0].mxu0
          %3434 = vmatprep.mubr.f32.mxu0 0.0
          %3435 = vmatmul.mubr.f32.gmra.mrb[0].mxu0 %v3265
          %v3436 = vpop.f32.mrb[0].mxu0
          %v3437 = vadd.f32 0.0, %v3436
          %v3438 = vpop.f32.mrb[0].mxu0
          %3439 = vmatprep.mubr.f32.mxu0 0.0
          %3440 = vmatmul.mubr.f32.gmra.mrb[0].mxu0 %v3266
          %v3441 = vpop.f32.mrb[0].mxu0
          %v3442 = vadd.f32 0.0, %v3441
          %v3443 = vpop.f32.mrb[0].mxu0
          %3444 = vmatprep.mubr.f32.mxu0 0.0
          %3445 = vmatmul.mubr.f32.gmra.mrb[0].mxu0 %v3267
          %v3446 = vpop.f32.mrb[0].mxu0
          %v3447 = vadd.f32 0.0, %v3446
          %v3448 = vpop.f32.mrb[0].mxu0
          %3449 = vmatprep.mubr.f32.mxu0 0.0
          %3450 = vmatmul.mubr.f32.gmra.mrb[0].mxu0 %v3268
          %v3451 = vpop.f32.mrb[0].mxu0
          %v3452 = vadd.f32 0.0, %v3451
          %v3453 = vpop.f32.mrb[0].mxu0
          %3454 = vmatprep.mubr.f32.mxu0 0.0
          %3455 = vmatmul.mubr.f32.gmra.mrb[0].mxu0 %v3269
          %v3456 = vpop.f32.mrb[0].mxu0
          %v3457 = vadd.f32 0.0, %v3456
          %v3458 = vpop.f32.mrb[0].mxu0
          %3459 = vmatprep.mubr.f32.mxu0 0.0
          %3460 = vmatmul.mubr.f32.gmra.mrb[0].mxu0 %v3270
          %v3461 = vpop.f32.mrb[0].mxu0
          %v3462 = vadd.f32 0.0, %v3461
          %v3463 = vpop.f32.mrb[0].mxu0
          %3464 = vmatprep.mubr.f32.mxu0 0.0
          %3465 = vmatmul.mubr.f32.gmra.mrb[0].mxu0 %v3271
          %v3466 = vpop.f32.mrb[0].mxu0
          %v3467 = vadd.f32 0.0, %v3466
          %v3468 = vpop.f32.mrb[0].mxu0
          %3469 = vmatprep.mubr.f32.mxu0 0.0
          %3470 = vmatmul.mubr.f32.gmra.mrb[0].mxu0 %v3272
          %v3471 = vpop.f32.mrb[0].mxu0
          %v3472 = vadd.f32 0.0, %v3471
          %v3473 = vpop.f32.mrb[0].mxu0
          %3474 = vmatprep.mubr.f32.mxu0 0.0
          %3475 = vmatmul.mubr.f32.gmra.mrb[0].mxu0 %v3273
          %v3476 = vpop.f32.mrb[0].mxu0
          %v3477 = vadd.f32 0.0, %v3476
          %v3478 = vpop.f32.mrb[0].mxu0
          %3479 = vmatprep.mubr.f32.mxu0 0.0
          %3480 = vmatmul.mubr.f32.gmra.mrb[0].mxu0 %v3274
          %v3481 = vpop.f32.mrb[0].mxu0
          %v3482 = vadd.f32 0.0, %v3481
          %v3483 = vpop.f32.mrb[0].mxu0
          %3484 = vmatprep.mubr.f32.mxu0 0.0
          %3485 = vmatmul.mubr.f32.gmra.mrb[0].mxu0 %v3275
          %v3486 = vpop.f32.mrb[0].mxu0
          %v3487 = vadd.f32 0.0, %v3486
          %v3488 = vpop.f32.mrb[0].mxu0
          %3489 = vmatprep.mubr.f32.mxu0 0.0
          %3490 = vmatmul.mubr.f32.gmra.mrb[0].mxu0 %v3276
          %v3491 = vpop.f32.mrb[0].mxu0
          %v3492 = vadd.f32 0.0, %v3491
          %v3493 = vpop.f32.mrb[0].mxu0
          %3494 = vmatprep.mubr.f32.mxu0 0.0
          %3495 = vmatmul.mubr.f32.gmra.mrb[0].mxu0 %v3277
          %v3496 = vpop.f32.mrb[0].mxu0
          %v3497 = vadd.f32 0.0, %v3496
          %v3498 = vpop.f32.mrb[0].mxu0
          %3499 = vmatprep.mubr.f32.mxu0 0.0
          %3500 = vmatmul.mubr.f32.gmra.mrb[0].mxu0 %v3278
          %v3501 = vpop.f32.mrb[0].mxu0
          %v3502 = vadd.f32 0.0, %v3501
          %v3503 = vpop.f32.mrb[0].mxu0
          %3504 = vmatprep.mubr.f32.mxu0 0.0
          %3505 = vmatmul.mubr.f32.gmra.mrb[0].mxu0 %v3279
          %v3506 = vpop.f32.mrb[0].mxu0
          %v3507 = vadd.f32 0.0, %v3506
          %v3508 = vpop.f32.mrb[0].mxu0
          %3509 = vmatprep.mubr.f32.mxu0 0.0
          %3510 = vmatmul.mubr.f32.gmra.mrb[0].mxu0 %v3280
          %v3511 = vpop.f32.mrb[0].mxu0
          %v3512 = vadd.f32 0.0, %v3511
          %v3513 = vpop.f32.mrb[0].mxu0
          %3514 = vmatprep.mubr.f32.mxu0 0.0
          %3515 = vmatmul.mubr.f32.gmra.mrb[0].mxu0 %v3281
          %v3516 = vpop.f32.mrb[0].mxu0
          %v3517 = vadd.f32 0.0, %v3516
          %v3518 = vpop.f32.mrb[0].mxu0
          %3519 = vmatprep.mubr.f32.mxu0 0.0
          %3520 = vmatmul.mubr.f32.gmra.mrb[0].mxu0 %v3282
          %v3521 = vpop.f32.mrb[0].mxu0
          %v3522 = vadd.f32 0.0, %v3521
          %v3523 = vpop.f32.mrb[0].mxu0
          %3524 = vdwg.mxu0
          %v3525 = vld [vmem:[#allocation3] sm:$0xff]
          %v3526 = vld [vmem:[#allocation3 + $0x8] sm:$0xff]
          %v3527 = vld [vmem:[#allocation3 + $0x10] sm:$0xff]
          %v3528 = vld [vmem:[#allocation3 + $0x18] sm:$0xff]
          %v3529 = vld [vmem:[#allocation3 + $0x20] sm:$0xff]
          %v3530 = vld [vmem:[#allocation3 + $0x28] sm:$0xff]
          %v3531 = vld [vmem:[#allocation3 + $0x30] sm:$0xff]
          %v3532 = vld [vmem:[#allocation3 + $0x38] sm:$0xff]
          %v3533 = vld [vmem:[#allocation3 + $0x40] sm:$0xff]
          %v3534 = vld [vmem:[#allocation3 + $0x48] sm:$0xff]
          %v3535 = vld [vmem:[#allocation3 + $0x50] sm:$0xff]
          %v3536 = vld [vmem:[#allocation3 + $0x58] sm:$0xff]
          %v3537 = vld [vmem:[#allocation3 + $0x60] sm:$0xff]
          %v3538 = vld [vmem:[#allocation3 + $0x68] sm:$0xff]
          %v3539 = vld [vmem:[#allocation3 + $0x70] sm:$0xff]
          %v3540 = vld [vmem:[#allocation3 + $0x78] sm:$0xff]
          %v3541 = vld [vmem:[#allocation3 + $0x80] sm:$0xff]
          %v3542 = vld [vmem:[#allocation3 + $0x88] sm:$0xff]
          %v3543 = vld [vmem:[#allocation3 + $0x90] sm:$0xff]
          %v3544 = vld [vmem:[#allocation3 + $0x98] sm:$0xff]
          %v3545 = vld [vmem:[#allocation3 + $0xa0] sm:$0xff]
          %v3546 = vld [vmem:[#allocation3 + $0xa8] sm:$0xff]
          %v3547 = vld [vmem:[#allocation3 + $0xb0] sm:$0xff]
          %v3548 = vld [vmem:[#allocation3 + $0xb8] sm:$0xff]
          %v3549 = vld [vmem:[#allocation3 + $0xc0] sm:$0xff]
          %v3550 = vld [vmem:[#allocation3 + $0xc8] sm:$0xff]
          %v3551 = vld [vmem:[#allocation3 + $0xd0] sm:$0xff]
          %v3552 = vld [vmem:[#allocation3 + $0xd8] sm:$0xff]
          %v3553 = vld [vmem:[#allocation3 + $0xe0] sm:$0xff]
          %v3554 = vld [vmem:[#allocation3 + $0xe8] sm:$0xff]
          %v3555 = vld [vmem:[#allocation3 + $0xf0] sm:$0xff]
          %v3556 = vld [vmem:[#allocation3 + $0xf8] sm:$0xff]
          %v3557 = vadd.f32 %v3525, %v3367
          %v3558 = vadd.f32 %v3526, %v3372
          %v3559 = vadd.f32 %v3527, %v3377
          %v3560 = vadd.f32 %v3528, %v3382
          %v3561 = vadd.f32 %v3529, %v3387
          %v3562 = vadd.f32 %v3530, %v3392
          %v3563 = vadd.f32 %v3531, %v3397
          %v3564 = vadd.f32 %v3532, %v3402
          %v3565 = vadd.f32 %v3533, %v3407
          %v3566 = vadd.f32 %v3534, %v3412
          %v3567 = vadd.f32 %v3535, %v3417
          %v3568 = vadd.f32 %v3536, %v3422
          %v3569 = vadd.f32 %v3537, %v3427
          %v3570 = vadd.f32 %v3538, %v3432
          %v3571 = vadd.f32 %v3539, %v3437
          %v3572 = vadd.f32 %v3540, %v3442
          %v3573 = vadd.f32 %v3541, %v3447
          %v3574 = vadd.f32 %v3542, %v3452
          %v3575 = vadd.f32 %v3543, %v3457
          %v3576 = vadd.f32 %v3544, %v3462
          %v3577 = vadd.f32 %v3545, %v3467
          %v3578 = vadd.f32 %v3546, %v3472
          %v3579 = vadd.f32 %v3547, %v3477
          %v3580 = vadd.f32 %v3548, %v3482
          %v3581 = vadd.f32 %v3549, %v3487
          %v3582 = vadd.f32 %v3550, %v3492
          %v3583 = vadd.f32 %v3551, %v3497
          %v3584 = vadd.f32 %v3552, %v3502
          %v3585 = vadd.f32 %v3553, %v3507
          %v3586 = vadd.f32 %v3554, %v3512
          %v3587 = vadd.f32 %v3555, %v3517
          %v3588 = vadd.f32 %v3556, %v3522
          %3589 = vst [vmem:[#allocation3] sm:$0xff] %v3557
          %3590 = vst [vmem:[#allocation3 + $0x8] sm:$0xff] %v3558
          %3591 = vst [vmem:[#allocation3 + $0x10] sm:$0xff] %v3559
          %3592 = vst [vmem:[#allocation3 + $0x18] sm:$0xff] %v3560
          %3593 = vst [vmem:[#allocation3 + $0x20] sm:$0xff] %v3561
          %3594 = vst [vmem:[#allocation3 + $0x28] sm:$0xff] %v3562
          %3595 = vst [vmem:[#allocation3 + $0x30] sm:$0xff] %v3563
          %3596 = vst [vmem:[#allocation3 + $0x38] sm:$0xff] %v3564
          %3597 = vst [vmem:[#allocation3 + $0x40] sm:$0xff] %v3565
          %3598 = vst [vmem:[#allocation3 + $0x48] sm:$0xff] %v3566
          %3599 = vst [vmem:[#allocation3 + $0x50] sm:$0xff] %v3567
          %3600 = vst [vmem:[#allocation3 + $0x58] sm:$0xff] %v3568
          %3601 = vst [vmem:[#allocation3 + $0x60] sm:$0xff] %v3569
          %3602 = vst [vmem:[#allocation3 + $0x68] sm:$0xff] %v3570
          %3603 = vst [vmem:[#allocation3 + $0x70] sm:$0xff] %v3571
          %3604 = vst [vmem:[#allocation3 + $0x78] sm:$0xff] %v3572
          %3605 = vst [vmem:[#allocation3 + $0x80] sm:$0xff] %v3573
          %3606 = vst [vmem:[#allocation3 + $0x88] sm:$0xff] %v3574
          %3607 = vst [vmem:[#allocation3 + $0x90] sm:$0xff] %v3575
          %3608 = vst [vmem:[#allocation3 + $0x98] sm:$0xff] %v3576
          %3609 = vst [vmem:[#allocation3 + $0xa0] sm:$0xff] %v3577
          %3610 = vst [vmem:[#allocation3 + $0xa8] sm:$0xff] %v3578
          %3611 = vst [vmem:[#allocation3 + $0xb0] sm:$0xff] %v3579
          %3612 = vst [vmem:[#allocation3 + $0xb8] sm:$0xff] %v3580
          %3613 = vst [vmem:[#allocation3 + $0xc0] sm:$0xff] %v3581
          %3614 = vst [vmem:[#allocation3 + $0xc8] sm:$0xff] %v3582
          %3615 = vst [vmem:[#allocation3 + $0xd0] sm:$0xff] %v3583
          %3616 = vst [vmem:[#allocation3 + $0xd8] sm:$0xff] %v3584
          %3617 = vst [vmem:[#allocation3 + $0xe0] sm:$0xff] %v3585
          %3618 = vst [vmem:[#allocation3 + $0xe8] sm:$0xff] %v3586
          %3619 = vst [vmem:[#allocation3 + $0xf0] sm:$0xff] %v3587
          %3620 = vst [vmem:[#allocation3 + $0xf8] sm:$0xff] %v3588
          %s3621 = ssub.s32 13, %s350
          %s3622 = sld [smem:[#allocation4 + %s3621]]
          %v3623 = vld [vmem:[%s213] sm:$0xff]
          %v3624 = vld [vmem:[%s213 + $0x8] sm:$0xff]
          %v3625 = vld [vmem:[%s213 + $0x10] sm:$0xff]
          %v3626 = vld [vmem:[%s213 + $0x18] sm:$0xff]
          %v3627 = vld [vmem:[%s213 + $0x20] sm:$0xff]
          %v3628 = vld [vmem:[%s213 + $0x28] sm:$0xff]
          %v3629 = vld [vmem:[%s213 + $0x30] sm:$0xff]
          %v3630 = vld [vmem:[%s213 + $0x38] sm:$0xff]
          %v3631 = vld [vmem:[%s213 + $0x40] sm:$0xff]
          %v3632 = vld [vmem:[%s213 + $0x48] sm:$0xff]
          %v3633 = vld [vmem:[%s213 + $0x50] sm:$0xff]
          %v3634 = vld [vmem:[%s213 + $0x58] sm:$0xff]
          %v3635 = vld [vmem:[%s213 + $0x60] sm:$0xff]
          %v3636 = vld [vmem:[%s213 + $0x68] sm:$0xff]
          %v3637 = vld [vmem:[%s213 + $0x70] sm:$0xff]
          %v3638 = vld [vmem:[%s213 + $0x78] sm:$0xff]
          %v3639 = vld [vmem:[%s213 + $0x80] sm:$0xff]
          %v3640 = vld [vmem:[%s213 + $0x88] sm:$0xff]
          %v3641 = vld [vmem:[%s213 + $0x90] sm:$0xff]
          %v3642 = vld [vmem:[%s213 + $0x98] sm:$0xff]
          %v3643 = vld [vmem:[%s213 + $0xa0] sm:$0xff]
          %v3644 = vld [vmem:[%s213 + $0xa8] sm:$0xff]
          %v3645 = vld [vmem:[%s213 + $0xb0] sm:$0xff]
          %v3646 = vld [vmem:[%s213 + $0xb8] sm:$0xff]
          %v3647 = vld [vmem:[%s213 + $0xc0] sm:$0xff]
          %v3648 = vld [vmem:[%s213 + $0xc8] sm:$0xff]
          %v3649 = vld [vmem:[%s213 + $0xd0] sm:$0xff]
          %v3650 = vld [vmem:[%s213 + $0xd8] sm:$0xff]
          %v3651 = vld [vmem:[%s213 + $0xe0] sm:$0xff]
          %v3652 = vld [vmem:[%s213 + $0xe8] sm:$0xff]
          %v3653 = vld [vmem:[%s213 + $0xf0] sm:$0xff]
          %v3654 = vld [vmem:[%s213 + $0xf8] sm:$0xff]
          %v3655 = vld [vmem:[#allocation3] sm:$0xff]
          %v3656 = vld [vmem:[#allocation3 + $0x8] sm:$0xff]
          %v3657 = vld [vmem:[#allocation3 + $0x10] sm:$0xff]
          %v3658 = vld [vmem:[#allocation3 + $0x18] sm:$0xff]
          %v3659 = vld [vmem:[#allocation3 + $0x20] sm:$0xff]
          %v3660 = vld [vmem:[#allocation3 + $0x28] sm:$0xff]
          %v3661 = vld [vmem:[#allocation3 + $0x30] sm:$0xff]
          %v3662 = vld [vmem:[#allocation3 + $0x38] sm:$0xff]
          %v3663 = vld [vmem:[#allocation3 + $0x40] sm:$0xff]
          %v3664 = vld [vmem:[#allocation3 + $0x48] sm:$0xff]
          %v3665 = vld [vmem:[#allocation3 + $0x50] sm:$0xff]
          %v3666 = vld [vmem:[#allocation3 + $0x58] sm:$0xff]
          %v3667 = vld [vmem:[#allocation3 + $0x60] sm:$0xff]
          %v3668 = vld [vmem:[#allocation3 + $0x68] sm:$0xff]
          %v3669 = vld [vmem:[#allocation3 + $0x70] sm:$0xff]
          %v3670 = vld [vmem:[#allocation3 + $0x78] sm:$0xff]
          %v3671 = vld [vmem:[#allocation3 + $0x80] sm:$0xff]
          %v3672 = vld [vmem:[#allocation3 + $0x88] sm:$0xff]
          %v3673 = vld [vmem:[#allocation3 + $0x90] sm:$0xff]
          %v3674 = vld [vmem:[#allocation3 + $0x98] sm:$0xff]
          %v3675 = vld [vmem:[#allocation3 + $0xa0] sm:$0xff]
          %v3676 = vld [vmem:[#allocation3 + $0xa8] sm:$0xff]
          %v3677 = vld [vmem:[#allocation3 + $0xb0] sm:$0xff]
          %v3678 = vld [vmem:[#allocation3 + $0xb8] sm:$0xff]
          %v3679 = vld [vmem:[#allocation3 + $0xc0] sm:$0xff]
          %v3680 = vld [vmem:[#allocation3 + $0xc8] sm:$0xff]
          %v3681 = vld [vmem:[#allocation3 + $0xd0] sm:$0xff]
          %v3682 = vld [vmem:[#allocation3 + $0xd8] sm:$0xff]
          %v3683 = vld [vmem:[#allocation3 + $0xe0] sm:$0xff]
          %v3684 = vld [vmem:[#allocation3 + $0xe8] sm:$0xff]
          %v3685 = vld [vmem:[#allocation3 + $0xf0] sm:$0xff]
          %v3686 = vld [vmem:[#allocation3 + $0xf8] sm:$0xff]
          %v3687 = vstv %s3622
          %v3688 = vmul.f32 %v3655, %v3687
          %v3689 = vmul.f32 %v3656, %v3687
          %v3690 = vmul.f32 %v3657, %v3687
          %v3691 = vmul.f32 %v3658, %v3687
          %v3692 = vmul.f32 %v3659, %v3687
          %v3693 = vmul.f32 %v3660, %v3687
          %v3694 = vmul.f32 %v3661, %v3687
          %v3695 = vmul.f32 %v3662, %v3687
          %v3696 = vmul.f32 %v3663, %v3687
          %v3697 = vmul.f32 %v3664, %v3687
          %v3698 = vmul.f32 %v3665, %v3687
          %v3699 = vmul.f32 %v3666, %v3687
          %v3700 = vmul.f32 %v3667, %v3687
          %v3701 = vmul.f32 %v3668, %v3687
          %v3702 = vmul.f32 %v3669, %v3687
          %v3703 = vmul.f32 %v3670, %v3687
          %v3704 = vmul.f32 %v3671, %v3687
          %v3705 = vmul.f32 %v3672, %v3687
          %v3706 = vmul.f32 %v3673, %v3687
          %v3707 = vmul.f32 %v3674, %v3687
          %v3708 = vmul.f32 %v3675, %v3687
          %v3709 = vmul.f32 %v3676, %v3687
          %v3710 = vmul.f32 %v3677, %v3687
          %v3711 = vmul.f32 %v3678, %v3687
          %v3712 = vmul.f32 %v3679, %v3687
          %v3713 = vmul.f32 %v3680, %v3687
          %v3714 = vmul.f32 %v3681, %v3687
          %v3715 = vmul.f32 %v3682, %v3687
          %v3716 = vmul.f32 %v3683, %v3687
          %v3717 = vmul.f32 %v3684, %v3687
          %v3718 = vmul.f32 %v3685, %v3687
          %v3719 = vmul.f32 %v3686, %v3687
          %v3720 = vadd.f32 %v3623, %v3688
          %v3721 = vadd.f32 %v3624, %v3689
          %v3722 = vadd.f32 %v3625, %v3690
          %v3723 = vadd.f32 %v3626, %v3691
          %v3724 = vadd.f32 %v3627, %v3692
          %v3725 = vadd.f32 %v3628, %v3693
          %v3726 = vadd.f32 %v3629, %v3694
          %v3727 = vadd.f32 %v3630, %v3695
          %v3728 = vadd.f32 %v3631, %v3696
          %v3729 = vadd.f32 %v3632, %v3697
          %v3730 = vadd.f32 %v3633, %v3698
          %v3731 = vadd.f32 %v3634, %v3699
          %v3732 = vadd.f32 %v3635, %v3700
          %v3733 = vadd.f32 %v3636, %v3701
          %v3734 = vadd.f32 %v3637, %v3702
          %v3735 = vadd.f32 %v3638, %v3703
          %v3736 = vadd.f32 %v3639, %v3704
          %v3737 = vadd.f32 %v3640, %v3705
          %v3738 = vadd.f32 %v3641, %v3706
          %v3739 = vadd.f32 %v3642, %v3707
          %v3740 = vadd.f32 %v3643, %v3708
          %v3741 = vadd.f32 %v3644, %v3709
          %v3742 = vadd.f32 %v3645, %v3710
          %v3743 = vadd.f32 %v3646, %v3711
          %v3744 = vadd.f32 %v3647, %v3712
          %v3745 = vadd.f32 %v3648, %v3713
          %v3746 = vadd.f32 %v3649, %v3714
          %v3747 = vadd.f32 %v3650, %v3715
          %v3748 = vadd.f32 %v3651, %v3716
          %v3749 = vadd.f32 %v3652, %v3717
          %v3750 = vadd.f32 %v3653, %v3718
          %v3751 = vadd.f32 %v3654, %v3719
          %3752 = vst [vmem:[%s252 + $0x8] sm:$0xff] %v3720
          %3753 = vst [vmem:[%s252 + $0x10] sm:$0xff] %v3721
          %3754 = vst [vmem:[%s252 + $0x28] sm:$0xff] %v3722
          %3755 = vst [vmem:[%s252 + $0x30] sm:$0xff] %v3723
          %3756 = vst [vmem:[%s252 + $0x48] sm:$0xff] %v3724
          %3757 = vst [vmem:[%s252 + $0x50] sm:$0xff] %v3725
          %3758 = vst [vmem:[%s252 + $0x68] sm:$0xff] %v3726
          %3759 = vst [vmem:[%s252 + $0x70] sm:$0xff] %v3727
          %3760 = vst [vmem:[%s252 + $0x88] sm:$0xff] %v3728
          %3761 = vst [vmem:[%s252 + $0x90] sm:$0xff] %v3729
          %3762 = vst [vmem:[%s252 + $0xa8] sm:$0xff] %v3730
          %3763 = vst [vmem:[%s252 + $0xb0] sm:$0xff] %v3731
          %3764 = vst [vmem:[%s252 + $0xc8] sm:$0xff] %v3732
          %3765 = vst [vmem:[%s252 + $0xd0] sm:$0xff] %v3733
          %3766 = vst [vmem:[%s252 + $0xe8] sm:$0xff] %v3734
          %3767 = vst [vmem:[%s252 + $0xf0] sm:$0xff] %v3735
          %3768 = vst [vmem:[%s252 + $0x108] sm:$0xff] %v3736
          %3769 = vst [vmem:[%s252 + $0x110] sm:$0xff] %v3737
          %3770 = vst [vmem:[%s252 + $0x128] sm:$0xff] %v3738
          %3771 = vst [vmem:[%s252 + $0x130] sm:$0xff] %v3739
          %3772 = vst [vmem:[%s252 + $0x148] sm:$0xff] %v3740
          %3773 = vst [vmem:[%s252 + $0x150] sm:$0xff] %v3741
          %3774 = vst [vmem:[%s252 + $0x168] sm:$0xff] %v3742
          %3775 = vst [vmem:[%s252 + $0x170] sm:$0xff] %v3743
          %3776 = vst [vmem:[%s252 + $0x188] sm:$0xff] %v3744
          %3777 = vst [vmem:[%s252 + $0x190] sm:$0xff] %v3745
          %3778 = vst [vmem:[%s252 + $0x1a8] sm:$0xff] %v3746
          %3779 = vst [vmem:[%s252 + $0x1b0] sm:$0xff] %v3747
          %3780 = vst [vmem:[%s252 + $0x1c8] sm:$0xff] %v3748
          %3781 = vst [vmem:[%s252 + $0x1d0] sm:$0xff] %v3749
          %3782 = vst [vmem:[%s252 + $0x1e8] sm:$0xff] %v3750
          %3783 = vst [vmem:[%s252 + $0x1f0] sm:$0xff] %v3751
        $region53: #{tpu_custom_call.1} parent=35 // loop_footer
          %s354 = sadd.s32 1, %s350
        $region54: #{tpu_custom_call.1} parent=35 // loop_footer_branch
          %349 = sbr.rel target = $region50
        $region55: #{tpu_custom_call.1} parent=35 // loop_exit
          _
        %v3784 = vld [vmem:[%s252 + $0x8] sm:$0xff]
        %v3785 = vld [vmem:[%s252 + $0x10] sm:$0xff]
        %v3786 = vld [vmem:[%s252 + $0x28] sm:$0xff]
        %v3787 = vld [vmem:[%s252 + $0x30] sm:$0xff]
        %v3788 = vld [vmem:[%s252 + $0x48] sm:$0xff]
        %v3789 = vld [vmem:[%s252 + $0x50] sm:$0xff]
        %v3790 = vld [vmem:[%s252 + $0x68] sm:$0xff]
        %v3791 = vld [vmem:[%s252 + $0x70] sm:$0xff]
        %v3792 = vld [vmem:[%s252 + $0x88] sm:$0xff]
        %v3793 = vld [vmem:[%s252 + $0x90] sm:$0xff]
        %v3794 = vld [vmem:[%s252 + $0xa8] sm:$0xff]
        %v3795 = vld [vmem:[%s252 + $0xb0] sm:$0xff]
        %v3796 = vld [vmem:[%s252 + $0xc8] sm:$0xff]
        %v3797 = vld [vmem:[%s252 + $0xd0] sm:$0xff]
        %v3798 = vld [vmem:[%s252 + $0xe8] sm:$0xff]
        %v3799 = vld [vmem:[%s252 + $0xf0] sm:$0xff]
        %v3800 = vld [vmem:[%s252 + $0x108] sm:$0xff]
        %v3801 = vld [vmem:[%s252 + $0x110] sm:$0xff]
        %v3802 = vld [vmem:[%s252 + $0x128] sm:$0xff]
        %v3803 = vld [vmem:[%s252 + $0x130] sm:$0xff]
        %v3804 = vld [vmem:[%s252 + $0x148] sm:$0xff]
        %v3805 = vld [vmem:[%s252 + $0x150] sm:$0xff]
        %v3806 = vld [vmem:[%s252 + $0x168] sm:$0xff]
        %v3807 = vld [vmem:[%s252 + $0x170] sm:$0xff]
        %v3808 = vld [vmem:[%s252 + $0x188] sm:$0xff]
        %v3809 = vld [vmem:[%s252 + $0x190] sm:$0xff]
        %v3810 = vld [vmem:[%s252 + $0x1a8] sm:$0xff]
        %v3811 = vld [vmem:[%s252 + $0x1b0] sm:$0xff]
        %v3812 = vld [vmem:[%s252 + $0x1c8] sm:$0xff]
        %v3813 = vld [vmem:[%s252 + $0x1d0] sm:$0xff]
        %v3814 = vld [vmem:[%s252 + $0x1e8] sm:$0xff]
        %v3815 = vld [vmem:[%s252 + $0x1f0] sm:$0xff]
        %v3816 = vld [vmem:[%s3] sm:$0x1]
        %v3818 = vlaneseq
        %v3819 = vshrl.u32 %v3818, 7
        %v3820 = vsub.s32 0, %v3819
        %v3821 = vrot.slane %v3816, %v3820
        %v3823 = vadd.f32 %v3784, %v3821
        %v3824 = vadd.f32 %v3785, %v3821
        %v3825 = vadd.f32 %v3786, %v3821
        %v3826 = vadd.f32 %v3787, %v3821
        %v3827 = vadd.f32 %v3788, %v3821
        %v3828 = vadd.f32 %v3789, %v3821
        %v3829 = vadd.f32 %v3790, %v3821
        %v3830 = vadd.f32 %v3791, %v3821
        %v3831 = vadd.f32 %v3792, %v3821
        %v3832 = vadd.f32 %v3793, %v3821
        %v3833 = vadd.f32 %v3794, %v3821
        %v3834 = vadd.f32 %v3795, %v3821
        %v3835 = vadd.f32 %v3796, %v3821
        %v3836 = vadd.f32 %v3797, %v3821
        %v3837 = vadd.f32 %v3798, %v3821
        %v3838 = vadd.f32 %v3799, %v3821
        %v3839 = vadd.f32 %v3800, %v3821
        %v3840 = vadd.f32 %v3801, %v3821
        %v3841 = vadd.f32 %v3802, %v3821
        %v3842 = vadd.f32 %v3803, %v3821
        %v3843 = vadd.f32 %v3804, %v3821
        %v3844 = vadd.f32 %v3805, %v3821
        %v3845 = vadd.f32 %v3806, %v3821
        %v3846 = vadd.f32 %v3807, %v3821
        %v3847 = vadd.f32 %v3808, %v3821
        %v3848 = vadd.f32 %v3809, %v3821
        %v3849 = vadd.f32 %v3810, %v3821
        %v3850 = vadd.f32 %v3811, %v3821
        %v3851 = vadd.f32 %v3812, %v3821
        %v3852 = vadd.f32 %v3813, %v3821
        %v3853 = vadd.f32 %v3814, %v3821
        %v3854 = vadd.f32 %v3815, %v3821
        %3855 = vst [vmem:[%s242] sm:$0xff] %v3823
        %3856 = vst [vmem:[%s242 + $0x8] sm:$0xff] %v3824
        %3857 = vst [vmem:[%s242 + $0x10] sm:$0xff] %v3825
        %3858 = vst [vmem:[%s242 + $0x18] sm:$0xff] %v3826
        %3859 = vst [vmem:[%s242 + $0x20] sm:$0xff] %v3827
        %3860 = vst [vmem:[%s242 + $0x28] sm:$0xff] %v3828
        %3861 = vst [vmem:[%s242 + $0x30] sm:$0xff] %v3829
        %3862 = vst [vmem:[%s242 + $0x38] sm:$0xff] %v3830
        %3863 = vst [vmem:[%s242 + $0x40] sm:$0xff] %v3831
        %3864 = vst [vmem:[%s242 + $0x48] sm:$0xff] %v3832
        %3865 = vst [vmem:[%s242 + $0x50] sm:$0xff] %v3833
        %3866 = vst [vmem:[%s242 + $0x58] sm:$0xff] %v3834
        %3867 = vst [vmem:[%s242 + $0x60] sm:$0xff] %v3835
        %3868 = vst [vmem:[%s242 + $0x68] sm:$0xff] %v3836
        %3869 = vst [vmem:[%s242 + $0x70] sm:$0xff] %v3837
        %3870 = vst [vmem:[%s242 + $0x78] sm:$0xff] %v3838
        %3871 = vst [vmem:[%s242 + $0x80] sm:$0xff] %v3839
        %3872 = vst [vmem:[%s242 + $0x88] sm:$0xff] %v3840
        %3873 = vst [vmem:[%s242 + $0x90] sm:$0xff] %v3841
        %3874 = vst [vmem:[%s242 + $0x98] sm:$0xff] %v3842
        %3875 = vst [vmem:[%s242 + $0xa0] sm:$0xff] %v3843
        %3876 = vst [vmem:[%s242 + $0xa8] sm:$0xff] %v3844
        %3877 = vst [vmem:[%s242 + $0xb0] sm:$0xff] %v3845
        %3878 = vst [vmem:[%s242 + $0xb8] sm:$0xff] %v3846
        %3879 = vst [vmem:[%s242 + $0xc0] sm:$0xff] %v3847
        %3880 = vst [vmem:[%s242 + $0xc8] sm:$0xff] %v3848
        %3881 = vst [vmem:[%s242 + $0xd0] sm:$0xff] %v3849
        %3882 = vst [vmem:[%s242 + $0xd8] sm:$0xff] %v3850
        %3883 = vst [vmem:[%s242 + $0xe0] sm:$0xff] %v3851
        %3884 = vst [vmem:[%s242 + $0xe8] sm:$0xff] %v3852
        %3885 = vst [vmem:[%s242 + $0xf0] sm:$0xff] %v3853
        %3886 = vst [vmem:[%s242 + $0xf8] sm:$0xff] %v3854
        %s3887 = sand.u32 %s120, 1
        %s3888 = scalar_lea.sflag [#allocation6], %s3887
        %s3889 = sand.u32 %s120, 1
        %s3890 = smul.addr %s3889, 256
        %s3891 = scalar_lea.vmem [#allocation11], %s3890
        // Predicated region
        $region56: #{tpu_custom_call.1} parent=35 // pred_check
          %p3892 = pneg %p130
        $region57: #{tpu_custom_call.1} parent=35 // pred_check_branch
          %3894 = sbr.rel (%p3892) target = $region59
        $region58: #{tpu_custom_call.1} parent=35 // pred_region
          %s3896 = ssub.s32 4096, 4096
          %3897 = vsyncadd %s3888, %s3896
          %s3898 = smul.addr %s23, 32
          %s3899 = smul.addr %s3898, 128
          %s3900 = scalar_lea.hbm %s4, %s3899
          %s3901 = sshll.u32 %s3891, 4
          %s3902 = int_to_ptr.vmem [resolvable:$true] %s3901
          %3907 = dma.vmem_to_hbm [thread:$0]  %s3902, 4096, %s3900, %s3888, 128, 128, 8
        $region59: #{tpu_custom_call.1} parent=35 // pred_fallthru
          _
      $region36: #{tpu_custom_call.1} parent=5 // pred_fallthru
        _
      %p3908 = scmp.le.s32.totalorder 2, %s18
      // Predicated region
      $region60: #{tpu_custom_call.1} parent=5 // pred_check
        %p3909 = pneg %p3908
      $region61: #{tpu_custom_call.1} parent=5 // pred_check_branch
        %3911 = sbr.rel (%p3909) target = $region63
      $region62: #{tpu_custom_call.1} parent=5 // pred_region
        %s3912 = ssub.s32 %s18, 2
        // Predicated region
        $region64: #{tpu_custom_call.1} parent=62 // pred_check
          %p3913 = pneg %p136
        $region65: #{tpu_custom_call.1} parent=62 // pred_check_branch
          %3915 = sbr.rel (%p3913) target = $region67
        $region66: #{tpu_custom_call.1} parent=62 // pred_region
          %s3916 = sand.u32 %s121, 1
          %s3917 = scalar_lea.sflag [#allocation6], %s3916
          %s3918 = sand.u32 %s121, 1
          %s3919 = smul.addr %s3918, 256
          %s3920 = scalar_lea.vmem [#allocation11], %s3919
          %3921 = dma.done %s3917, 4096
        $region67: #{tpu_custom_call.1} parent=62 // pred_fallthru
          _
      $region63: #{tpu_custom_call.1} parent=5 // pred_fallthru
        _
    $region6: #{tpu_custom_call.1} parent=1 // loop_footer
      %s22 = sadd.s32 1, %s18
    $region7: #{tpu_custom_call.1} parent=1 // loop_footer_branch
      %17 = sbr.rel target = $region3
    $region8: #{tpu_custom_call.1} parent=1 // loop_exit
      _
    %3922 = vsyncpa [#allocation5], 1
    %s3923 = scalar_lea.sflag [#allocation5], 1
    %3924 = vsyncpa %s3923, 1
    %3925 = vsyncpa [#allocation10], 1
    %3926 = vsyncpa [#allocation6], 1
    %s3927 = scalar_lea.sflag [#allocation6], 1
    %3928 = vsyncpa %s3927, 1
    %3929 = vsyncpa [#allocation7], 1
    %s3930 = scalar_lea.sflag [#allocation7], 1
    %3931 = vsyncpa %s3930, 1

</llo_original>
